<compile_context>
chip_gen: v6e
topology: v6e:2x2x1
jax: 0.10.0
libtpu: 0.0.40
codegen_flags: <defaults>
</compile_context>

<pallas_src>
import functools

import jax
import jax.numpy as jnp
from jax import lax
from jax.experimental import pallas as pl
from jax.experimental.pallas import tpu as pltpu

EPS = 1e-5
LANE = 128
_VMEM_LIMIT = 32 * 1024 * 1024


def _round_up(x, m):
    return (x + m - 1) // m * m


def _pick_m_tile(m, target):
    """Largest multiple-of-8 divisor of m that is <= target (else m itself)."""
    if m <= target:
        return m
    t = max(8, (target // 8) * 8)
    while t >= 8:
        if m % t == 0:
            return t
        t -= 8
    return m


# ---------------------------------------------------------------------------
# Stage 1: conv1 (1x1) as tiled matmul + BN1 batch-stat accumulation.
# (Normalization/ReLU of y1 is deferred to stage 2.)
# ---------------------------------------------------------------------------
def _conv1_bn_stats_kernel(x_ref, w_ref, y_ref, s1_ref, s2_ref):
    i = pl.program_id(0)
    y = jnp.dot(x_ref[...].astype(jnp.bfloat16), w_ref[...],
                preferred_element_type=jnp.float32)          # (tm, C) f32
    y_ref[...] = y

    # Per-channel sum / sum-of-squares via MXU (ones-row trick).
    ones_row = jnp.ones((1, y.shape[0]), jnp.float32)
    tile_s1 = jnp.dot(ones_row, y, preferred_element_type=jnp.float32)
    tile_s2 = jnp.dot(ones_row, y * y, preferred_element_type=jnp.float32)

    @pl.when(i == 0)
    def _init():
        s1_ref[...] = jnp.zeros_like(s1_ref)
        s2_ref[...] = jnp.zeros_like(s2_ref)

    s1_ref[...] += tile_s1
    s2_ref[...] += tile_s2


def _conv1_stage(x_flat, w1, *, tm):
    M, K = x_flat.shape
    _, C = w1.shape
    return pl.pallas_call(
        _conv1_bn_stats_kernel,
        out_shape=(
            jax.ShapeDtypeStruct((M, C), jnp.float32),
            jax.ShapeDtypeStruct((1, C), jnp.float32),
            jax.ShapeDtypeStruct((1, C), jnp.float32),
        ),
        grid=(M // tm,),
        in_specs=[
            pl.BlockSpec((tm, K), lambda i: (i, 0)),
            pl.BlockSpec((K, C), lambda i: (0, 0)),
        ],
        out_specs=(
            pl.BlockSpec((tm, C), lambda i: (i, 0)),
            pl.BlockSpec((1, C), lambda i: (0, 0)),
            pl.BlockSpec((1, C), lambda i: (0, 0)),
        ),
        compiler_params=pltpu.CompilerParams(
            dimension_semantics=("arbitrary",),
            vmem_limit_bytes=_VMEM_LIMIT,
        ),
    )(x_flat, w1)


# ---------------------------------------------------------------------------
# Stage 2: BN1+ReLU applied on the fly, conv2 (3x3, pad=1) as 9 shifted
# matmuls from a zero-padded VMEM slab, BN2 batch-stat accumulation.
# ---------------------------------------------------------------------------
def _make_conv3x3_kernel(H, W, C, count):
    inv_count = 1.0 / float(count)

    def kernel(s1_ref, s2_ref, g_ref, b_ref, y1_ref, w_ref,
               y2_ref, o1_ref, o2_ref, slab_ref):
        n = pl.program_id(0)

        # Fold BN1 (batch stats from stage 1) + affine into scale/shift.
        mean = s1_ref[...] * inv_count                       # (1, C)
        var = s2_ref[...] * inv_count - mean * mean
        rstd = lax.rsqrt(var + EPS)
        scale = (g_ref[...] * rstd).reshape(1, 1, C)
        shift = (b_ref[...] - mean * g_ref[...] * rstd).reshape(1, 1, C)

        # Normalize + ReLU the raw conv1 output into a zero-padded slab.
        act = jnp.maximum(y1_ref[...] * scale + shift, 0.0)  # (H, W, C) f32
        slab_ref[...] = jnp.zeros_like(slab_ref)
        slab_ref[1:H + 1, 1:W + 1, :] = act

        # 3x3 conv: per output row, 9 shifted (W, C) x (C, C) matmuls.
        def row_body(h, carry):
            sum_c, sumsq_c = carry
            acc = jnp.zeros((W, C), jnp.float32)
            for kh in range(3):
                row = slab_ref[h + kh]                        # (W + 2, C)
                for kw in range(3):
                    win = row[kw:kw + W, :].astype(jnp.bfloat16)
                    acc += jnp.dot(win, w_ref[kh * 3 + kw],
                                   preferred_element_type=jnp.float32)
            y2_ref[h] = acc
            sum_c = sum_c + jnp.sum(acc, axis=0, keepdims=True)
            sumsq_c = sumsq_c + jnp.sum(acc * acc, axis=0, keepdims=True)
            return sum_c, sumsq_c

        zero = jnp.zeros((1, C), jnp.float32)
        img_s1, img_s2 = lax.fori_loop(0, H, row_body, (zero, zero))

        @pl.when(n == 0)
        def _init():
            o1_ref[...] = jnp.zeros_like(o1_ref)
            o2_ref[...] = jnp.zeros_like(o2_ref)

        o1_ref[...] += img_s1
        o2_ref[...] += img_s2

    return kernel


def _conv2_stage(y1_4d, w2, s1, s2, g1, b1, *, count):
    N, H, W, C = y1_4d.shape
    kernel = _make_conv3x3_kernel(H, W, C, count)
    return pl.pallas_call(
        kernel,
        out_shape=(
            jax.ShapeDtypeStruct((N, H, W, C), jnp.float32),
            jax.ShapeDtypeStruct((1, C), jnp.float32),
            jax.ShapeDtypeStruct((1, C), jnp.float32),
        ),
        grid=(N,),
        in_specs=[
            pl.BlockSpec((1, C), lambda n: (0, 0)),
            pl.BlockSpec((1, C), lambda n: (0, 0)),
            pl.BlockSpec((1, C), lambda n: (0, 0)),
            pl.BlockSpec((1, C), lambda n: (0, 0)),
            pl.BlockSpec((None, H, W, C), lambda n: (n, 0, 0, 0)),
            pl.BlockSpec((9, C, C), lambda n: (0, 0, 0)),
        ],
        out_specs=(
            pl.BlockSpec((None, H, W, C), lambda n: (n, 0, 0, 0)),
            pl.BlockSpec((1, C), lambda n: (0, 0)),
            pl.BlockSpec((1, C), lambda n: (0, 0)),
        ),
        scratch_shapes=[pltpu.VMEM((H + 2, W + 2, C), jnp.float32)],
        compiler_params=pltpu.CompilerParams(
            dimension_semantics=("arbitrary",),
            vmem_limit_bytes=_VMEM_LIMIT,
        ),
    )(s1, s2, g1, b1, y1_4d, w2)


# ---------------------------------------------------------------------------
# Stage 3: BN2+ReLU on the fly, conv3 (1x1), two-pass BN3, residual add, ReLU.
# Grid = (pass, M-tiles); pass 0 accumulates BN3 stats, pass 1 finalizes.
# ---------------------------------------------------------------------------
def _make_conv1x1_res_kernel(count):
    inv_count = 1.0 / float(count)

    def kernel(s1_ref, s2_ref, g2_ref, b2_ref, y2_ref, w_ref, g3_ref, b3_ref,
               res_ref, out_ref, acc1_ref, acc2_ref):
        p = pl.program_id(0)
        i = pl.program_id(1)

        # BN2 (stats from stage 2) + ReLU applied on the fly.
        mean2 = s1_ref[...] * inv_count
        var2 = s2_ref[...] * inv_count - mean2 * mean2
        rstd2 = lax.rsqrt(var2 + EPS)
        scale2 = g2_ref[...] * rstd2
        shift2 = b2_ref[...] - mean2 * scale2
        act = jnp.maximum(y2_ref[...] * scale2 + shift2, 0.0)

        y3 = jnp.dot(act.astype(jnp.bfloat16), w_ref[...],
                     preferred_element_type=jnp.float32)      # (tm, Cout) f32

        @pl.when((p == 0) & (i == 0))
        def _init():
            acc1_ref[...] = jnp.zeros_like(acc1_ref)
            acc2_ref[...] = jnp.zeros_like(acc2_ref)

        @pl.when(p == 0)
        def _accumulate():
            ones_row = jnp.ones((1, y3.shape[0]), jnp.float32)
            acc1_ref[...] += jnp.dot(ones_row, y3,
                                     preferred_element_type=jnp.float32)
            acc2_ref[...] += jnp.dot(ones_row, y3 * y3,
                                     preferred_element_type=jnp.float32)
            out_ref[...] = y3          # placeholder; overwritten in pass 1

        @pl.when(p == 1)
        def _finalize():
            mean3 = acc1_ref[...] * inv_count
            var3 = acc2_ref[...] * inv_count - mean3 * mean3
            rstd3 = lax.rsqrt(var3 + EPS)
            scale3 = g3_ref[...] * rstd3
            shift3 = b3_ref[...] - mean3 * scale3
            out_ref[...] = jnp.maximum(y3 * scale3 + shift3 + res_ref[...], 0.0)

    return kernel


def _conv3_stage(y2_flat, w3, s1, s2, g2, b2, g3, b3, x_res, *, tm, count):
    M, C = y2_flat.shape
    _, Cout = w3.shape
    kernel = _make_conv1x1_res_kernel(count)
    return pl.pallas_call(
        kernel,
        out_shape=jax.ShapeDtypeStruct((M, Cout), jnp.float32),
        grid=(2, M // tm),
        in_specs=[
            pl.BlockSpec((1, C), lambda p, i: (0, 0)),
            pl.BlockSpec((1, C), lambda p, i: (0, 0)),
            pl.BlockSpec((1, C), lambda p, i: (0, 0)),
            pl.BlockSpec((1, C), lambda p, i: (0, 0)),
            pl.BlockSpec((tm, C), lambda p, i: (i, 0)),
            pl.BlockSpec((C, Cout), lambda p, i: (0, 0)),
            pl.BlockSpec((1, Cout), lambda p, i: (0, 0)),
            pl.BlockSpec((1, Cout), lambda p, i: (0, 0)),
            pl.BlockSpec((tm, Cout), lambda p, i: (i, 0)),
        ],
        out_specs=pl.BlockSpec((tm, Cout), lambda p, i: (i, 0)),
        scratch_shapes=[
            pltpu.VMEM((1, Cout), jnp.float32),
            pltpu.VMEM((1, Cout), jnp.float32),
        ],
        compiler_params=pltpu.CompilerParams(
            dimension_semantics=("arbitrary", "arbitrary"),
            vmem_limit_bytes=_VMEM_LIMIT,
        ),
    )(s1, s2, g2, b2, y2_flat, w3, g3, b3, x_res)


# ---------------------------------------------------------------------------
# Bottleneck forward (plain-JAX glue: layout transpose, channel pad/crop).
# ---------------------------------------------------------------------------
def bottleneck_forward(x_nchw, params, *, m_tile=512):
    N, Cin, H, W = x_nchw.shape
    planes = params["w1"].shape[1]
    Cout = params["w3"].shape[1]
    assert Cout == Cin, "stride=1 / downsample=None => inplanes == planes*expansion"

    Cp = _round_up(Cin, LANE)
    Pp = _round_up(planes, LANE)
    M = N * H * W
    tm = _pick_m_tile(M, m_tile)

    # NCHW -> NHWC, lane-dense channel padding.
    x = jnp.transpose(x_nchw, (0, 2, 3, 1)).astype(jnp.float32)
    x = jnp.pad(x, ((0, 0), (0, 0), (0, 0), (0, Cp - Cin)))
    x_flat = x.reshape(M, Cp)

    # Weights: pad channels to 128 multiples, bf16 MXU operands.
    w1 = jnp.pad(params["w1"],
                 ((0, Cp - Cin), (0, Pp - planes))).astype(jnp.bfloat16)
    w2 = jnp.pad(params["w2"],
                 ((0, 0), (0, 0), (0, Pp - planes), (0, Pp - planes)))
    w2 = w2.reshape(9, Pp, Pp).astype(jnp.bfloat16)
    w3 = jnp.pad(params["w3"],
                 ((0, Pp - planes), (0, Cp - Cout))).astype(jnp.bfloat16)

    def pad_vec(v, c):
        return jnp.pad(v, (0, c - v.shape[0])).reshape(1, c).astype(jnp.float32)

    g1, b1 = pad_vec(params["g1"], Pp), pad_vec(params["b1"], Pp)
    g2, b2 = pad_vec(params["g2"], Pp), pad_vec(params["b2"], Pp)
    g3, b3 = pad_vec(params["g3"], Cp), pad_vec(params["b3"], Cp)

    # Stage 1: conv1 + BN1 stats (raw y1 to HBM, normalization deferred).
    y1, s1a, s1b = _conv1_stage(x_flat, w1, tm=tm)
    y1_4d = y1.reshape(N, H, W, Pp)            # metadata-only reshape

    # Stage 2: BN1+ReLU on the fly, in-kernel 3x3 conv, BN2 stats.
    y2_4d, s2a, s2b = _conv2_stage(y1_4d, w2, s1a, s1b, g1, b1, count=M)
    y2 = y2_4d.reshape(M, Pp)                  # metadata-only reshape

    # Stage 3: BN2+ReLU on the fly, conv3, two-pass BN3, +residual, ReLU.
    out_flat = _conv3_stage(y2, w3, s2a, s2b, g2, b2, g3, b3, x_flat,
                            tm=tm, count=M)

    out = out_flat.reshape(N, H, W, Cp)[..., :Cin]
    return jnp.transpose(out, (0, 3, 1, 2))


# ---------------------------------------------------------------------------
# Pure-JAX reference (XLA convolutions), same bf16-operand / f32-accum policy.
# ---------------------------------------------------------------------------
def _bn_train_ref(y, gamma, beta):
    mean = y.mean(axis=(0, 1, 2), keepdims=True)
    var = jnp.square(y - mean).mean(axis=(0, 1, 2), keepdims=True)
    return gamma * (y - mean) * lax.rsqrt(var + EPS) + beta


def bottleneck_ref(x_nchw, params):
    x = jnp.transpose(x_nchw, (0, 2, 3, 1)).astype(jnp.float32)
    Cin = x.shape[-1]
    planes = params["w1"].shape[1]
    dn = ("NHWC", "HWIO", "NHWC")

    def conv(a, w_hwio, padding):
        return lax.conv_general_dilated(
            a.astype(jnp.bfloat16), w_hwio.astype(jnp.bfloat16),
            (1, 1), padding, dimension_numbers=dn,
            preferred_element_type=jnp.float32)

    w1 = params["w1"].reshape(1, 1, Cin, planes)
    w2 = params["w2"]
    w3 = params["w3"].reshape(1, 1, planes, Cin)

    o = conv(x, w1, "VALID")
    o = jnp.maximum(_bn_train_ref(o, params["g1"], params["b1"]), 0.0)
    o = conv(o, w2, [(1, 1), (1, 1)])
    o = jnp.maximum(_bn_train_ref(o, params["g2"], params["b2"]), 0.0)
    o = conv(o, w3, "VALID")
    o = _bn_train_ref(o, params["g3"], params["b3"])
    return jnp.transpose(jnp.maximum(o + x, 0.0), (0, 3, 1, 2))


# ---------------------------------------------------------------------------
if __name__ == "__main__":
    N, planes, H, W = 2, 4, 16, 16
    expansion = 4
    inplanes = planes * expansion          # 16 => residual add valid (no downsample)

    keys = jax.random.split(jax.random.PRNGKey(0), 10)
    x = jax.random.normal(keys[0], (N, inplanes, H, W), dtype=jnp.float32)

    params = {
        # conv1: (inplanes, planes); conv2: HWIO (3,3,planes,planes);
        # conv3: (planes, planes*expansion).
        "w1": 0.1 * jax.random.normal(keys[1], (inplanes, planes), jnp.float32),
        "w2": 0.1 * jax.random.normal(keys[2], (3, 3, planes, planes), jnp.float32),
        "w3": 0.1 * jax.random.normal(keys[3], (planes, planes * expansion),
                                      jnp.float32),
        # Non-trivial BN affine params to exercise the scale/shift folding.
        "g1": 1.0 + 0.1 * jax.random.normal(keys[4], (planes,), jnp.float32),
        "b1": 0.1 * jax.random.normal(keys[5], (planes,), jnp.float32),
        "g2": 1.0 + 0.1 * jax.random.normal(keys[6], (planes,), jnp.float32),
        "b2": 0.1 * jax.random.normal(keys[7], (planes,), jnp.float32),
        "g3": 1.0 + 0.1 * jax.random.normal(keys[8], (planes * expansion,),
                                            jnp.float32),
        "b3": 0.1 * jax.random.normal(keys[9], (planes * expansion,), jnp.float32),
    }

    fwd = jax.jit(functools.partial(bottleneck_forward, m_tile=128))
    out = jax.block_until_ready(fwd(x, params))
    ref = jax.block_until_ready(bottleneck_ref(x, params))

    assert out.shape == (N, inplanes, H, W)
    max_err = jnp.max(jnp.abs(out - ref))
    assert jnp.allclose(out, ref, atol=1e-2, rtol=1e-2), (
        f"mismatch vs reference, max abs err = {max_err}")
    print("KERNEL_OK")
</pallas_src>

<mosaic_0001>
module attributes {stable_mosaic.version = 11 : i64} {
  func.func @_conv1_bn_stats_kernel(%arg0: i32, %arg1: memref<128x128xf32, #tpu.memory_space<vmem>>, %arg2: memref<128x128xbf16, #tpu.memory_space<vmem>>, %arg3: memref<128x128xf32, #tpu.memory_space<vmem>>, %arg4: memref<1x128xf32, #tpu.memory_space<vmem>>, %arg5: memref<1x128xf32, #tpu.memory_space<vmem>>) attributes {dimension_semantics = [#tpu.dimension_semantics<arbitrary>], iteration_bounds = array<i64: 4>, scalar_prefetch = 0 : i64, scratch_operands = 0 : i64, tpu.core_type = #tpu.core_type<tc>, window_params = [{transform_indices = @transform_0, window_bounds = array<i64: 128, 128>}, {pipeline_mode = #tpu.pipeline_mode<synchronous>, transform_indices = @transform_1, window_bounds = array<i64: 128, 128>}, {transform_indices = @transform_2, window_bounds = array<i64: 128, 128>}, {pipeline_mode = #tpu.pipeline_mode<synchronous>, transform_indices = @transform_3, window_bounds = array<i64: 1, 128>}, {pipeline_mode = #tpu.pipeline_mode<synchronous>, transform_indices = @transform_4, window_bounds = array<i64: 1, 128>}]} {
    %c0 = arith.constant 0 : index
    %c0_0 = arith.constant 0 : index
    %0 = vector.load %arg1[%c0, %c0_0] : memref<128x128xf32, #tpu.memory_space<vmem>>, vector<128x128xf32>
    %1 = arith.truncf %0 : vector<128x128xf32> to vector<128x128xbf16>
    %c0_1 = arith.constant 0 : index
    %c0_2 = arith.constant 0 : index
    %2 = vector.load %arg2[%c0_1, %c0_2] : memref<128x128xbf16, #tpu.memory_space<vmem>>, vector<128x128xbf16>
    %cst = arith.constant dense<0.000000e+00> : vector<128x128xf32>
    %3 = tpu.matmul %1, %2, %cst {dimension_numbers = #tpu.dot_dimension_numbers<[1], [0], [0], [1], [0, 0, 1, 1], [], []>} : vector<128x128xbf16>, vector<128x128xbf16>, vector<128x128xf32> -> vector<128x128xf32>
    %c0_3 = arith.constant 0 : index
    %c0_4 = arith.constant 0 : index
    %4 = vector.load %arg3[%c0_3, %c0_4] : memref<128x128xf32, #tpu.memory_space<vmem>>, vector<128x128xf32>
    tpu.vector_store %arg3[%c0_3, %c0_4], %3 {strides = array<i32>} : memref<128x128xf32, #tpu.memory_space<vmem>>, vector<128x128xf32>,
    %cst_5 = arith.constant 1.000000e+00 : f32
    %5 = vector.broadcast %cst_5 : f32 to vector<1x128xf32>
    %cst_6 = arith.constant dense<0.000000e+00> : vector<1x128xf32>
    %6 = tpu.matmul %5, %3, %cst_6 {dimension_numbers = #tpu.dot_dimension_numbers<[1], [0], [0], [1], [0, 0, 1, 1], [], []>} : vector<1x128xf32>, vector<128x128xf32>, vector<1x128xf32> -> vector<1x128xf32>
    %7 = arith.mulf %3, %3 : vector<128x128xf32>
    %cst_7 = arith.constant dense<0.000000e+00> : vector<1x128xf32>
    %8 = tpu.matmul %5, %7, %cst_7 {dimension_numbers = #tpu.dot_dimension_numbers<[1], [0], [0], [1], [0, 0, 1, 1], [], []>} : vector<1x128xf32>, vector<128x128xf32>, vector<1x128xf32> -> vector<1x128xf32>
    %c0_i32 = arith.constant 0 : i32
    %9 = arith.cmpi eq, %arg0, %c0_i32 : i32
    %10 = arith.extui %9 : i1 to i32
    %c0_i32_8 = arith.constant 0 : i32
    %11 = arith.cmpi ne, %10, %c0_i32_8 : i32
    scf.if %11 {
      %cst_17 = arith.constant 0.000000e+00 : f32
      %18 = vector.broadcast %cst_17 : f32 to vector<1x128xf32>
      %c0_18 = arith.constant 0 : index
      %c0_19 = arith.constant 0 : index
      %19 = vector.load %arg4[%c0_18, %c0_19] : memref<1x128xf32, #tpu.memory_space<vmem>>, vector<1x128xf32>
      tpu.vector_store %arg4[%c0_18, %c0_19], %18 {strides = array<i32>} : memref<1x128xf32, #tpu.memory_space<vmem>>, vector<1x128xf32>,
      %cst_20 = arith.constant 0.000000e+00 : f32
      %20 = vector.broadcast %cst_20 : f32 to vector<1x128xf32>
      %c0_21 = arith.constant 0 : index
      %c0_22 = arith.constant 0 : index
      %21 = vector.load %arg5[%c0_21, %c0_22] : memref<1x128xf32, #tpu.memory_space<vmem>>, vector<1x128xf32>
      tpu.vector_store %arg5[%c0_21, %c0_22], %20 {strides = array<i32>} : memref<1x128xf32, #tpu.memory_space<vmem>>, vector<1x128xf32>,
    } else {
    }
    %c0_9 = arith.constant 0 : index
    %c0_10 = arith.constant 0 : index
    %12 = vector.load %arg4[%c0_9, %c0_10] : memref<1x128xf32, #tpu.memory_space<vmem>>, vector<1x128xf32>
    %13 = arith.addf %12, %6 : vector<1x128xf32>
    %c0_11 = arith.constant 0 : index
    %c0_12 = arith.constant 0 : index
    %14 = vector.load %arg4[%c0_11, %c0_12] : memref<1x128xf32, #tpu.memory_space<vmem>>, vector<1x128xf32>
    tpu.vector_store %arg4[%c0_11, %c0_12], %13 {strides = array<i32>} : memref<1x128xf32, #tpu.memory_space<vmem>>, vector<1x128xf32>,
    %c0_13 = arith.constant 0 : index
    %c0_14 = arith.constant 0 : index
    %15 = vector.load %arg5[%c0_13, %c0_14] : memref<1x128xf32, #tpu.memory_space<vmem>>, vector<1x128xf32>
    %16 = arith.addf %15, %8 : vector<1x128xf32>
    %c0_15 = arith.constant 0 : index
    %c0_16 = arith.constant 0 : index
    %17 = vector.load %arg5[%c0_15, %c0_16] : memref<1x128xf32, #tpu.memory_space<vmem>>, vector<1x128xf32>
    tpu.vector_store %arg5[%c0_15, %c0_16], %16 {strides = array<i32>} : memref<1x128xf32, #tpu.memory_space<vmem>>, vector<1x128xf32>,
    return
  }
  func.func @transform_0(%arg0: i32) -> (i32, i32) {
    %c0_i32 = arith.constant 0 : i32
    %c0_i32_0 = arith.constant 0 : i32
    return %arg0, %c0_i32 : i32, i32
  }
  func.func @transform_1(%arg0: i32) -> (i32, i32) {
    %c0_i32 = arith.constant 0 : i32
    %c0_i32_0 = arith.constant 0 : i32
    %c0_i32_1 = arith.constant 0 : i32
    return %c0_i32, %c0_i32_0 : i32, i32
  }
  func.func @transform_2(%arg0: i32) -> (i32, i32) {
    %c0_i32 = arith.constant 0 : i32
    %c0_i32_0 = arith.constant 0 : i32
    return %arg0, %c0_i32 : i32, i32
  }
  func.func @transform_3(%arg0: i32) -> (i32, i32) {
    %c0_i32 = arith.constant 0 : i32
    %c0_i32_0 = arith.constant 0 : i32
    %c0_i32_1 = arith.constant 0 : i32
    return %c0_i32, %c0_i32_0 : i32, i32
  }
  func.func @transform_4(%arg0: i32) -> (i32, i32) {
    %c0_i32 = arith.constant 0 : i32
    %c0_i32_0 = arith.constant 0 : i32
    %c0_i32_1 = arith.constant 0 : i32
    return %c0_i32, %c0_i32_0 : i32, i32
  }
}

module attributes {stable_mosaic.version = 11 : i64} {
  func.func @kernel(%arg0: i32, %arg1: memref<1x128xf32, #tpu.memory_space<vmem>>, %arg2: memref<1x128xf32, #tpu.memory_space<vmem>>, %arg3: memref<1x128xf32, #tpu.memory_space<vmem>>, %arg4: memref<1x128xf32, #tpu.memory_space<vmem>>, %arg5: memref<1x16x16x128xf32, #tpu.memory_space<vmem>>, %arg6: memref<9x128x128xbf16, #tpu.memory_space<vmem>>, %arg7: memref<1x16x16x128xf32, #tpu.memory_space<vmem>>, %arg8: memref<1x128xf32, #tpu.memory_space<vmem>>, %arg9: memref<1x128xf32, #tpu.memory_space<vmem>>, %arg10: memref<18x18x128xf32, #tpu.memory_space<vmem>>) attributes {dimension_semantics = [#tpu.dimension_semantics<arbitrary>], iteration_bounds = array<i64: 2>, scalar_prefetch = 0 : i64, scratch_operands = 1 : i64, tpu.core_type = #tpu.core_type<tc>, window_params = [{pipeline_mode = #tpu.pipeline_mode<synchronous>, transform_indices = @transform_0, window_bounds = array<i64: 1, 128>}, {pipeline_mode = #tpu.pipeline_mode<synchronous>, transform_indices = @transform_1, window_bounds = array<i64: 1, 128>}, {pipeline_mode = #tpu.pipeline_mode<synchronous>, transform_indices = @transform_2, window_bounds = array<i64: 1, 128>}, {pipeline_mode = #tpu.pipeline_mode<synchronous>, transform_indices = @transform_3, window_bounds = array<i64: 1, 128>}, {transform_indices = @transform_4, window_bounds = array<i64: 1, 16, 16, 128>}, {pipeline_mode = #tpu.pipeline_mode<synchronous>, transform_indices = @transform_5, window_bounds = array<i64: 9, 128, 128>}, {transform_indices = @transform_6, window_bounds = array<i64: 1, 16, 16, 128>}, {pipeline_mode = #tpu.pipeline_mode<synchronous>, transform_indices = @transform_7, window_bounds = array<i64: 1, 128>}, {pipeline_mode = #tpu.pipeline_mode<synchronous>, transform_indices = @transform_8, window_bounds = array<i64: 1, 128>}]} {
    %c0 = arith.constant 0 : index
    %c0_0 = arith.constant 0 : index
    %0 = vector.load %arg1[%c0, %c0_0] : memref<1x128xf32, #tpu.memory_space<vmem>>, vector<1x128xf32>
    %cst = arith.constant 0.001953125 : f32
    %1 = vector.broadcast %cst : f32 to vector<1x128xf32>
    %2 = arith.mulf %0, %1 : vector<1x128xf32>
    %c0_1 = arith.constant 0 : index
    %c0_2 = arith.constant 0 : index
    %3 = vector.load %arg2[%c0_1, %c0_2] : memref<1x128xf32, #tpu.memory_space<vmem>>, vector<1x128xf32>
    %cst_3 = arith.constant 0.001953125 : f32
    %4 = vector.broadcast %cst_3 : f32 to vector<1x128xf32>
    %5 = arith.mulf %3, %4 : vector<1x128xf32>
    %6 = arith.mulf %2, %2 : vector<1x128xf32>
    %7 = arith.subf %5, %6 : vector<1x128xf32>
    %cst_4 = arith.constant 9.99999974E-6 : f32
    %8 = vector.broadcast %cst_4 : f32 to vector<1x128xf32>
    %9 = arith.addf %7, %8 : vector<1x128xf32>
    %10 = math.rsqrt %9 : vector<1x128xf32>
    %c0_5 = arith.constant 0 : index
    %c0_6 = arith.constant 0 : index
    %11 = vector.load %arg3[%c0_5, %c0_6] : memref<1x128xf32, #tpu.memory_space<vmem>>, vector<1x128xf32>
    %12 = arith.mulf %11, %10 : vector<1x128xf32>
    %13 = vector.shape_cast %12 : vector<1x128xf32> to vector<1x1x128xf32>
    %c0_7 = arith.constant 0 : index
    %c0_8 = arith.constant 0 : index
    %14 = vector.load %arg4[%c0_7, %c0_8] : memref<1x128xf32, #tpu.memory_space<vmem>>, vector<1x128xf32>
    %c0_9 = arith.constant 0 : index
    %c0_10 = arith.constant 0 : index
    %15 = vector.load %arg3[%c0_9, %c0_10] : memref<1x128xf32, #tpu.memory_space<vmem>>, vector<1x128xf32>
    %16 = arith.mulf %2, %15 : vector<1x128xf32>
    %17 = arith.mulf %16, %10 : vector<1x128xf32>
    %18 = arith.subf %14, %17 : vector<1x128xf32>
    %19 = vector.shape_cast %18 : vector<1x128xf32> to vector<1x1x128xf32>
    %c0_11 = arith.constant 0 : index
    %c0_12 = arith.constant 0 : index
    %c0_13 = arith.constant 0 : index
    %c0_14 = arith.constant 0 : index
    %20 = vector.load %arg5[%c0_11, %c0_12, %c0_13, %c0_14] : memref<1x16x16x128xf32, #tpu.memory_space<vmem>>, vector<1x16x16x128xf32>
    %21 = vector.shape_cast %20 : vector<1x16x16x128xf32> to vector<16x16x128xf32>
    %22 = vector.broadcast %13 : vector<1x1x128xf32> to vector<16x16x128xf32>
    %23 = arith.mulf %21, %22 : vector<16x16x128xf32>
    %24 = vector.broadcast %19 : vector<1x1x128xf32> to vector<16x16x128xf32>
    %25 = arith.addf %23, %24 : vector<16x16x128xf32>
    %cst_15 = arith.constant 0.000000e+00 : f32
    %26 = vector.broadcast %cst_15 : f32 to vector<16x16x128xf32>
    %27 = arith.maximumf %25, %26 : vector<16x16x128xf32>
    %cst_16 = arith.constant 0.000000e+00 : f32
    %28 = vector.broadcast %cst_16 : f32 to vector<18x18x128xf32>
    %c0_17 = arith.constant 0 : index
    %c0_18 = arith.constant 0 : index
    %c0_19 = arith.constant 0 : index
    %29 = vector.load %arg10[%c0_17, %c0_18, %c0_19] : memref<18x18x128xf32, #tpu.memory_space<vmem>>, vector<18x18x128xf32>
    tpu.vector_store %arg10[%c0_17, %c0_18, %c0_19], %28 {strides = array<i32>} : memref<18x18x128xf32, #tpu.memory_space<vmem>>, vector<18x18x128xf32>,
    %c1 = arith.constant 1 : index
    %c1_20 = arith.constant 1 : index
    %c0_21 = arith.constant 0 : index
    %30 = vector.load %arg10[%c1, %c1_20, %c0_21] : memref<18x18x128xf32, #tpu.memory_space<vmem>>, vector<16x16x128xf32>
    tpu.vector_store %arg10[%c1, %c1_20, %c0_21], %27 {strides = array<i32>} : memref<18x18x128xf32, #tpu.memory_space<vmem>>, vector<16x16x128xf32>,
    %cst_22 = arith.constant 0.000000e+00 : f32
    %31 = vector.broadcast %cst_22 : f32 to vector<1x128xf32>
    %c0_i32 = arith.constant 0 : i32
    %c16_i32 = arith.constant 16 : i32
    %32 = arith.addi %c0_i32, %c16_i32 : i32
    %c1_i32 = arith.constant 1 : i32
    %33:2 = scf.for %arg11 = %c0_i32 to %32 step %c1_i32 iter_args(%arg12 = %31, %arg13 = %31) -> (vector<1x128xf32>, vector<1x128xf32>)  : i32 {
      %cst_34 = arith.constant 0.000000e+00 : f32
      %43 = vector.broadcast %cst_34 : f32 to vector<16x128xf32>
      %c0_i32_35 = arith.constant 0 : i32
      %44 = arith.addi %arg11, %c0_i32_35 : i32
      %45 = arith.index_cast %44 : i32 to index
      %c0_36 = arith.constant 0 : index
      %c0_37 = arith.constant 0 : index
      %46 = vector.load %arg10[%45, %c0_36, %c0_37] : memref<18x18x128xf32, #tpu.memory_space<vmem>>, vector<1x18x128xf32>
      %47 = vector.shape_cast %46 : vector<1x18x128xf32> to vector<18x128xf32>
      %48 = vector.extract_strided_slice %47 {offsets = [0, 0], sizes = [16, 128], strides = [1, 1]} : vector<18x128xf32> to vector<16x128xf32>
      %49 = arith.truncf %48 : vector<16x128xf32> to vector<16x128xbf16>
      %c0_38 = arith.constant 0 : index
      %c0_39 = arith.constant 0 : index
      %c0_40 = arith.constant 0 : index
      %50 = vector.load %arg6[%c0_38, %c0_39, %c0_40] : memref<9x128x128xbf16, #tpu.memory_space<vmem>>, vector<1x128x128xbf16>
      %51 = vector.shape_cast %50 : vector<1x128x128xbf16> to vector<128x128xbf16>
      %cst_41 = arith.constant dense<0.000000e+00> : vector<16x128xf32>
      %52 = tpu.matmul %49, %51, %cst_41 {dimension_numbers = #tpu.dot_dimension_numbers<[1], [0], [0], [1], [0, 0, 1, 1], [], []>} : vector<16x128xbf16>, vector<128x128xbf16>, vector<16x128xf32> -> vector<16x128xf32>
      %53 = arith.addf %43, %52 : vector<16x128xf32>
      %54 = vector.extract_strided_slice %47 {offsets = [1, 0], sizes = [16, 128], strides = [1, 1]} : vector<18x128xf32> to vector<16x128xf32>
      %55 = arith.truncf %54 : vector<16x128xf32> to vector<16x128xbf16>
      %c1_42 = arith.constant 1 : index
      %c0_43 = arith.constant 0 : index
      %c0_44 = arith.constant 0 : index
      %56 = vector.load %arg6[%c1_42, %c0_43, %c0_44] : memref<9x128x128xbf16, #tpu.memory_space<vmem>>, vector<1x128x128xbf16>
      %57 = vector.shape_cast %56 : vector<1x128x128xbf16> to vector<128x128xbf16>
      %cst_45 = arith.constant dense<0.000000e+00> : vector<16x128xf32>
      %58 = tpu.matmul %55, %57, %cst_45 {dimension_numbers = #tpu.dot_dimension_numbers<[1], [0], [0], [1], [0, 0, 1, 1], [], []>} : vector<16x128xbf16>, vector<128x128xbf16>, vector<16x128xf32> -> vector<16x128xf32>
      %59 = arith.addf %53, %58 : vector<16x128xf32>
      %60 = vector.extract_strided_slice %47 {offsets = [2, 0], sizes = [16, 128], strides = [1, 1]} : vector<18x128xf32> to vector<16x128xf32>
      %61 = arith.truncf %60 : vector<16x128xf32> to vector<16x128xbf16>
      %c2 = arith.constant 2 : index
      %c0_46 = arith.constant 0 : index
      %c0_47 = arith.constant 0 : index
      %62 = vector.load %arg6[%c2, %c0_46, %c0_47] : memref<9x128x128xbf16, #tpu.memory_space<vmem>>, vector<1x128x128xbf16>
      %63 = vector.shape_cast %62 : vector<1x128x128xbf16> to vector<128x128xbf16>
      %cst_48 = arith.constant dense<0.000000e+00> : vector<16x128xf32>
      %64 = tpu.matmul %61, %63, %cst_48 {dimension_numbers = #tpu.dot_dimension_numbers<[1], [0], [0], [1], [0, 0, 1, 1], [], []>} : vector<16x128xbf16>, vector<128x128xbf16>, vector<16x128xf32> -> vector<16x128xf32>
      %65 = arith.addf %59, %64 : vector<16x128xf32>
      %c1_i32_49 = arith.constant 1 : i32
      %66 = arith.addi %arg11, %c1_i32_49 : i32
      %67 = arith.index_cast %66 : i32 to index
      %c0_50 = arith.constant 0 : index
      %c0_51 = arith.constant 0 : index
      %68 = vector.load %arg10[%67, %c0_50, %c0_51] : memref<18x18x128xf32, #tpu.memory_space<vmem>>, vector<1x18x128xf32>
      %69 = vector.shape_cast %68 : vector<1x18x128xf32> to vector<18x128xf32>
      %70 = vector.extract_strided_slice %69 {offsets = [0, 0], sizes = [16, 128], strides = [1, 1]} : vector<18x128xf32> to vector<16x128xf32>
      %71 = arith.truncf %70 : vector<16x128xf32> to vector<16x128xbf16>
      %c3 = arith.constant 3 : index
      %c0_52 = arith.constant 0 : index
      %c0_53 = arith.constant 0 : index
      %72 = vector.load %arg6[%c3, %c0_52, %c0_53] : memref<9x128x128xbf16, #tpu.memory_space<vmem>>, vector<1x128x128xbf16>
      %73 = vector.shape_cast %72 : vector<1x128x128xbf16> to vector<128x128xbf16>
      %cst_54 = arith.constant dense<0.000000e+00> : vector<16x128xf32>
      %74 = tpu.matmul %71, %73, %cst_54 {dimension_numbers = #tpu.dot_dimension_numbers<[1], [0], [0], [1], [0, 0, 1, 1], [], []>} : vector<16x128xbf16>, vector<128x128xbf16>, vector<16x128xf32> -> vector<16x128xf32>
      %75 = arith.addf %65, %74 : vector<16x128xf32>
      %76 = vector.extract_strided_slice %69 {offsets = [1, 0], sizes = [16, 128], strides = [1, 1]} : vector<18x128xf32> to vector<16x128xf32>
      %77 = arith.truncf %76 : vector<16x128xf32> to vector<16x128xbf16>
      %c4 = arith.constant 4 : index
      %c0_55 = arith.constant 0 : index
      %c0_56 = arith.constant 0 : index
      %78 = vector.load %arg6[%c4, %c0_55, %c0_56] : memref<9x128x128xbf16, #tpu.memory_space<vmem>>, vector<1x128x128xbf16>
      %79 = vector.shape_cast %78 : vector<1x128x128xbf16> to vector<128x128xbf16>
      %cst_57 = arith.constant dense<0.000000e+00> : vector<16x128xf32>
      %80 = tpu.matmul %77, %79, %cst_57 {dimension_numbers = #tpu.dot_dimension_numbers<[1], [0], [0], [1], [0, 0, 1, 1], [], []>} : vector<16x128xbf16>, vector<128x128xbf16>, vector<16x128xf32> -> vector<16x128xf32>
      %81 = arith.addf %75, %80 : vector<16x128xf32>
      %82 = vector.extract_strided_slice %69 {offsets = [2, 0], sizes = [16, 128], strides = [1, 1]} : vector<18x128xf32> to vector<16x128xf32>
      %83 = arith.truncf %82 : vector<16x128xf32> to vector<16x128xbf16>
      %c5 = arith.constant 5 : index
      %c0_58 = arith.constant 0 : index
      %c0_59 = arith.constant 0 : index
      %84 = vector.load %arg6[%c5, %c0_58, %c0_59] : memref<9x128x128xbf16, #tpu.memory_space<vmem>>, vector<1x128x128xbf16>
      %85 = vector.shape_cast %84 : vector<1x128x128xbf16> to vector<128x128xbf16>
      %cst_60 = arith.constant dense<0.000000e+00> : vector<16x128xf32>
      %86 = tpu.matmul %83, %85, %cst_60 {dimension_numbers = #tpu.dot_dimension_numbers<[1], [0], [0], [1], [0, 0, 1, 1], [], []>} : vector<16x128xbf16>, vector<128x128xbf16>, vector<16x128xf32> -> vector<16x128xf32>
      %87 = arith.addf %81, %86 : vector<16x128xf32>
      %c2_i32 = arith.constant 2 : i32
      %88 = arith.addi %arg11, %c2_i32 : i32
      %89 = arith.index_cast %88 : i32 to index
      %c0_61 = arith.constant 0 : index
      %c0_62 = arith.constant 0 : index
      %90 = vector.load %arg10[%89, %c0_61, %c0_62] : memref<18x18x128xf32, #tpu.memory_space<vmem>>, vector<1x18x128xf32>
      %91 = vector.shape_cast %90 : vector<1x18x128xf32> to vector<18x128xf32>
      %92 = vector.extract_strided_slice %91 {offsets = [0, 0], sizes = [16, 128], strides = [1, 1]} : vector<18x128xf32> to vector<16x128xf32>
      %93 = arith.truncf %92 : vector<16x128xf32> to vector<16x128xbf16>
      %c6 = arith.constant 6 : index
      %c0_63 = arith.constant 0 : index
      %c0_64 = arith.constant 0 : index
      %94 = vector.load %arg6[%c6, %c0_63, %c0_64] : memref<9x128x128xbf16, #tpu.memory_space<vmem>>, vector<1x128x128xbf16>
      %95 = vector.shape_cast %94 : vector<1x128x128xbf16> to vector<128x128xbf16>
      %cst_65 = arith.constant dense<0.000000e+00> : vector<16x128xf32>
      %96 = tpu.matmul %93, %95, %cst_65 {dimension_numbers = #tpu.dot_dimension_numbers<[1], [0], [0], [1], [0, 0, 1, 1], [], []>} : vector<16x128xbf16>, vector<128x128xbf16>, vector<16x128xf32> -> vector<16x128xf32>
      %97 = arith.addf %87, %96 : vector<16x128xf32>
      %98 = vector.extract_strided_slice %91 {offsets = [1, 0], sizes = [16, 128], strides = [1, 1]} : vector<18x128xf32> to vector<16x128xf32>
      %99 = arith.truncf %98 : vector<16x128xf32> to vector<16x128xbf16>
      %c7 = arith.constant 7 : index
      %c0_66 = arith.constant 0 : index
      %c0_67 = arith.constant 0 : index
      %100 = vector.load %arg6[%c7, %c0_66, %c0_67] : memref<9x128x128xbf16, #tpu.memory_space<vmem>>, vector<1x128x128xbf16>
      %101 = vector.shape_cast %100 : vector<1x128x128xbf16> to vector<128x128xbf16>
      %cst_68 = arith.constant dense<0.000000e+00> : vector<16x128xf32>
      %102 = tpu.matmul %99, %101, %cst_68 {dimension_numbers = #tpu.dot_dimension_numbers<[1], [0], [0], [1], [0, 0, 1, 1], [], []>} : vector<16x128xbf16>, vector<128x128xbf16>, vector<16x128xf32> -> vector<16x128xf32>
      %103 = arith.addf %97, %102 : vector<16x128xf32>
      %104 = vector.extract_strided_slice %91 {offsets = [2, 0], sizes = [16, 128], strides = [1, 1]} : vector<18x128xf32> to vector<16x128xf32>
      %105 = arith.truncf %104 : vector<16x128xf32> to vector<16x128xbf16>
      %c8 = arith.constant 8 : index
      %c0_69 = arith.constant 0 : index
      %c0_70 = arith.constant 0 : index
      %106 = vector.load %arg6[%c8, %c0_69, %c0_70] : memref<9x128x128xbf16, #tpu.memory_space<vmem>>, vector<1x128x128xbf16>
      %107 = vector.shape_cast %106 : vector<1x128x128xbf16> to vector<128x128xbf16>
      %cst_71 = arith.constant dense<0.000000e+00> : vector<16x128xf32>
      %108 = tpu.matmul %105, %107, %cst_71 {dimension_numbers = #tpu.dot_dimension_numbers<[1], [0], [0], [1], [0, 0, 1, 1], [], []>} : vector<16x128xbf16>, vector<128x128xbf16>, vector<16x128xf32> -> vector<16x128xf32>
      %109 = arith.addf %103, %108 : vector<16x128xf32>
      %c0_72 = arith.constant 0 : index
      %110 = arith.index_cast %arg11 : i32 to index
      %c0_73 = arith.constant 0 : index
      %c0_74 = arith.constant 0 : index
      %111 = vector.load %arg7[%c0_72, %110, %c0_73, %c0_74] : memref<1x16x16x128xf32, #tpu.memory_space<vmem>>, vector<1x1x16x128xf32>
      %112 = vector.shape_cast %111 : vector<1x1x16x128xf32> to vector<16x128xf32>
      %113 = vector.shape_cast %109 : vector<16x128xf32> to vector<1x1x16x128xf32>
      tpu.vector_store %arg7[%c0_72, %110, %c0_73, %c0_74], %113 {strides = array<i32>} : memref<1x16x16x128xf32, #tpu.memory_space<vmem>>, vector<1x1x16x128xf32>,
      %cst_75 = arith.constant dense<0.000000e+00> : vector<128xf32>
      %114 = vector.multi_reduction <add>, %109, %cst_75 [0] : vector<16x128xf32> to vector<128xf32>
      %115 = vector.shape_cast %114 : vector<128xf32> to vector<1x128xf32>
      %116 = arith.addf %arg12, %115 : vector<1x128xf32>
      %117 = arith.mulf %109, %109 : vector<16x128xf32>
      %cst_76 = arith.constant dense<0.000000e+00> : vector<128xf32>
      %118 = vector.multi_reduction <add>, %117, %cst_76 [0] : vector<16x128xf32> to vector<128xf32>
      %119 = vector.shape_cast %118 : vector<128xf32> to vector<1x128xf32>
      %120 = arith.addf %arg13, %119 : vector<1x128xf32>
      scf.yield %116, %120 : vector<1x128xf32>, vector<1x128xf32>
    }
    %c16_i32_23 = arith.constant 16 : i32
    %c0_i32_24 = arith.constant 0 : i32
    %34 = arith.cmpi eq, %arg0, %c0_i32_24 : i32
    %35 = arith.extui %34 : i1 to i32
    %c0_i32_25 = arith.constant 0 : i32
    %36 = arith.cmpi ne, %35, %c0_i32_25 : i32
    scf.if %36 {
      %cst_34 = arith.constant 0.000000e+00 : f32
      %43 = vector.broadcast %cst_34 : f32 to vector<1x128xf32>
      %c0_35 = arith.constant 0 : index
      %c0_36 = arith.constant 0 : index
      %44 = vector.load %arg8[%c0_35, %c0_36] : memref<1x128xf32, #tpu.memory_space<vmem>>, vector<1x128xf32>
      tpu.vector_store %arg8[%c0_35, %c0_36], %43 {strides = array<i32>} : memref<1x128xf32, #tpu.memory_space<vmem>>, vector<1x128xf32>,
      %cst_37 = arith.constant 0.000000e+00 : f32
      %45 = vector.broadcast %cst_37 : f32 to vector<1x128xf32>
      %c0_38 = arith.constant 0 : index
      %c0_39 = arith.constant 0 : index
      %46 = vector.load %arg9[%c0_38, %c0_39] : memref<1x128xf32, #tpu.memory_space<vmem>>, vector<1x128xf32>
      tpu.vector_store %arg9[%c0_38, %c0_39], %45 {strides = array<i32>} : memref<1x128xf32, #tpu.memory_space<vmem>>, vector<1x128xf32>,
    } else {
    }
    %c0_26 = arith.constant 0 : index
    %c0_27 = arith.constant 0 : index
    %37 = vector.load %arg8[%c0_26, %c0_27] : memref<1x128xf32, #tpu.memory_space<vmem>>, vector<1x128xf32>
    %38 = arith.addf %37, %33#0 : vector<1x128xf32>
    %c0_28 = arith.constant 0 : index
    %c0_29 = arith.constant 0 : index
    %39 = vector.load %arg8[%c0_28, %c0_29] : memref<1x128xf32, #tpu.memory_space<vmem>>, vector<1x128xf32>
    tpu.vector_store %arg8[%c0_28, %c0_29], %38 {strides = array<i32>} : memref<1x128xf32, #tpu.memory_space<vmem>>, vector<1x128xf32>,
    %c0_30 = arith.constant 0 : index
    %c0_31 = arith.constant 0 : index
    %40 = vector.load %arg9[%c0_30, %c0_31] : memref<1x128xf32, #tpu.memory_space<vmem>>, vector<1x128xf32>
    %41 = arith.addf %40, %33#1 : vector<1x128xf32>
    %c0_32 = arith.constant 0 : index
    %c0_33 = arith.constant 0 : index
    %42 = vector.load %arg9[%c0_32, %c0_33] : memref<1x128xf32, #tpu.memory_space<vmem>>, vector<1x128xf32>
    tpu.vector_store %arg9[%c0_32, %c0_33], %41 {strides = array<i32>} : memref<1x128xf32, #tpu.memory_space<vmem>>, vector<1x128xf32>,
    return
  }
  func.func @transform_0(%arg0: i32) -> (i32, i32) {
    %c0_i32 = arith.constant 0 : i32
    %c0_i32_0 = arith.constant 0 : i32
    %c0_i32_1 = arith.constant 0 : i32
    return %c0_i32, %c0_i32_0 : i32, i32
  }
  func.func @transform_1(%arg0: i32) -> (i32, i32) {
    %c0_i32 = arith.constant 0 : i32
    %c0_i32_0 = arith.constant 0 : i32
    %c0_i32_1 = arith.constant 0 : i32
    return %c0_i32, %c0_i32_0 : i32, i32
  }
  func.func @transform_2(%arg0: i32) -> (i32, i32) {
    %c0_i32 = arith.constant 0 : i32
    %c0_i32_0 = arith.constant 0 : i32
    %c0_i32_1 = arith.constant 0 : i32
    return %c0_i32, %c0_i32_0 : i32, i32
  }
  func.func @transform_3(%arg0: i32) -> (i32, i32) {
    %c0_i32 = arith.constant 0 : i32
    %c0_i32_0 = arith.constant 0 : i32
    %c0_i32_1 = arith.constant 0 : i32
    return %c0_i32, %c0_i32_0 : i32, i32
  }
  func.func @transform_4(%arg0: i32) -> (i32, i32, i32, i32) {
    %c0_i32 = arith.constant 0 : i32
    %c0_i32_0 = arith.constant 0 : i32
    %c0_i32_1 = arith.constant 0 : i32
    %c0_i32_2 = arith.constant 0 : i32
    return %arg0, %c0_i32, %c0_i32_0, %c0_i32_1 : i32, i32, i32, i32
  }
  func.func @transform_5(%arg0: i32) -> (i32, i32, i32) {
    %c0_i32 = arith.constant 0 : i32
    %c0_i32_0 = arith.constant 0 : i32
    %c0_i32_1 = arith.constant 0 : i32
    %c0_i32_2 = arith.constant 0 : i32
    return %c0_i32, %c0_i32_0, %c0_i32_1 : i32, i32, i32
  }
  func.func @transform_6(%arg0: i32) -> (i32, i32, i32, i32) {
    %c0_i32 = arith.constant 0 : i32
    %c0_i32_0 = arith.constant 0 : i32
    %c0_i32_1 = arith.constant 0 : i32
    %c0_i32_2 = arith.constant 0 : i32
    return %arg0, %c0_i32, %c0_i32_0, %c0_i32_1 : i32, i32, i32, i32
  }
  func.func @transform_7(%arg0: i32) -> (i32, i32) {
    %c0_i32 = arith.constant 0 : i32
    %c0_i32_0 = arith.constant 0 : i32
    %c0_i32_1 = arith.constant 0 : i32
    return %c0_i32, %c0_i32_0 : i32, i32
  }
  func.func @transform_8(%arg0: i32) -> (i32, i32) {
    %c0_i32 = arith.constant 0 : i32
    %c0_i32_0 = arith.constant 0 : i32
    %c0_i32_1 = arith.constant 0 : i32
    return %c0_i32, %c0_i32_0 : i32, i32
  }
}

module attributes {stable_mosaic.version = 11 : i64} {
  func.func @kernel(%arg0: i32, %arg1: i32, %arg2: memref<1x128xf32, #tpu.memory_space<vmem>>, %arg3: memref<1x128xf32, #tpu.memory_space<vmem>>, %arg4: memref<1x128xf32, #tpu.memory_space<vmem>>, %arg5: memref<1x128xf32, #tpu.memory_space<vmem>>, %arg6: memref<128x128xf32, #tpu.memory_space<vmem>>, %arg7: memref<128x128xbf16, #tpu.memory_space<vmem>>, %arg8: memref<1x128xf32, #tpu.memory_space<vmem>>, %arg9: memref<1x128xf32, #tpu.memory_space<vmem>>, %arg10: memref<128x128xf32, #tpu.memory_space<vmem>>, %arg11: memref<128x128xf32, #tpu.memory_space<vmem>>, %arg12: memref<1x128xf32, #tpu.memory_space<vmem>>, %arg13: memref<1x128xf32, #tpu.memory_space<vmem>>) attributes {dimension_semantics = [#tpu.dimension_semantics<arbitrary>, #tpu.dimension_semantics<arbitrary>], iteration_bounds = array<i64: 2, 4>, scalar_prefetch = 0 : i64, scratch_operands = 2 : i64, tpu.core_type = #tpu.core_type<tc>, window_params = [{pipeline_mode = #tpu.pipeline_mode<synchronous>, transform_indices = @transform_0, window_bounds = array<i64: 1, 128>}, {pipeline_mode = #tpu.pipeline_mode<synchronous>, transform_indices = @transform_1, window_bounds = array<i64: 1, 128>}, {pipeline_mode = #tpu.pipeline_mode<synchronous>, transform_indices = @transform_2, window_bounds = array<i64: 1, 128>}, {pipeline_mode = #tpu.pipeline_mode<synchronous>, transform_indices = @transform_3, window_bounds = array<i64: 1, 128>}, {transform_indices = @transform_4, window_bounds = array<i64: 128, 128>}, {pipeline_mode = #tpu.pipeline_mode<synchronous>, transform_indices = @transform_5, window_bounds = array<i64: 128, 128>}, {pipeline_mode = #tpu.pipeline_mode<synchronous>, transform_indices = @transform_6, window_bounds = array<i64: 1, 128>}, {pipeline_mode = #tpu.pipeline_mode<synchronous>, transform_indices = @transform_7, window_bounds = array<i64: 1, 128>}, {transform_indices = @transform_8, window_bounds = array<i64: 128, 128>}, {transform_indices = @transform_9, window_bounds = array<i64: 128, 128>}]} {
    %c0 = arith.constant 0 : index
    %c0_0 = arith.constant 0 : index
    %0 = vector.load %arg2[%c0, %c0_0] : memref<1x128xf32, #tpu.memory_space<vmem>>, vector<1x128xf32>
    %cst = arith.constant 0.001953125 : f32
    %1 = vector.broadcast %cst : f32 to vector<1x128xf32>
    %2 = arith.mulf %0, %1 : vector<1x128xf32>
    %c0_1 = arith.constant 0 : index
    %c0_2 = arith.constant 0 : index
    %3 = vector.load %arg3[%c0_1, %c0_2] : memref<1x128xf32, #tpu.memory_space<vmem>>, vector<1x128xf32>
    %cst_3 = arith.constant 0.001953125 : f32
    %4 = vector.broadcast %cst_3 : f32 to vector<1x128xf32>
    %5 = arith.mulf %3, %4 : vector<1x128xf32>
    %6 = arith.mulf %2, %2 : vector<1x128xf32>
    %7 = arith.subf %5, %6 : vector<1x128xf32>
    %cst_4 = arith.constant 9.99999974E-6 : f32
    %8 = vector.broadcast %cst_4 : f32 to vector<1x128xf32>
    %9 = arith.addf %7, %8 : vector<1x128xf32>
    %10 = math.rsqrt %9 : vector<1x128xf32>
    %c0_5 = arith.constant 0 : index
    %c0_6 = arith.constant 0 : index
    %11 = vector.load %arg4[%c0_5, %c0_6] : memref<1x128xf32, #tpu.memory_space<vmem>>, vector<1x128xf32>
    %12 = arith.mulf %11, %10 : vector<1x128xf32>
    %c0_7 = arith.constant 0 : index
    %c0_8 = arith.constant 0 : index
    %13 = vector.load %arg5[%c0_7, %c0_8] : memref<1x128xf32, #tpu.memory_space<vmem>>, vector<1x128xf32>
    %14 = arith.mulf %2, %12 : vector<1x128xf32>
    %15 = arith.subf %13, %14 : vector<1x128xf32>
    %c0_9 = arith.constant 0 : index
    %c0_10 = arith.constant 0 : index
    %16 = vector.load %arg6[%c0_9, %c0_10] : memref<128x128xf32, #tpu.memory_space<vmem>>, vector<128x128xf32>
    %17 = vector.broadcast %12 : vector<1x128xf32> to vector<128x128xf32>
    %18 = arith.mulf %16, %17 : vector<128x128xf32>
    %19 = vector.broadcast %15 : vector<1x128xf32> to vector<128x128xf32>
    %20 = arith.addf %18, %19 : vector<128x128xf32>
    %cst_11 = arith.constant 0.000000e+00 : f32
    %21 = vector.broadcast %cst_11 : f32 to vector<128x128xf32>
    %22 = arith.maximumf %20, %21 : vector<128x128xf32>
    %23 = arith.truncf %22 : vector<128x128xf32> to vector<128x128xbf16>
    %c0_12 = arith.constant 0 : index
    %c0_13 = arith.constant 0 : index
    %24 = vector.load %arg7[%c0_12, %c0_13] : memref<128x128xbf16, #tpu.memory_space<vmem>>, vector<128x128xbf16>
    %cst_14 = arith.constant dense<0.000000e+00> : vector<128x128xf32>
    %25 = tpu.matmul %23, %24, %cst_14 {dimension_numbers = #tpu.dot_dimension_numbers<[1], [0], [0], [1], [0, 0, 1, 1], [], []>} : vector<128x128xbf16>, vector<128x128xbf16>, vector<128x128xf32> -> vector<128x128xf32>
    %c0_i32 = arith.constant 0 : i32
    %26 = arith.cmpi eq, %arg0, %c0_i32 : i32
    %c0_i32_15 = arith.constant 0 : i32
    %27 = arith.cmpi eq, %arg1, %c0_i32_15 : i32
    %28 = arith.andi %26, %27 : i1
    %29 = arith.extui %28 : i1 to i32
    %c0_i32_16 = arith.constant 0 : i32
    %30 = arith.cmpi ne, %29, %c0_i32_16 : i32
    scf.if %30 {
      %cst_20 = arith.constant 0.000000e+00 : f32
      %37 = vector.broadcast %cst_20 : f32 to vector<1x128xf32>
      %c0_21 = arith.constant 0 : index
      %c0_22 = arith.constant 0 : index
      %38 = vector.load %arg12[%c0_21, %c0_22] : memref<1x128xf32, #tpu.memory_space<vmem>>, vector<1x128xf32>
      tpu.vector_store %arg12[%c0_21, %c0_22], %37 {strides = array<i32>} : memref<1x128xf32, #tpu.memory_space<vmem>>, vector<1x128xf32>,
      %cst_23 = arith.constant 0.000000e+00 : f32
      %39 = vector.broadcast %cst_23 : f32 to vector<1x128xf32>
      %c0_24 = arith.constant 0 : index
      %c0_25 = arith.constant 0 : index
      %40 = vector.load %arg13[%c0_24, %c0_25] : memref<1x128xf32, #tpu.memory_space<vmem>>, vector<1x128xf32>
      tpu.vector_store %arg13[%c0_24, %c0_25], %39 {strides = array<i32>} : memref<1x128xf32, #tpu.memory_space<vmem>>, vector<1x128xf32>,
    } else {
    }
    %c0_i32_17 = arith.constant 0 : i32
    %31 = arith.cmpi eq, %arg0, %c0_i32_17 : i32
    %32 = arith.extui %31 : i1 to i32
    %c0_i32_18 = arith.constant 0 : i32
    %33 = arith.cmpi ne, %32, %c0_i32_18 : i32
    scf.if %33 {
      %cst_20 = arith.constant 1.000000e+00 : f32
      %37 = vector.broadcast %cst_20 : f32 to vector<1x128xf32>
      %c0_21 = arith.constant 0 : index
      %c0_22 = arith.constant 0 : index
      %38 = vector.load %arg12[%c0_21, %c0_22] : memref<1x128xf32, #tpu.memory_space<vmem>>, vector<1x128xf32>
      %cst_23 = arith.constant dense<0.000000e+00> : vector<1x128xf32>
      %39 = tpu.matmul %37, %25, %cst_23 {dimension_numbers = #tpu.dot_dimension_numbers<[1], [0], [0], [1], [0, 0, 1, 1], [], []>} : vector<1x128xf32>, vector<128x128xf32>, vector<1x128xf32> -> vector<1x128xf32>
      %40 = arith.addf %38, %39 : vector<1x128xf32>
      %c0_24 = arith.constant 0 : index
      %c0_25 = arith.constant 0 : index
      %41 = vector.load %arg12[%c0_24, %c0_25] : memref<1x128xf32, #tpu.memory_space<vmem>>, vector<1x128xf32>
      tpu.vector_store %arg12[%c0_24, %c0_25], %40 {strides = array<i32>} : memref<1x128xf32, #tpu.memory_space<vmem>>, vector<1x128xf32>,
      %c0_26 = arith.constant 0 : index
      %c0_27 = arith.constant 0 : index
      %42 = vector.load %arg13[%c0_26, %c0_27] : memref<1x128xf32, #tpu.memory_space<vmem>>, vector<1x128xf32>
      %43 = arith.mulf %25, %25 : vector<128x128xf32>
      %cst_28 = arith.constant dense<0.000000e+00> : vector<1x128xf32>
      %44 = tpu.matmul %37, %43, %cst_28 {dimension_numbers = #tpu.dot_dimension_numbers<[1], [0], [0], [1], [0, 0, 1, 1], [], []>} : vector<1x128xf32>, vector<128x128xf32>, vector<1x128xf32> -> vector<1x128xf32>
      %45 = arith.addf %42, %44 : vector<1x128xf32>
      %c0_29 = arith.constant 0 : index
      %c0_30 = arith.constant 0 : index
      %46 = vector.load %arg13[%c0_29, %c0_30] : memref<1x128xf32, #tpu.memory_space<vmem>>, vector<1x128xf32>
      tpu.vector_store %arg13[%c0_29, %c0_30], %45 {strides = array<i32>} : memref<1x128xf32, #tpu.memory_space<vmem>>, vector<1x128xf32>,
      %c0_31 = arith.constant 0 : index
      %c0_32 = arith.constant 0 : index
      %47 = vector.load %arg11[%c0_31, %c0_32] : memref<128x128xf32, #tpu.memory_space<vmem>>, vector<128x128xf32>
      tpu.vector_store %arg11[%c0_31, %c0_32], %25 {strides = array<i32>} : memref<128x128xf32, #tpu.memory_space<vmem>>, vector<128x128xf32>,
    } else {
    }
    %c1_i32 = arith.constant 1 : i32
    %34 = arith.cmpi eq, %arg0, %c1_i32 : i32
    %35 = arith.extui %34 : i1 to i32
    %c0_i32_19 = arith.constant 0 : i32
    %36 = arith.cmpi ne, %35, %c0_i32_19 : i32
    scf.if %36 {
      %c0_20 = arith.constant 0 : index
      %c0_21 = arith.constant 0 : index
      %37 = vector.load %arg12[%c0_20, %c0_21] : memref<1x128xf32, #tpu.memory_space<vmem>>, vector<1x128xf32>
      %cst_22 = arith.constant 0.001953125 : f32
      %38 = vector.broadcast %cst_22 : f32 to vector<1x128xf32>
      %39 = arith.mulf %37, %38 : vector<1x128xf32>
      %c0_23 = arith.constant 0 : index
      %c0_24 = arith.constant 0 : index
      %40 = vector.load %arg13[%c0_23, %c0_24] : memref<1x128xf32, #tpu.memory_space<vmem>>, vector<1x128xf32>
      %cst_25 = arith.constant 0.001953125 : f32
      %41 = vector.broadcast %cst_25 : f32 to vector<1x128xf32>
      %42 = arith.mulf %40, %41 : vector<1x128xf32>
      %43 = arith.mulf %39, %39 : vector<1x128xf32>
      %44 = arith.subf %42, %43 : vector<1x128xf32>
      %cst_26 = arith.constant 9.99999974E-6 : f32
      %45 = vector.broadcast %cst_26 : f32 to vector<1x128xf32>
      %46 = arith.addf %44, %45 : vector<1x128xf32>
      %47 = math.rsqrt %46 : vector<1x128xf32>
      %c0_27 = arith.constant 0 : index
      %c0_28 = arith.constant 0 : index
      %48 = vector.load %arg8[%c0_27, %c0_28] : memref<1x128xf32, #tpu.memory_space<vmem>>, vector<1x128xf32>
      %49 = arith.mulf %48, %47 : vector<1x128xf32>
      %c0_29 = arith.constant 0 : index
      %c0_30 = arith.constant 0 : index
      %50 = vector.load %arg9[%c0_29, %c0_30] : memref<1x128xf32, #tpu.memory_space<vmem>>, vector<1x128xf32>
      %51 = arith.mulf %39, %49 : vector<1x128xf32>
      %52 = arith.subf %50, %51 : vector<1x128xf32>
      %53 = vector.broadcast %49 : vector<1x128xf32> to vector<128x128xf32>
      %54 = arith.mulf %25, %53 : vector<128x128xf32>
      %55 = vector.broadcast %52 : vector<1x128xf32> to vector<128x128xf32>
      %56 = arith.addf %54, %55 : vector<128x128xf32>
      %c0_31 = arith.constant 0 : index
      %c0_32 = arith.constant 0 : index
      %57 = vector.load %arg10[%c0_31, %c0_32] : memref<128x128xf32, #tpu.memory_space<vmem>>, vector<128x128xf32>
      %58 = arith.addf %56, %57 : vector<128x128xf32>
      %cst_33 = arith.constant 0.000000e+00 : f32
      %59 = vector.broadcast %cst_33 : f32 to vector<128x128xf32>
      %60 = arith.maximumf %58, %59 : vector<128x128xf32>
      %c0_34 = arith.constant 0 : index
      %c0_35 = arith.constant 0 : index
      %61 = vector.load %arg11[%c0_34, %c0_35] : memref<128x128xf32, #tpu.memory_space<vmem>>, vector<128x128xf32>
      tpu.vector_store %arg11[%c0_34, %c0_35], %60 {strides = array<i32>} : memref<128x128xf32, #tpu.memory_space<vmem>>, vector<128x128xf32>,
    } else {
    }
    return
  }
  func.func @transform_0(%arg0: i32, %arg1: i32) -> (i32, i32) {
    %c0_i32 = arith.constant 0 : i32
    %c0_i32_0 = arith.constant 0 : i32
    %c0_i32_1 = arith.constant 0 : i32
    return %c0_i32, %c0_i32_0 : i32, i32
  }
  func.func @transform_1(%arg0: i32, %arg1: i32) -> (i32, i32) {
    %c0_i32 = arith.constant 0 : i32
    %c0_i32_0 = arith.constant 0 : i32
    %c0_i32_1 = arith.constant 0 : i32
    return %c0_i32, %c0_i32_0 : i32, i32
  }
  func.func @transform_2(%arg0: i32, %arg1: i32) -> (i32, i32) {
    %c0_i32 = arith.constant 0 : i32
    %c0_i32_0 = arith.constant 0 : i32
    %c0_i32_1 = arith.constant 0 : i32
    return %c0_i32, %c0_i32_0 : i32, i32
  }
  func.func @transform_3(%arg0: i32, %arg1: i32) -> (i32, i32) {
    %c0_i32 = arith.constant 0 : i32
    %c0_i32_0 = arith.constant 0 : i32
    %c0_i32_1 = arith.constant 0 : i32
    return %c0_i32, %c0_i32_0 : i32, i32
  }
  func.func @transform_4(%arg0: i32, %arg1: i32) -> (i32, i32) {
    %c0_i32 = arith.constant 0 : i32
    %c0_i32_0 = arith.constant 0 : i32
    return %arg1, %c0_i32 : i32, i32
  }
  func.func @transform_5(%arg0: i32, %arg1: i32) -> (i32, i32) {
    %c0_i32 = arith.constant 0 : i32
    %c0_i32_0 = arith.constant 0 : i32
    %c0_i32_1 = arith.constant 0 : i32
    return %c0_i32, %c0_i32_0 : i32, i32
  }
  func.func @transform_6(%arg0: i32, %arg1: i32) -> (i32, i32) {
    %c0_i32 = arith.constant 0 : i32
    %c0_i32_0 = arith.constant 0 : i32
    %c0_i32_1 = arith.constant 0 : i32
    return %c0_i32, %c0_i32_0 : i32, i32
  }
  func.func @transform_7(%arg0: i32, %arg1: i32) -> (i32, i32) {
    %c0_i32 = arith.constant 0 : i32
    %c0_i32_0 = arith.constant 0 : i32
    %c0_i32_1 = arith.constant 0 : i32
    return %c0_i32, %c0_i32_0 : i32, i32
  }
  func.func @transform_8(%arg0: i32, %arg1: i32) -> (i32, i32) {
    %c0_i32 = arith.constant 0 : i32
    %c0_i32_0 = arith.constant 0 : i32
    return %arg1, %c0_i32 : i32, i32
  }
  func.func @transform_9(%arg0: i32, %arg1: i32) -> (i32, i32) {
    %c0_i32 = arith.constant 0 : i32
    %c0_i32_0 = arith.constant 0 : i32
    return %arg1, %c0_i32 : i32, i32
  }
}

</mosaic_0001>

<llo_original>
// kernel: bottleneck_forward.3
$region0: #{bottleneck_forward.3}
  #allocation0 [shape = 'u32[]', space=smem, size = 0x4, offset = 0x4, fixed_abs, tag = 'smem constant byte address 0x4 - core index']
  #allocation1 [shape = 'u32[144,128]{1,0:T(1,128)}', space=vmem, size = 0x12000, scoped, tag = 'internal scratch']
  %s0 = inlined_call_operand.vmem [shape: f32[512,128], index: 0, kind: input, shape index: {}]
  %s1 = inlined_call_operand.vmem [shape: bf16[128,128], index: 1, kind: input, shape index: {}]
  %s2 = inlined_call_operand.vmem [shape: f32[512,128], index: 2, kind: output, shape index: {0}]
  %s3 = inlined_call_operand.vmem [shape: f32[1,128], index: 3, kind: output, shape index: {1}]
  %s4 = inlined_call_operand.vmem [shape: f32[1,128], index: 4, kind: output, shape index: {2}]
  %5 = xla_tuple %s2, %s3, %s4
  %s6 = sld [smem:[#allocation0]]
  $region61: #{bottleneck_forward.3} parent=0
    _
  %s8 = ssub.s32 1, %s6
  %s9 = scalar_select 0, %s8, %s6
  loop: start=0, step=1, limit=6
  $region2: #{bottleneck_forward.3} parent=0 // loop_pre_header
    _
  $region3: #{bottleneck_forward.3} parent=0 // loop_header
    %s11 = sphi 0, %s15
    %p12 = scmp.ge.s32.totalorder %s11, 6
    %s21 = sphi 0, %s23
    %s24 = sphi 0, %s21
    %s25 = sphi 0, %s24
    %s41 = sphi 0, %s25
    %s45 = sphi 0, %s45
    %s47 = sphi 0, %s45
    %s48 = sphi 0, %s47
    %s62 = sphi 0, %s48
    %s68 = sphi 0, %s70
    %s71 = sphi 0, %s68
    %s72 = sphi 0, %s71
    %s88 = sphi 0, %s72
    %s92 = sphi 0, %s92
    %s94 = sphi 0, %s92
    %s95 = sphi 0, %s94
    %s109 = sphi 0, %s95
    %s113 = sphi 0, %s113
    %s115 = sphi 0, %s113
    %s116 = sphi 0, %s115
    %s130 = sphi 0, %s116
  $region4: #{bottleneck_forward.3} parent=0 // loop_header_branch
    %14 = sbr.rel (%p12) target = $region8
  $region5: #{bottleneck_forward.3} parent=0 // loop_body
    %s16 = ssub.s32 %s11, 1
    %s17 = ssub.s32 %s11, 2
    %s18 = sadd.s32 %s11, 1
    %s19 = ssub.s32 %s11, %s18
    %p20 = scmp.eq.s32.totalorder %s19, 0
    %s22 = sadd.s32 %s21, 1
    %s23 = scalar_select %p20, %s21, %s22
    %p26 = pneg %p20
    %p27 = scmp.eq.s32.totalorder %s11, 3
    %p28 = por %p26, %p27
    %p29 = scmp.ne.s32.totalorder %s21, %s24
    %p30 = scmp.eq.s32.totalorder %s11, 0
    %p31 = por %p29, %p30
    %p32 = scmp.ne.s32.totalorder %s21, %s24
    %p33 = scmp.eq.s32.totalorder %s16, 3
    %p34 = por %p32, %p33
    %p35 = scmp.ne.s32.totalorder %s24, %s25
    %p36 = scmp.eq.s32.totalorder %s16, 0
    %p37 = por %p35, %p36
    %p38 = scmp.ne.s32.totalorder %s24, %s25
    %p39 = scmp.eq.s32.totalorder %s17, 3
    %p40 = por %p38, %p39
    %p42 = scmp.ne.s32.totalorder %s25, %s41
    %p43 = scmp.eq.s32.totalorder %s17, 0
    %p44 = por %p42, %p43
    %s46 = sadd.s32 %s45, 1
    %p49 = scmp.eq.s32.totalorder %s11, 3
    %p50 = scmp.ne.s32.totalorder %s45, %s47
    %p51 = scmp.eq.s32.totalorder %s11, 0
    %p52 = por %p50, %p51
    %p53 = scmp.ne.s32.totalorder %s45, %s47
    %p54 = scmp.eq.s32.totalorder %s16, 3
    %p55 = por %p53, %p54
    %p56 = scmp.ne.s32.totalorder %s47, %s48
    %p57 = scmp.eq.s32.totalorder %s16, 0
    %p58 = por %p56, %p57
    %p59 = scmp.ne.s32.totalorder %s47, %s48
    %p60 = scmp.eq.s32.totalorder %s17, 3
    %p61 = por %p59, %p60
    %p63 = scmp.ne.s32.totalorder %s48, %s62
    %p64 = scmp.eq.s32.totalorder %s17, 0
    %p65 = por %p63, %p64
    %s66 = ssub.s32 %s11, %s18
    %p67 = scmp.eq.s32.totalorder %s66, 0
    %s69 = sadd.s32 %s68, 1
    %s70 = scalar_select %p67, %s68, %s69
    %p73 = pneg %p67
    %p74 = scmp.eq.s32.totalorder %s11, 3
    %p75 = por %p73, %p74
    %p76 = scmp.ne.s32.totalorder %s68, %s71
    %p77 = scmp.eq.s32.totalorder %s11, 0
    %p78 = por %p76, %p77
    %p79 = scmp.ne.s32.totalorder %s68, %s71
    %p80 = scmp.eq.s32.totalorder %s16, 3
    %p81 = por %p79, %p80
    %p82 = scmp.ne.s32.totalorder %s71, %s72
    %p83 = scmp.eq.s32.totalorder %s16, 0
    %p84 = por %p82, %p83
    %p85 = scmp.ne.s32.totalorder %s71, %s72
    %p86 = scmp.eq.s32.totalorder %s17, 3
    %p87 = por %p85, %p86
    %p89 = scmp.ne.s32.totalorder %s72, %s88
    %p90 = scmp.eq.s32.totalorder %s17, 0
    %p91 = por %p89, %p90
    %s93 = sadd.s32 %s92, 1
    %p96 = scmp.eq.s32.totalorder %s11, 3
    %p97 = scmp.ne.s32.totalorder %s92, %s94
    %p98 = scmp.eq.s32.totalorder %s11, 0
    %p99 = por %p97, %p98
    %p100 = scmp.ne.s32.totalorder %s92, %s94
    %p101 = scmp.eq.s32.totalorder %s16, 3
    %p102 = por %p100, %p101
    %p103 = scmp.ne.s32.totalorder %s94, %s95
    %p104 = scmp.eq.s32.totalorder %s16, 0
    %p105 = por %p103, %p104
    %p106 = scmp.ne.s32.totalorder %s94, %s95
    %p107 = scmp.eq.s32.totalorder %s17, 3
    %p108 = por %p106, %p107
    %p110 = scmp.ne.s32.totalorder %s95, %s109
    %p111 = scmp.eq.s32.totalorder %s17, 0
    %p112 = por %p110, %p111
    %s114 = sadd.s32 %s113, 1
    %p117 = scmp.eq.s32.totalorder %s11, 3
    %p118 = scmp.ne.s32.totalorder %s113, %s115
    %p119 = scmp.eq.s32.totalorder %s11, 0
    %p120 = por %p118, %p119
    %p121 = scmp.ne.s32.totalorder %s113, %s115
    %p122 = scmp.eq.s32.totalorder %s16, 3
    %p123 = por %p121, %p122
    %p124 = scmp.ne.s32.totalorder %s115, %s116
    %p125 = scmp.eq.s32.totalorder %s16, 0
    %p126 = por %p124, %p125
    %p127 = scmp.ne.s32.totalorder %s115, %s116
    %p128 = scmp.eq.s32.totalorder %s17, 3
    %p129 = por %p127, %p128
    %p131 = scmp.ne.s32.totalorder %s116, %s130
    %p132 = scmp.eq.s32.totalorder %s17, 0
    %p133 = por %p131, %p132
    %p134 = scmp.le.s32.totalorder 1, %s11
    %p135 = scmp.lt.s32.totalorder %s11, 5
    %p136 = pnand %p134, %p135
    %p137 = pneg %p136
    // Predicated region
    $region9: #{bottleneck_forward.3} parent=5 // pred_check
      _
    $region10: #{bottleneck_forward.3} parent=5 // pred_check_branch
      %139 = sbr.rel (%p136) target = $region12
    $region11: #{bottleneck_forward.3} parent=5 // pred_region
      %s140 = ssub.s32 %s11, 1
      // Predicated region
      $region13: #{bottleneck_forward.3} parent=11 // pred_check
        %p141 = pneg %p58
      $region14: #{bottleneck_forward.3} parent=11 // pred_check_branch
        %143 = sbr.rel (%p141) target = $region16
      $region15: #{bottleneck_forward.3} parent=11 // pred_region
        _
      $region16: #{bottleneck_forward.3} parent=11 // pred_fallthru
        _
    $region12: #{bottleneck_forward.3} parent=5 // pred_fallthru
      _
    %p144 = scmp.lt.s32.totalorder %s11, 4
    // Predicated region
    $region17: #{bottleneck_forward.3} parent=5 // pred_check
      %p145 = pneg %p144
    $region18: #{bottleneck_forward.3} parent=5 // pred_check_branch
      %147 = sbr.rel (%p145) target = $region20
    $region19: #{bottleneck_forward.3} parent=5 // pred_region
      // Predicated region
      $region21: #{bottleneck_forward.3} parent=19 // pred_check
        %p148 = pneg %p31
      $region22: #{bottleneck_forward.3} parent=19 // pred_check_branch
        %150 = sbr.rel (%p148) target = $region24
      $region23: #{bottleneck_forward.3} parent=19 // pred_region
        %s151 = smul.u32 16, %s11
        %p152 = scmp.lt.s32.totalorder %s151, 63
        %s153 = scalar_select %p152, %s151, 63
        %s154 = smul.addr %s153, 8
        %s155 = scalar_lea.vmem %s0, %s154
        %s156 = smul.u32 16, %s11
      $region24: #{bottleneck_forward.3} parent=19 // pred_fallthru
        _
    $region20: #{bottleneck_forward.3} parent=5 // pred_fallthru
      _
    %p157 = scmp.le.s32.totalorder 1, %s11
    %p158 = scmp.lt.s32.totalorder %s11, 5
    %p159 = pnand %p157, %p158
    %p160 = pneg %p159
    // Predicated region
    $region25: #{bottleneck_forward.3} parent=5 // pred_check
      _
    $region26: #{bottleneck_forward.3} parent=5 // pred_check_branch
      %162 = sbr.rel (%p159) target = $region28
    $region27: #{bottleneck_forward.3} parent=5 // pred_region
      %s163 = ssub.s32 %s11, 1
      %s164 = smul.u32 16, %s16
      %p165 = scmp.lt.s32.totalorder %s164, 63
      %s166 = scalar_select %p165, %s164, 63
      %s167 = smul.addr %s166, 8
      %s168 = scalar_lea.vmem %s0, %s167
      %p169 = pneg %p37
      %p170 = pneg %p34
      %p171 = pneg %p58
      %p172 = pneg %p55
      %p173 = pneg %p84
      %p174 = pneg %p81
      %s175 = smul.u32 16, %s16
      %p176 = scmp.lt.s32.totalorder %s175, 63
      %s177 = scalar_select %p176, %s175, 63
      %s178 = smul.addr %s177, 8
      %s179 = scalar_lea.vmem %s2, %s178
      %p180 = pneg %p105
      %p181 = pneg %p102
      %p182 = pneg %p126
      %p183 = pneg %p123
      %s184 = smul.u32 16, %s16
      %p185 = scmp.lt.s32.totalorder %s184, 63
      %s186 = scalar_select %p185, %s184, 63
      %s187 = smul.addr %s186, 8
      %s188 = scalar_lea.vmem %s0, %s187
      %s189 = smul.u32 16, %s16
      %s190 = smul.u32 16, %s16
      %p191 = scmp.lt.s32.totalorder %s190, 63
      %s192 = scalar_select %p191, %s190, 63
      %s193 = smul.addr %s192, 8
      %s194 = scalar_lea.vmem %s2, %s193
      %s195 = smul.u32 16, %s16
      %v197 = vld [vmem:[%s188] sm:$0xff]
      %v198 = vld [vmem:[%s188 + $0x8] sm:$0xff]
      %v199 = vld [vmem:[%s188 + $0x10] sm:$0xff]
      %v200 = vld [vmem:[%s188 + $0x18] sm:$0xff]
      %v201 = vld [vmem:[%s188 + $0x20] sm:$0xff]
      %v202 = vld [vmem:[%s188 + $0x28] sm:$0xff]
      %v203 = vld [vmem:[%s188 + $0x30] sm:$0xff]
      %v204 = vld [vmem:[%s188 + $0x38] sm:$0xff]
      %v205 = vld [vmem:[%s188 + $0x40] sm:$0xff]
      %v206 = vld [vmem:[%s188 + $0x48] sm:$0xff]
      %v207 = vld [vmem:[%s188 + $0x50] sm:$0xff]
      %v208 = vld [vmem:[%s188 + $0x58] sm:$0xff]
      %v209 = vld [vmem:[%s188 + $0x60] sm:$0xff]
      %v210 = vld [vmem:[%s188 + $0x68] sm:$0xff]
      %v211 = vld [vmem:[%s188 + $0x70] sm:$0xff]
      %v212 = vld [vmem:[%s188 + $0x78] sm:$0xff]
      %v213 = vpack.c.bf16 %v198, %v197
      %v214 = vpack.c.bf16 %v200, %v199
      %v215 = vpack.c.bf16 %v202, %v201
      %v216 = vpack.c.bf16 %v204, %v203
      %v217 = vpack.c.bf16 %v206, %v205
      %v218 = vpack.c.bf16 %v208, %v207
      %v219 = vpack.c.bf16 %v210, %v209
      %v220 = vpack.c.bf16 %v212, %v211
      %v221 = vld [vmem:[%s1] sm:$0xf]
      %v222 = vld [vmem:[%s1 + $0x4] sm:$0xf]
      %v223 = vld [vmem:[%s1 + $0x8] sm:$0xf]
      %v224 = vld [vmem:[%s1 + $0xc] sm:$0xf]
      %v225 = vld [vmem:[%s1 + $0x10] sm:$0xf]
      %v226 = vld [vmem:[%s1 + $0x14] sm:$0xf]
      %v227 = vld [vmem:[%s1 + $0x18] sm:$0xf]
      %v228 = vld [vmem:[%s1 + $0x1c] sm:$0xf]
      %v229 = vld [vmem:[%s1 + $0x20] sm:$0xf]
      %v230 = vld [vmem:[%s1 + $0x24] sm:$0xf]
      %v231 = vld [vmem:[%s1 + $0x28] sm:$0xf]
      %v232 = vld [vmem:[%s1 + $0x2c] sm:$0xf]
      %v233 = vld [vmem:[%s1 + $0x30] sm:$0xf]
      %v234 = vld [vmem:[%s1 + $0x34] sm:$0xf]
      %v235 = vld [vmem:[%s1 + $0x38] sm:$0xf]
      %v236 = vld [vmem:[%s1 + $0x3c] sm:$0xf]
      %v253 = vunpack.c.l.b16 %v221
      %v254 = vunpack.c.l.b16 %v222
      %v255 = vunpack.c.l.b16 %v223
      %v256 = vunpack.c.l.b16 %v224
      %v257 = vunpack.c.l.b16 %v225
      %v258 = vunpack.c.l.b16 %v226
      %v259 = vunpack.c.l.b16 %v227
      %v260 = vunpack.c.l.b16 %v228
      %v261 = vunpack.c.l.b16 %v229
      %v262 = vunpack.c.l.b16 %v230
      %v263 = vunpack.c.l.b16 %v231
      %v264 = vunpack.c.l.b16 %v232
      %v265 = vunpack.c.l.b16 %v233
      %v266 = vunpack.c.l.b16 %v234
      %v267 = vunpack.c.l.b16 %v235
      %v268 = vunpack.c.l.b16 %v236
      %v269 = vpack.c.b16 %v254, %v253
      %v270 = vpack.c.b16 %v256, %v255
      %v271 = vpack.c.b16 %v258, %v257
      %v272 = vpack.c.b16 %v260, %v259
      %v273 = vpack.c.b16 %v262, %v261
      %v274 = vpack.c.b16 %v264, %v263
      %v275 = vpack.c.b16 %v266, %v265
      %v276 = vpack.c.b16 %v268, %v267
      %285 = vmatprep.subr.bf16.mxu0 0
      %286 = vmatpush1.bf16.msra.mxu0 %v276
      %287 = vmatprep.subr.bf16.mxu0 0
      %288 = vmatpush1.bf16.msra.mxu0 %v275
      %289 = vmatprep.subr.bf16.mxu0 0
      %290 = vmatpush1.bf16.msra.mxu0 %v274
      %291 = vmatprep.subr.bf16.mxu0 0
      %292 = vmatpush1.bf16.msra.mxu0 %v273
      %293 = vmatprep.subr.bf16.mxu0 0
      %294 = vmatpush1.bf16.msra.mxu0 %v272
      %295 = vmatprep.subr.bf16.mxu0 0
      %296 = vmatpush1.bf16.msra.mxu0 %v271
      %297 = vmatprep.subr.bf16.mxu0 0
      %298 = vmatpush1.bf16.msra.mxu0 %v270
      %299 = vmatprep.subr.bf16.mxu0 0
      %300 = vmatpush1.bf16.msra.mxu0 %v269
      %301 = vmatprep.subr.bf16.mxu0 0
      %302 = vmatpush2.bf16.msra.mxu0 0
      %303 = vmatprep.subr.bf16.mxu0 0
      %304 = vmatpush2.bf16.msra.mxu0 0
      %305 = vmatprep.subr.bf16.mxu0 0
      %306 = vmatpush2.bf16.msra.mxu0 0
      %307 = vmatprep.subr.bf16.mxu0 0
      %308 = vmatpush2.bf16.msra.mxu0 0
      %309 = vmatprep.subr.bf16.mxu0 0
      %310 = vmatpush2.bf16.msra.mxu0 0
      %311 = vmatprep.subr.bf16.mxu0 0
      %312 = vmatpush2.bf16.msra.mxu0 0
      %313 = vmatprep.subr.bf16.mxu0 0
      %314 = vmatpush2.bf16.msra.mxu0 0
      %315 = vmatprep.subr.bf16.mxu0 0
      %316 = vmatpush2.bf16.msra.mxu0 0
      %317 = vmatprep.mubr.bf16.mxu0 0
      %318 = vmatmul.mubr.bf16.gmra.mxu0 %v213
      %v319 = vpop.f32.mrf.mxu0
      %v320 = vadd.f32 0.0, %v319
      %v321 = vpop.f32.mrf.mxu0
      %v322 = vpop.f32.mrf.mxu0
      %v323 = vadd.f32 0.0, %v322
      %v324 = vpop.f32.mrf.mxu0
      %325 = vmatprep.mubr.bf16.mxu0 0
      %326 = vmatmul.mubr.bf16.gmra.mxu0 %v214
      %v327 = vpop.f32.mrf.mxu0
      %v328 = vadd.f32 0.0, %v327
      %v329 = vpop.f32.mrf.mxu0
      %v330 = vpop.f32.mrf.mxu0
      %v331 = vadd.f32 0.0, %v330
      %v332 = vpop.f32.mrf.mxu0
      %333 = vmatprep.mubr.bf16.mxu0 0
      %334 = vmatmul.mubr.bf16.gmra.mxu0 %v215
      %v335 = vpop.f32.mrf.mxu0
      %v336 = vadd.f32 0.0, %v335
      %v337 = vpop.f32.mrf.mxu0
      %v338 = vpop.f32.mrf.mxu0
      %v339 = vadd.f32 0.0, %v338
      %v340 = vpop.f32.mrf.mxu0
      %341 = vmatprep.mubr.bf16.mxu0 0
      %342 = vmatmul.mubr.bf16.gmra.mxu0 %v216
      %v343 = vpop.f32.mrf.mxu0
      %v344 = vadd.f32 0.0, %v343
      %v345 = vpop.f32.mrf.mxu0
      %v346 = vpop.f32.mrf.mxu0
      %v347 = vadd.f32 0.0, %v346
      %v348 = vpop.f32.mrf.mxu0
      %349 = vmatprep.mubr.bf16.mxu0 0
      %350 = vmatmul.mubr.bf16.gmra.mxu0 %v217
      %v351 = vpop.f32.mrf.mxu0
      %v352 = vadd.f32 0.0, %v351
      %v353 = vpop.f32.mrf.mxu0
      %v354 = vpop.f32.mrf.mxu0
      %v355 = vadd.f32 0.0, %v354
      %v356 = vpop.f32.mrf.mxu0
      %357 = vmatprep.mubr.bf16.mxu0 0
      %358 = vmatmul.mubr.bf16.gmra.mxu0 %v218
      %v359 = vpop.f32.mrf.mxu0
      %v360 = vadd.f32 0.0, %v359
      %v361 = vpop.f32.mrf.mxu0
      %v362 = vpop.f32.mrf.mxu0
      %v363 = vadd.f32 0.0, %v362
      %v364 = vpop.f32.mrf.mxu0
      %365 = vmatprep.mubr.bf16.mxu0 0
      %366 = vmatmul.mubr.bf16.gmra.mxu0 %v219
      %v367 = vpop.f32.mrf.mxu0
      %v368 = vadd.f32 0.0, %v367
      %v369 = vpop.f32.mrf.mxu0
      %v370 = vpop.f32.mrf.mxu0
      %v371 = vadd.f32 0.0, %v370
      %v372 = vpop.f32.mrf.mxu0
      %373 = vmatprep.mubr.bf16.mxu0 0
      %374 = vmatmul.mubr.bf16.gmra.mxu0 %v220
      %v375 = vpop.f32.mrf.mxu0
      %v376 = vadd.f32 0.0, %v375
      %v377 = vpop.f32.mrf.mxu0
      %v378 = vpop.f32.mrf.mxu0
      %v379 = vadd.f32 0.0, %v378
      %v380 = vpop.f32.mrf.mxu0
      %381 = vdwg.mxu0
      %382 = vst [vmem:[%s194] sm:$0xff] %v320
      %383 = vst [vmem:[%s194 + $0x8] sm:$0xff] %v323
      %384 = vst [vmem:[%s194 + $0x10] sm:$0xff] %v328
      %385 = vst [vmem:[%s194 + $0x18] sm:$0xff] %v331
      %386 = vst [vmem:[%s194 + $0x20] sm:$0xff] %v336
      %387 = vst [vmem:[%s194 + $0x28] sm:$0xff] %v339
      %388 = vst [vmem:[%s194 + $0x30] sm:$0xff] %v344
      %389 = vst [vmem:[%s194 + $0x38] sm:$0xff] %v347
      %390 = vst [vmem:[%s194 + $0x40] sm:$0xff] %v352
      %391 = vst [vmem:[%s194 + $0x48] sm:$0xff] %v355
      %392 = vst [vmem:[%s194 + $0x50] sm:$0xff] %v360
      %393 = vst [vmem:[%s194 + $0x58] sm:$0xff] %v363
      %394 = vst [vmem:[%s194 + $0x60] sm:$0xff] %v368
      %395 = vst [vmem:[%s194 + $0x68] sm:$0xff] %v371
      %396 = vst [vmem:[%s194 + $0x70] sm:$0xff] %v376
      %397 = vst [vmem:[%s194 + $0x78] sm:$0xff] %v379
      %398 = vmatprep.subr.mxu0 0.0
      %399 = vmatpush1.msra.mxu0 %v379
      %400 = vmatprep.subr.mxu0 0.0
      %401 = vmatpush1.msra.mxu0 %v376
      %402 = vmatprep.subr.mxu0 0.0
      %403 = vmatpush1.msra.mxu0 %v371
      %404 = vmatprep.subr.mxu0 0.0
      %405 = vmatpush1.msra.mxu0 %v368
      %406 = vmatprep.subr.mxu0 0.0
      %407 = vmatpush1.msra.mxu0 %v363
      %408 = vmatprep.subr.mxu0 0.0
      %409 = vmatpush1.msra.mxu0 %v360
      %410 = vmatprep.subr.mxu0 0.0
      %411 = vmatpush1.msra.mxu0 %v355
      %412 = vmatprep.subr.mxu0 0.0
      %413 = vmatpush1.msra.mxu0 %v352
      %414 = vmatprep.subr.mxu0 0.0
      %415 = vmatpush1.msra.mxu0 %v347
      %416 = vmatprep.subr.mxu0 0.0
      %417 = vmatpush1.msra.mxu0 %v344
      %418 = vmatprep.subr.mxu0 0.0
      %419 = vmatpush1.msra.mxu0 %v339
      %420 = vmatprep.subr.mxu0 0.0
      %421 = vmatpush1.msra.mxu0 %v336
      %422 = vmatprep.subr.mxu0 0.0
      %423 = vmatpush1.msra.mxu0 %v331
      %424 = vmatprep.subr.mxu0 0.0
      %425 = vmatpush1.msra.mxu0 %v328
      %426 = vmatprep.subr.mxu0 0.0
      %427 = vmatpush1.msra.mxu0 %v323
      %428 = vmatprep.subr.mxu0 0.0
      %429 = vmatpush1.msra.mxu0 %v320
      %430 = vmatprep.subr.mxu0 0.0
      %431 = vmatpush2.msra.mxu0 0.0
      %432 = vmatprep.subr.mxu0 0.0
      %433 = vmatpush2.msra.mxu0 0.0
      %434 = vmatprep.subr.mxu0 0.0
      %435 = vmatpush2.msra.mxu0 0.0
      %436 = vmatprep.subr.mxu0 0.0
      %437 = vmatpush2.msra.mxu0 0.0
      %438 = vmatprep.subr.mxu0 0.0
      %439 = vmatpush2.msra.mxu0 0.0
      %440 = vmatprep.subr.mxu0 0.0
      %441 = vmatpush2.msra.mxu0 0.0
      %442 = vmatprep.subr.mxu0 0.0
      %443 = vmatpush2.msra.mxu0 0.0
      %444 = vmatprep.subr.mxu0 0.0
      %445 = vmatpush2.msra.mxu0 0.0
      %446 = vmatprep.subr.mxu0 0.0
      %447 = vmatpush2.msra.mxu0 0.0
      %448 = vmatprep.subr.mxu0 0.0
      %449 = vmatpush2.msra.mxu0 0.0
      %450 = vmatprep.subr.mxu0 0.0
      %451 = vmatpush2.msra.mxu0 0.0
      %452 = vmatprep.subr.mxu0 0.0
      %453 = vmatpush2.msra.mxu0 0.0
      %454 = vmatprep.subr.mxu0 0.0
      %455 = vmatpush2.msra.mxu0 0.0
      %456 = vmatprep.subr.mxu0 0.0
      %457 = vmatpush2.msra.mxu0 0.0
      %458 = vmatprep.subr.mxu0 0.0
      %459 = vmatpush2.msra.mxu0 0.0
      %460 = vmatprep.subr.mxu0 0.0
      %461 = vmatpush2.msra.mxu0 0.0
      %462 = vmatprep.mubr.f32.mxu0 0.0
      %463 = vmatmul.mubr.f32.gmra.mxu0 1.0
      %v464 = vpop.f32.mrf.mxu0
      %v465 = vadd.f32 0.0, %v464
      %v466 = vpop.f32.mrf.mxu0
      %467 = vdwg.mxu0
      %v468 = vmul.f32 %v320, %v320
      %v469 = vmul.f32 %v323, %v323
      %v470 = vmul.f32 %v328, %v328
      %v471 = vmul.f32 %v331, %v331
      %v472 = vmul.f32 %v336, %v336
      %v473 = vmul.f32 %v339, %v339
      %v474 = vmul.f32 %v344, %v344
      %v475 = vmul.f32 %v347, %v347
      %v476 = vmul.f32 %v352, %v352
      %v477 = vmul.f32 %v355, %v355
      %v478 = vmul.f32 %v360, %v360
      %v479 = vmul.f32 %v363, %v363
      %v480 = vmul.f32 %v368, %v368
      %v481 = vmul.f32 %v371, %v371
      %v482 = vmul.f32 %v376, %v376
      %v483 = vmul.f32 %v379, %v379
      %484 = vmatprep.subr.mxu0 0.0
      %485 = vmatpush1.msra.mxu0 %v483
      %486 = vmatprep.subr.mxu0 0.0
      %487 = vmatpush1.msra.mxu0 %v482
      %488 = vmatprep.subr.mxu0 0.0
      %489 = vmatpush1.msra.mxu0 %v481
      %490 = vmatprep.subr.mxu0 0.0
      %491 = vmatpush1.msra.mxu0 %v480
      %492 = vmatprep.subr.mxu0 0.0
      %493 = vmatpush1.msra.mxu0 %v479
      %494 = vmatprep.subr.mxu0 0.0
      %495 = vmatpush1.msra.mxu0 %v478
      %496 = vmatprep.subr.mxu0 0.0
      %497 = vmatpush1.msra.mxu0 %v477
      %498 = vmatprep.subr.mxu0 0.0
      %499 = vmatpush1.msra.mxu0 %v476
      %500 = vmatprep.subr.mxu0 0.0
      %501 = vmatpush1.msra.mxu0 %v475
      %502 = vmatprep.subr.mxu0 0.0
      %503 = vmatpush1.msra.mxu0 %v474
      %504 = vmatprep.subr.mxu0 0.0
      %505 = vmatpush1.msra.mxu0 %v473
      %506 = vmatprep.subr.mxu0 0.0
      %507 = vmatpush1.msra.mxu0 %v472
      %508 = vmatprep.subr.mxu0 0.0
      %509 = vmatpush1.msra.mxu0 %v471
      %510 = vmatprep.subr.mxu0 0.0
      %511 = vmatpush1.msra.mxu0 %v470
      %512 = vmatprep.subr.mxu0 0.0
      %513 = vmatpush1.msra.mxu0 %v469
      %514 = vmatprep.subr.mxu0 0.0
      %515 = vmatpush1.msra.mxu0 %v468
      %516 = vmatprep.subr.mxu0 0.0
      %517 = vmatpush2.msra.mxu0 0.0
      %518 = vmatprep.subr.mxu0 0.0
      %519 = vmatpush2.msra.mxu0 0.0
      %520 = vmatprep.subr.mxu0 0.0
      %521 = vmatpush2.msra.mxu0 0.0
      %522 = vmatprep.subr.mxu0 0.0
      %523 = vmatpush2.msra.mxu0 0.0
      %524 = vmatprep.subr.mxu0 0.0
      %525 = vmatpush2.msra.mxu0 0.0
      %526 = vmatprep.subr.mxu0 0.0
      %527 = vmatpush2.msra.mxu0 0.0
      %528 = vmatprep.subr.mxu0 0.0
      %529 = vmatpush2.msra.mxu0 0.0
      %530 = vmatprep.subr.mxu0 0.0
      %531 = vmatpush2.msra.mxu0 0.0
      %532 = vmatprep.subr.mxu0 0.0
      %533 = vmatpush2.msra.mxu0 0.0
      %534 = vmatprep.subr.mxu0 0.0
      %535 = vmatpush2.msra.mxu0 0.0
      %536 = vmatprep.subr.mxu0 0.0
      %537 = vmatpush2.msra.mxu0 0.0
      %538 = vmatprep.subr.mxu0 0.0
      %539 = vmatpush2.msra.mxu0 0.0
      %540 = vmatprep.subr.mxu0 0.0
      %541 = vmatpush2.msra.mxu0 0.0
      %542 = vmatprep.subr.mxu0 0.0
      %543 = vmatpush2.msra.mxu0 0.0
      %544 = vmatprep.subr.mxu0 0.0
      %545 = vmatpush2.msra.mxu0 0.0
      %546 = vmatprep.subr.mxu0 0.0
      %547 = vmatpush2.msra.mxu0 0.0
      %548 = vmatprep.mubr.f32.mxu0 0.0
      %549 = vmatmul.mubr.f32.gmra.mxu0 1.0
      %v550 = vpop.f32.mrf.mxu0
      %v551 = vadd.f32 0.0, %v550
      %v552 = vpop.f32.mrf.mxu0
      %553 = vdwg.mxu0
      %p554 = scmp.eq.s32.totalorder %s16, 0
      // Predicated region
      $region29: #{bottleneck_forward.3} parent=27 // pred_check
        %p555 = pneg %p554
      $region30: #{bottleneck_forward.3} parent=27 // pred_check_branch
        %557 = sbr.rel (%p555) target = $region32
      $region31: #{bottleneck_forward.3} parent=27 // pred_region
        %558 = vst [vmem:[%s3] sm:$0x1] 0.0
        %559 = vst [vmem:[%s4] sm:$0x1] 0.0
      $region32: #{bottleneck_forward.3} parent=27 // pred_fallthru
        _
      %v560 = vld [vmem:[%s3] sm:$0x1]
      %v561 = vadd.f32 %v560, %v465
      %562 = vst [vmem:[%s3] sm:$0x1] %v561
      %v563 = vld [vmem:[%s4] sm:$0x1]
      %v564 = vadd.f32 %v563, %v551
      %565 = vst [vmem:[%s4] sm:$0x1] %v564
      %s566 = smul.u32 16, %s16
      %p567 = scmp.lt.s32.totalorder %s566, 63
      %s568 = scalar_select %p567, %s566, 63
      %s569 = smul.addr %s568, 8
      %s570 = scalar_lea.vmem %s2, %s569
      // Predicated region
      $region33: #{bottleneck_forward.3} parent=27 // pred_check
        %p571 = pneg %p81
      $region34: #{bottleneck_forward.3} parent=27 // pred_check_branch
        %573 = sbr.rel (%p571) target = $region36
      $region35: #{bottleneck_forward.3} parent=27 // pred_region
        %s574 = smul.u32 16, %s16
      $region36: #{bottleneck_forward.3} parent=27 // pred_fallthru
        _
      // Predicated region
      $region37: #{bottleneck_forward.3} parent=27 // pred_check
        %p575 = pneg %p102
      $region38: #{bottleneck_forward.3} parent=27 // pred_check_branch
        %577 = sbr.rel (%p575) target = $region40
      $region39: #{bottleneck_forward.3} parent=27 // pred_region
        _
      $region40: #{bottleneck_forward.3} parent=27 // pred_fallthru
        _
      // Predicated region
      $region41: #{bottleneck_forward.3} parent=27 // pred_check
        %p578 = pneg %p123
      $region42: #{bottleneck_forward.3} parent=27 // pred_check_branch
        %580 = sbr.rel (%p578) target = $region44
      $region43: #{bottleneck_forward.3} parent=27 // pred_region
        _
      $region44: #{bottleneck_forward.3} parent=27 // pred_fallthru
        _
      // Predicated region
      $region45: #{bottleneck_forward.3} parent=27 // pred_check
        %p581 = pneg %p102
      $region46: #{bottleneck_forward.3} parent=27 // pred_check_branch
        %583 = sbr.rel (%p581) target = $region48
      $region47: #{bottleneck_forward.3} parent=27 // pred_region
        _
      $region48: #{bottleneck_forward.3} parent=27 // pred_fallthru
        _
      // Predicated region
      $region49: #{bottleneck_forward.3} parent=27 // pred_check
        %p584 = pneg %p123
      $region50: #{bottleneck_forward.3} parent=27 // pred_check_branch
        %586 = sbr.rel (%p584) target = $region52
      $region51: #{bottleneck_forward.3} parent=27 // pred_region
        _
      $region52: #{bottleneck_forward.3} parent=27 // pred_fallthru
        _
    $region28: #{bottleneck_forward.3} parent=5 // pred_fallthru
      _
    %p587 = scmp.le.s32.totalorder 2, %s11
    // Predicated region
    $region53: #{bottleneck_forward.3} parent=5 // pred_check
      %p588 = pneg %p587
    $region54: #{bottleneck_forward.3} parent=5 // pred_check_branch
      %590 = sbr.rel (%p588) target = $region56
    $region55: #{bottleneck_forward.3} parent=5 // pred_region
      %s591 = ssub.s32 %s11, 2
      // Predicated region
      $region57: #{bottleneck_forward.3} parent=55 // pred_check
        %p592 = pneg %p87
      $region58: #{bottleneck_forward.3} parent=55 // pred_check_branch
        %594 = sbr.rel (%p592) target = $region60
      $region59: #{bottleneck_forward.3} parent=55 // pred_region
        %s595 = smul.u32 16, %s17
        %p596 = scmp.lt.s32.totalorder %s595, 63
        %s597 = scalar_select %p596, %s595, 63
        %s598 = smul.addr %s597, 8
        %s599 = scalar_lea.vmem %s2, %s598
      $region60: #{bottleneck_forward.3} parent=55 // pred_fallthru
        _
    $region56: #{bottleneck_forward.3} parent=5 // pred_fallthru
      _
  $region6: #{bottleneck_forward.3} parent=0 // loop_footer
    %s15 = sadd.s32 1, %s11
  $region7: #{bottleneck_forward.3} parent=0 // loop_footer_branch
    %10 = sbr.rel target = $region3
  $region8: #{bottleneck_forward.3} parent=0 // loop_exit
    _

// kernel: bottleneck_forward.5
$region0: #{bottleneck_forward.5}
  #allocation0 [shape = 'u32[]', space=smem, size = 0x4, offset = 0x4, fixed_abs, tag = 'smem constant byte address 0x4 - core index']
  #allocation1 [shape = 'u32[144,128]{1,0:T(1,128)}', space=vmem, size = 0x12000, scoped, tag = 'internal scratch']
  #allocation2 [shape = 'f32[1,128]{1,0:T(1,128)}', space=vmem, size = 0x200, scoped, tag = 'scratch operand']
  #allocation3 [shape = 'f32[1,128]{1,0:T(1,128)}', space=vmem, size = 0x200, scoped, tag = 'scratch operand']
  %s0 = inlined_call_operand.vmem [shape: f32[1,128], index: 0, kind: input, shape index: {}]
  %s1 = inlined_call_operand.vmem [shape: f32[1,128], index: 1, kind: input, shape index: {}]
  %s2 = inlined_call_operand.vmem [shape: f32[1,128], index: 2, kind: input, shape index: {}]
  %s3 = inlined_call_operand.vmem [shape: f32[1,128], index: 3, kind: input, shape index: {}]
  %s4 = inlined_call_operand.vmem [shape: f32[512,128], index: 4, kind: input, shape index: {}]
  %s5 = inlined_call_operand.vmem [shape: bf16[128,128], index: 5, kind: input, shape index: {}]
  %s6 = inlined_call_operand.vmem [shape: f32[1,128], index: 6, kind: input, shape index: {}]
  %s7 = inlined_call_operand.vmem [shape: f32[1,128], index: 7, kind: input, shape index: {}]
  %s8 = inlined_call_operand.vmem [shape: f32[512,128], index: 8, kind: input, shape index: {}]
  %s9 = inlined_call_operand.vmem [shape: f32[512,128], index: 9, kind: output, shape index: {}]
  %s10 = sld [smem:[#allocation0]]
  $region81: #{bottleneck_forward.5} parent=0
    _
  %s12 = ssub.s32 1, %s10
  %s13 = scalar_select 0, %s12, %s10
  loop: start=0, step=1, limit=10
  $region2: #{bottleneck_forward.5} parent=0 // loop_pre_header
    _
  $region3: #{bottleneck_forward.5} parent=0 // loop_header
    %s15 = sphi 0, %s19
    %p16 = scmp.ge.s32.totalorder %s15, 10
    %s22 = sphi 0, %s34
    %s23 = sphi 0, %s30
    %s24 = sphi 0, %s22
    %s25 = sphi 0, %s23
    %s26 = sphi 0, %s24
    %s27 = sphi 0, %s25
    %s35 = sphi 0, %s35
    %s37 = sphi 0, %s35
    %s38 = sphi 0, %s37
    %s52 = sphi 0, %s38
    %s56 = sphi 0, %s56
    %s58 = sphi 0, %s56
    %s59 = sphi 0, %s58
    %s73 = sphi 0, %s59
    %s77 = sphi 0, %s77
    %s79 = sphi 0, %s77
    %s80 = sphi 0, %s79
    %s94 = sphi 0, %s80
    %s98 = sphi 0, %s98
    %s100 = sphi 0, %s98
    %s101 = sphi 0, %s100
    %s115 = sphi 0, %s101
    %s121 = sphi 0, %s123
    %s124 = sphi 0, %s121
    %s125 = sphi 0, %s124
    %s141 = sphi 0, %s125
    %s145 = sphi 0, %s145
    %s147 = sphi 0, %s145
    %s148 = sphi 0, %s147
    %s162 = sphi 0, %s148
    %s166 = sphi 0, %s166
    %s168 = sphi 0, %s166
    %s169 = sphi 0, %s168
    %s183 = sphi 0, %s169
    %s187 = sphi 0, %s187
    %s189 = sphi 0, %s187
    %s190 = sphi 0, %s189
    %s204 = sphi 0, %s190
    %s210 = sphi 0, %s212
    %s213 = sphi 0, %s210
    %s214 = sphi 0, %s213
    %s230 = sphi 0, %s214
    %s236 = sphi 0, %s238
    %s239 = sphi 0, %s236
    %s240 = sphi 0, %s239
    %s256 = sphi 0, %s240
  $region4: #{bottleneck_forward.5} parent=0 // loop_header_branch
    %18 = sbr.rel (%p16) target = $region8
  $region5: #{bottleneck_forward.5} parent=0 // loop_body
    %s20 = ssub.s32 %s15, 1
    %s21 = ssub.s32 %s15, 2
    %s28 = sadd.s32 1, %s23
    %p29 = scmp.ge.s32.totalorder %s28, 4
    %s30 = scalar_select %p29, 0, %s28
    %s31 = sadd.s32 1, %s22
    %s32 = scalar_select %p29, %s31, %s22
    %p33 = scmp.ge.s32.totalorder %s32, 2
    %s34 = scalar_select %p33, 0, %s32
    %s36 = sadd.s32 %s35, 1
    %p39 = scmp.eq.s32.totalorder %s15, 7
    %p40 = scmp.ne.s32.totalorder %s35, %s37
    %p41 = scmp.eq.s32.totalorder %s15, 0
    %p42 = por %p40, %p41
    %p43 = scmp.ne.s32.totalorder %s35, %s37
    %p44 = scmp.eq.s32.totalorder %s20, 7
    %p45 = por %p43, %p44
    %p46 = scmp.ne.s32.totalorder %s37, %s38
    %p47 = scmp.eq.s32.totalorder %s20, 0
    %p48 = por %p46, %p47
    %p49 = scmp.ne.s32.totalorder %s37, %s38
    %p50 = scmp.eq.s32.totalorder %s21, 7
    %p51 = por %p49, %p50
    %p53 = scmp.ne.s32.totalorder %s38, %s52
    %p54 = scmp.eq.s32.totalorder %s21, 0
    %p55 = por %p53, %p54
    %s57 = sadd.s32 %s56, 1
    %p60 = scmp.eq.s32.totalorder %s15, 7
    %p61 = scmp.ne.s32.totalorder %s56, %s58
    %p62 = scmp.eq.s32.totalorder %s15, 0
    %p63 = por %p61, %p62
    %p64 = scmp.ne.s32.totalorder %s56, %s58
    %p65 = scmp.eq.s32.totalorder %s20, 7
    %p66 = por %p64, %p65
    %p67 = scmp.ne.s32.totalorder %s58, %s59
    %p68 = scmp.eq.s32.totalorder %s20, 0
    %p69 = por %p67, %p68
    %p70 = scmp.ne.s32.totalorder %s58, %s59
    %p71 = scmp.eq.s32.totalorder %s21, 7
    %p72 = por %p70, %p71
    %p74 = scmp.ne.s32.totalorder %s59, %s73
    %p75 = scmp.eq.s32.totalorder %s21, 0
    %p76 = por %p74, %p75
    %s78 = sadd.s32 %s77, 1
    %p81 = scmp.eq.s32.totalorder %s15, 7
    %p82 = scmp.ne.s32.totalorder %s77, %s79
    %p83 = scmp.eq.s32.totalorder %s15, 0
    %p84 = por %p82, %p83
    %p85 = scmp.ne.s32.totalorder %s77, %s79
    %p86 = scmp.eq.s32.totalorder %s20, 7
    %p87 = por %p85, %p86
    %p88 = scmp.ne.s32.totalorder %s79, %s80
    %p89 = scmp.eq.s32.totalorder %s20, 0
    %p90 = por %p88, %p89
    %p91 = scmp.ne.s32.totalorder %s79, %s80
    %p92 = scmp.eq.s32.totalorder %s21, 7
    %p93 = por %p91, %p92
    %p95 = scmp.ne.s32.totalorder %s80, %s94
    %p96 = scmp.eq.s32.totalorder %s21, 0
    %p97 = por %p95, %p96
    %s99 = sadd.s32 %s98, 1
    %p102 = scmp.eq.s32.totalorder %s15, 7
    %p103 = scmp.ne.s32.totalorder %s98, %s100
    %p104 = scmp.eq.s32.totalorder %s15, 0
    %p105 = por %p103, %p104
    %p106 = scmp.ne.s32.totalorder %s98, %s100
    %p107 = scmp.eq.s32.totalorder %s20, 7
    %p108 = por %p106, %p107
    %p109 = scmp.ne.s32.totalorder %s100, %s101
    %p110 = scmp.eq.s32.totalorder %s20, 0
    %p111 = por %p109, %p110
    %p112 = scmp.ne.s32.totalorder %s100, %s101
    %p113 = scmp.eq.s32.totalorder %s21, 7
    %p114 = por %p112, %p113
    %p116 = scmp.ne.s32.totalorder %s101, %s115
    %p117 = scmp.eq.s32.totalorder %s21, 0
    %p118 = por %p116, %p117
    %s119 = ssub.s32 %s23, %s30
    %p120 = scmp.eq.s32.totalorder %s119, 0
    %s122 = sadd.s32 %s121, 1
    %s123 = scalar_select %p120, %s121, %s122
    %p126 = pneg %p120
    %p127 = scmp.eq.s32.totalorder %s15, 7
    %p128 = por %p126, %p127
    %p129 = scmp.ne.s32.totalorder %s121, %s124
    %p130 = scmp.eq.s32.totalorder %s15, 0
    %p131 = por %p129, %p130
    %p132 = scmp.ne.s32.totalorder %s121, %s124
    %p133 = scmp.eq.s32.totalorder %s20, 7
    %p134 = por %p132, %p133
    %p135 = scmp.ne.s32.totalorder %s124, %s125
    %p136 = scmp.eq.s32.totalorder %s20, 0
    %p137 = por %p135, %p136
    %p138 = scmp.ne.s32.totalorder %s124, %s125
    %p139 = scmp.eq.s32.totalorder %s21, 7
    %p140 = por %p138, %p139
    %p142 = scmp.ne.s32.totalorder %s125, %s141
    %p143 = scmp.eq.s32.totalorder %s21, 0
    %p144 = por %p142, %p143
    %s146 = sadd.s32 %s145, 1
    %p149 = scmp.eq.s32.totalorder %s15, 7
    %p150 = scmp.ne.s32.totalorder %s145, %s147
    %p151 = scmp.eq.s32.totalorder %s15, 0
    %p152 = por %p150, %p151
    %p153 = scmp.ne.s32.totalorder %s145, %s147
    %p154 = scmp.eq.s32.totalorder %s20, 7
    %p155 = por %p153, %p154
    %p156 = scmp.ne.s32.totalorder %s147, %s148
    %p157 = scmp.eq.s32.totalorder %s20, 0
    %p158 = por %p156, %p157
    %p159 = scmp.ne.s32.totalorder %s147, %s148
    %p160 = scmp.eq.s32.totalorder %s21, 7
    %p161 = por %p159, %p160
    %p163 = scmp.ne.s32.totalorder %s148, %s162
    %p164 = scmp.eq.s32.totalorder %s21, 0
    %p165 = por %p163, %p164
    %s167 = sadd.s32 %s166, 1
    %p170 = scmp.eq.s32.totalorder %s15, 7
    %p171 = scmp.ne.s32.totalorder %s166, %s168
    %p172 = scmp.eq.s32.totalorder %s15, 0
    %p173 = por %p171, %p172
    %p174 = scmp.ne.s32.totalorder %s166, %s168
    %p175 = scmp.eq.s32.totalorder %s20, 7
    %p176 = por %p174, %p175
    %p177 = scmp.ne.s32.totalorder %s168, %s169
    %p178 = scmp.eq.s32.totalorder %s20, 0
    %p179 = por %p177, %p178
    %p180 = scmp.ne.s32.totalorder %s168, %s169
    %p181 = scmp.eq.s32.totalorder %s21, 7
    %p182 = por %p180, %p181
    %p184 = scmp.ne.s32.totalorder %s169, %s183
    %p185 = scmp.eq.s32.totalorder %s21, 0
    %p186 = por %p184, %p185
    %s188 = sadd.s32 %s187, 1
    %p191 = scmp.eq.s32.totalorder %s15, 7
    %p192 = scmp.ne.s32.totalorder %s187, %s189
    %p193 = scmp.eq.s32.totalorder %s15, 0
    %p194 = por %p192, %p193
    %p195 = scmp.ne.s32.totalorder %s187, %s189
    %p196 = scmp.eq.s32.totalorder %s20, 7
    %p197 = por %p195, %p196
    %p198 = scmp.ne.s32.totalorder %s189, %s190
    %p199 = scmp.eq.s32.totalorder %s20, 0
    %p200 = por %p198, %p199
    %p201 = scmp.ne.s32.totalorder %s189, %s190
    %p202 = scmp.eq.s32.totalorder %s21, 7
    %p203 = por %p201, %p202
    %p205 = scmp.ne.s32.totalorder %s190, %s204
    %p206 = scmp.eq.s32.totalorder %s21, 0
    %p207 = por %p205, %p206
    %s208 = ssub.s32 %s23, %s30
    %p209 = scmp.eq.s32.totalorder %s208, 0
    %s211 = sadd.s32 %s210, 1
    %s212 = scalar_select %p209, %s210, %s211
    %p215 = pneg %p209
    %p216 = scmp.eq.s32.totalorder %s15, 7
    %p217 = por %p215, %p216
    %p218 = scmp.ne.s32.totalorder %s210, %s213
    %p219 = scmp.eq.s32.totalorder %s15, 0
    %p220 = por %p218, %p219
    %p221 = scmp.ne.s32.totalorder %s210, %s213
    %p222 = scmp.eq.s32.totalorder %s20, 7
    %p223 = por %p221, %p222
    %p224 = scmp.ne.s32.totalorder %s213, %s214
    %p225 = scmp.eq.s32.totalorder %s20, 0
    %p226 = por %p224, %p225
    %p227 = scmp.ne.s32.totalorder %s213, %s214
    %p228 = scmp.eq.s32.totalorder %s21, 7
    %p229 = por %p227, %p228
    %p231 = scmp.ne.s32.totalorder %s214, %s230
    %p232 = scmp.eq.s32.totalorder %s21, 0
    %p233 = por %p231, %p232
    %s234 = ssub.s32 %s23, %s30
    %p235 = scmp.eq.s32.totalorder %s234, 0
    %s237 = sadd.s32 %s236, 1
    %s238 = scalar_select %p235, %s236, %s237
    %p241 = pneg %p235
    %p242 = scmp.eq.s32.totalorder %s15, 7
    %p243 = por %p241, %p242
    %p244 = scmp.ne.s32.totalorder %s236, %s239
    %p245 = scmp.eq.s32.totalorder %s15, 0
    %p246 = por %p244, %p245
    %p247 = scmp.ne.s32.totalorder %s236, %s239
    %p248 = scmp.eq.s32.totalorder %s20, 7
    %p249 = por %p247, %p248
    %p250 = scmp.ne.s32.totalorder %s239, %s240
    %p251 = scmp.eq.s32.totalorder %s20, 0
    %p252 = por %p250, %p251
    %p253 = scmp.ne.s32.totalorder %s239, %s240
    %p254 = scmp.eq.s32.totalorder %s21, 7
    %p255 = por %p253, %p254
    %p257 = scmp.ne.s32.totalorder %s240, %s256
    %p258 = scmp.eq.s32.totalorder %s21, 0
    %p259 = por %p257, %p258
    %p260 = scmp.le.s32.totalorder 1, %s15
    %p261 = scmp.lt.s32.totalorder %s15, 9
    %p262 = pnand %p260, %p261
    %p263 = pneg %p262
    // Predicated region
    $region9: #{bottleneck_forward.5} parent=5 // pred_check
      _
    $region10: #{bottleneck_forward.5} parent=5 // pred_check_branch
      %265 = sbr.rel (%p262) target = $region12
    $region11: #{bottleneck_forward.5} parent=5 // pred_region
      %s266 = ssub.s32 %s15, 1
      // Predicated region
      $region13: #{bottleneck_forward.5} parent=11 // pred_check
        %p267 = pneg %p48
      $region14: #{bottleneck_forward.5} parent=11 // pred_check_branch
        %269 = sbr.rel (%p267) target = $region16
      $region15: #{bottleneck_forward.5} parent=11 // pred_region
        _
      $region16: #{bottleneck_forward.5} parent=11 // pred_fallthru
        _
      // Predicated region
      $region17: #{bottleneck_forward.5} parent=11 // pred_check
        %p270 = pneg %p69
      $region18: #{bottleneck_forward.5} parent=11 // pred_check_branch
        %272 = sbr.rel (%p270) target = $region20
      $region19: #{bottleneck_forward.5} parent=11 // pred_region
        _
      $region20: #{bottleneck_forward.5} parent=11 // pred_fallthru
        _
      // Predicated region
      $region21: #{bottleneck_forward.5} parent=11 // pred_check
        %p273 = pneg %p90
      $region22: #{bottleneck_forward.5} parent=11 // pred_check_branch
        %275 = sbr.rel (%p273) target = $region24
      $region23: #{bottleneck_forward.5} parent=11 // pred_region
        _
      $region24: #{bottleneck_forward.5} parent=11 // pred_fallthru
        _
      // Predicated region
      $region25: #{bottleneck_forward.5} parent=11 // pred_check
        %p276 = pneg %p111
      $region26: #{bottleneck_forward.5} parent=11 // pred_check_branch
        %278 = sbr.rel (%p276) target = $region28
      $region27: #{bottleneck_forward.5} parent=11 // pred_region
        _
      $region28: #{bottleneck_forward.5} parent=11 // pred_fallthru
        _
      // Predicated region
      $region29: #{bottleneck_forward.5} parent=11 // pred_check
        %p279 = pneg %p158
      $region30: #{bottleneck_forward.5} parent=11 // pred_check_branch
        %281 = sbr.rel (%p279) target = $region32
      $region31: #{bottleneck_forward.5} parent=11 // pred_region
        _
      $region32: #{bottleneck_forward.5} parent=11 // pred_fallthru
        _
      // Predicated region
      $region33: #{bottleneck_forward.5} parent=11 // pred_check
        %p282 = pneg %p179
      $region34: #{bottleneck_forward.5} parent=11 // pred_check_branch
        %284 = sbr.rel (%p282) target = $region36
      $region35: #{bottleneck_forward.5} parent=11 // pred_region
        _
      $region36: #{bottleneck_forward.5} parent=11 // pred_fallthru
        _
      // Predicated region
      $region37: #{bottleneck_forward.5} parent=11 // pred_check
        %p285 = pneg %p200
      $region38: #{bottleneck_forward.5} parent=11 // pred_check_branch
        %287 = sbr.rel (%p285) target = $region40
      $region39: #{bottleneck_forward.5} parent=11 // pred_region
        _
      $region40: #{bottleneck_forward.5} parent=11 // pred_fallthru
        _
    $region12: #{bottleneck_forward.5} parent=5 // pred_fallthru
      _
    %p288 = scmp.lt.s32.totalorder %s15, 8
    // Predicated region
    $region41: #{bottleneck_forward.5} parent=5 // pred_check
      %p289 = pneg %p288
    $region42: #{bottleneck_forward.5} parent=5 // pred_check_branch
      %291 = sbr.rel (%p289) target = $region44
    $region43: #{bottleneck_forward.5} parent=5 // pred_region
      // Predicated region
      $region45: #{bottleneck_forward.5} parent=43 // pred_check
        %p292 = pneg %p131
      $region46: #{bottleneck_forward.5} parent=43 // pred_check_branch
        %294 = sbr.rel (%p292) target = $region48
      $region47: #{bottleneck_forward.5} parent=43 // pred_region
        %s295 = smul.u32 16, %s23
        %p296 = scmp.lt.s32.totalorder %s295, 63
        %s297 = scalar_select %p296, %s295, 63
        %s298 = smul.addr %s297, 8
        %s299 = scalar_lea.vmem %s4, %s298
        %s300 = smul.u32 16, %s23
      $region48: #{bottleneck_forward.5} parent=43 // pred_fallthru
        _
      // Predicated region
      $region49: #{bottleneck_forward.5} parent=43 // pred_check
        %p301 = pneg %p220
      $region50: #{bottleneck_forward.5} parent=43 // pred_check_branch
        %303 = sbr.rel (%p301) target = $region52
      $region51: #{bottleneck_forward.5} parent=43 // pred_region
        %s304 = smul.u32 16, %s23
        %p305 = scmp.lt.s32.totalorder %s304, 63
        %s306 = scalar_select %p305, %s304, 63
        %s307 = smul.addr %s306, 8
        %s308 = scalar_lea.vmem %s8, %s307
        %s309 = smul.u32 16, %s23
      $region52: #{bottleneck_forward.5} parent=43 // pred_fallthru
        _
    $region44: #{bottleneck_forward.5} parent=5 // pred_fallthru
      _
    %p310 = scmp.le.s32.totalorder 1, %s15
    %p311 = scmp.lt.s32.totalorder %s15, 9
    %p312 = pnand %p310, %p311
    %p313 = pneg %p312
    // Predicated region
    $region53: #{bottleneck_forward.5} parent=5 // pred_check
      _
    $region54: #{bottleneck_forward.5} parent=5 // pred_check_branch
      %315 = sbr.rel (%p312) target = $region56
    $region55: #{bottleneck_forward.5} parent=5 // pred_region
      %s316 = ssub.s32 %s15, 1
      %p317 = pneg %p48
      %p318 = pneg %p45
      %p319 = pneg %p69
      %p320 = pneg %p66
      %p321 = pneg %p90
      %p322 = pneg %p87
      %p323 = pneg %p111
      %p324 = pneg %p108
      %s325 = smul.u32 16, %s25
      %p326 = scmp.lt.s32.totalorder %s325, 63
      %s327 = scalar_select %p326, %s325, 63
      %s328 = smul.addr %s327, 8
      %s329 = scalar_lea.vmem %s4, %s328
      %p330 = pneg %p137
      %p331 = pneg %p134
      %p332 = pneg %p158
      %p333 = pneg %p155
      %p334 = pneg %p179
      %p335 = pneg %p176
      %p336 = pneg %p200
      %p337 = pneg %p197
      %s338 = smul.u32 16, %s25
      %p339 = scmp.lt.s32.totalorder %s338, 63
      %s340 = scalar_select %p339, %s338, 63
      %s341 = smul.addr %s340, 8
      %s342 = scalar_lea.vmem %s8, %s341
      %p343 = pneg %p226
      %p344 = pneg %p223
      %p345 = pneg %p252
      %p346 = pneg %p249
      %s347 = smul.u32 16, %s25
      %p348 = scmp.lt.s32.totalorder %s347, 63
      %s349 = scalar_select %p348, %s347, 63
      %s350 = smul.addr %s349, 8
      %s351 = scalar_lea.vmem %s9, %s350
      %s352 = smul.u32 16, %s25
      %p353 = scmp.lt.s32.totalorder %s352, 63
      %s354 = scalar_select %p353, %s352, 63
      %s355 = smul.addr %s354, 8
      %s356 = scalar_lea.vmem %s4, %s355
      %s357 = smul.u32 16, %s25
      %s358 = smul.u32 16, %s25
      %p359 = scmp.lt.s32.totalorder %s358, 63
      %s360 = scalar_select %p359, %s358, 63
      %s361 = smul.addr %s360, 8
      %s362 = scalar_lea.vmem %s8, %s361
      %s363 = smul.u32 16, %s25
      %s364 = smul.u32 16, %s25
      %p365 = scmp.lt.s32.totalorder %s364, 63
      %s366 = scalar_select %p365, %s364, 63
      %s367 = smul.addr %s366, 8
      %s368 = scalar_lea.vmem %s9, %s367
      %s369 = smul.u32 16, %s25
      %v371 = vld [vmem:[%s0] sm:$0x1]
      %v372 = vmul.f32 %v371, 0.001953125
      %v373 = vld [vmem:[%s1] sm:$0x1]
      %v374 = vmul.f32 %v373, 0.001953125
      %v375 = vmul.f32 %v372, %v372
      %v376 = vsub.f32 %v374, %v375
      %v377 = vadd.f32 %v376, 1e-05
      %v378 = vrsqrt.pop %v377
      %v379 = vld [vmem:[%s2] sm:$0x1]
      %v380 = vmul.f32 %v379, %v378
      %v381 = vld [vmem:[%s3] sm:$0x1]
      %v382 = vmul.f32 %v372, %v380
      %v383 = vsub.f32 %v381, %v382
      %v384 = vld [vmem:[%s356] sm:$0xff]
      %v385 = vld [vmem:[%s356 + $0x8] sm:$0xff]
      %v386 = vld [vmem:[%s356 + $0x10] sm:$0xff]
      %v387 = vld [vmem:[%s356 + $0x18] sm:$0xff]
      %v388 = vld [vmem:[%s356 + $0x20] sm:$0xff]
      %v389 = vld [vmem:[%s356 + $0x28] sm:$0xff]
      %v390 = vld [vmem:[%s356 + $0x30] sm:$0xff]
      %v391 = vld [vmem:[%s356 + $0x38] sm:$0xff]
      %v392 = vld [vmem:[%s356 + $0x40] sm:$0xff]
      %v393 = vld [vmem:[%s356 + $0x48] sm:$0xff]
      %v394 = vld [vmem:[%s356 + $0x50] sm:$0xff]
      %v395 = vld [vmem:[%s356 + $0x58] sm:$0xff]
      %v396 = vld [vmem:[%s356 + $0x60] sm:$0xff]
      %v397 = vld [vmem:[%s356 + $0x68] sm:$0xff]
      %v398 = vld [vmem:[%s356 + $0x70] sm:$0xff]
      %v399 = vld [vmem:[%s356 + $0x78] sm:$0xff]
      %v401 = vlaneseq
      %v402 = vshrl.u32 %v401, 7
      %v403 = vsub.s32 0, %v402
      %v404 = vrot.slane %v380, %v403
      %v406 = vmul.f32 %v384, %v404
      %v407 = vmul.f32 %v385, %v404
      %v408 = vmul.f32 %v386, %v404
      %v409 = vmul.f32 %v387, %v404
      %v410 = vmul.f32 %v388, %v404
      %v411 = vmul.f32 %v389, %v404
      %v412 = vmul.f32 %v390, %v404
      %v413 = vmul.f32 %v391, %v404
      %v414 = vmul.f32 %v392, %v404
      %v415 = vmul.f32 %v393, %v404
      %v416 = vmul.f32 %v394, %v404
      %v417 = vmul.f32 %v395, %v404
      %v418 = vmul.f32 %v396, %v404
      %v419 = vmul.f32 %v397, %v404
      %v420 = vmul.f32 %v398, %v404
      %v421 = vmul.f32 %v399, %v404
      %v423 = vlaneseq
      %v424 = vshrl.u32 %v423, 7
      %v425 = vsub.s32 0, %v424
      %v426 = vrot.slane %v383, %v425
      %v428 = vadd.f32 %v406, %v426
      %v429 = vadd.f32 %v407, %v426
      %v430 = vadd.f32 %v408, %v426
      %v431 = vadd.f32 %v409, %v426
      %v432 = vadd.f32 %v410, %v426
      %v433 = vadd.f32 %v411, %v426
      %v434 = vadd.f32 %v412, %v426
      %v435 = vadd.f32 %v413, %v426
      %v436 = vadd.f32 %v414, %v426
      %v437 = vadd.f32 %v415, %v426
      %v438 = vadd.f32 %v416, %v426
      %v439 = vadd.f32 %v417, %v426
      %v440 = vadd.f32 %v418, %v426
      %v441 = vadd.f32 %v419, %v426
      %v442 = vadd.f32 %v420, %v426
      %v443 = vadd.f32 %v421, %v426
      %v444 = vmax.f32 %v428, 0.0
      %v445 = vmax.f32 %v429, 0.0
      %v446 = vmax.f32 %v430, 0.0
      %v447 = vmax.f32 %v431, 0.0
      %v448 = vmax.f32 %v432, 0.0
      %v449 = vmax.f32 %v433, 0.0
      %v450 = vmax.f32 %v434, 0.0
      %v451 = vmax.f32 %v435, 0.0
      %v452 = vmax.f32 %v436, 0.0
      %v453 = vmax.f32 %v437, 0.0
      %v454 = vmax.f32 %v438, 0.0
      %v455 = vmax.f32 %v439, 0.0
      %v456 = vmax.f32 %v440, 0.0
      %v457 = vmax.f32 %v441, 0.0
      %v458 = vmax.f32 %v442, 0.0
      %v459 = vmax.f32 %v443, 0.0
      %v460 = vpack.c.bf16 %v445, %v444
      %v461 = vpack.c.bf16 %v447, %v446
      %v462 = vpack.c.bf16 %v449, %v448
      %v463 = vpack.c.bf16 %v451, %v450
      %v464 = vpack.c.bf16 %v453, %v452
      %v465 = vpack.c.bf16 %v455, %v454
      %v466 = vpack.c.bf16 %v457, %v456
      %v467 = vpack.c.bf16 %v459, %v458
      %v468 = vld [vmem:[%s5] sm:$0xf]
      %v469 = vld [vmem:[%s5 + $0x4] sm:$0xf]
      %v470 = vld [vmem:[%s5 + $0x8] sm:$0xf]
      %v471 = vld [vmem:[%s5 + $0xc] sm:$0xf]
      %v472 = vld [vmem:[%s5 + $0x10] sm:$0xf]
      %v473 = vld [vmem:[%s5 + $0x14] sm:$0xf]
      %v474 = vld [vmem:[%s5 + $0x18] sm:$0xf]
      %v475 = vld [vmem:[%s5 + $0x1c] sm:$0xf]
      %v476 = vld [vmem:[%s5 + $0x20] sm:$0xf]
      %v477 = vld [vmem:[%s5 + $0x24] sm:$0xf]
      %v478 = vld [vmem:[%s5 + $0x28] sm:$0xf]
      %v479 = vld [vmem:[%s5 + $0x2c] sm:$0xf]
      %v480 = vld [vmem:[%s5 + $0x30] sm:$0xf]
      %v481 = vld [vmem:[%s5 + $0x34] sm:$0xf]
      %v482 = vld [vmem:[%s5 + $0x38] sm:$0xf]
      %v483 = vld [vmem:[%s5 + $0x3c] sm:$0xf]
      %v500 = vunpack.c.l.b16 %v468
      %v501 = vunpack.c.l.b16 %v469
      %v502 = vunpack.c.l.b16 %v470
      %v503 = vunpack.c.l.b16 %v471
      %v504 = vunpack.c.l.b16 %v472
      %v505 = vunpack.c.l.b16 %v473
      %v506 = vunpack.c.l.b16 %v474
      %v507 = vunpack.c.l.b16 %v475
      %v508 = vunpack.c.l.b16 %v476
      %v509 = vunpack.c.l.b16 %v477
      %v510 = vunpack.c.l.b16 %v478
      %v511 = vunpack.c.l.b16 %v479
      %v512 = vunpack.c.l.b16 %v480
      %v513 = vunpack.c.l.b16 %v481
      %v514 = vunpack.c.l.b16 %v482
      %v515 = vunpack.c.l.b16 %v483
      %v516 = vpack.c.b16 %v501, %v500
      %v517 = vpack.c.b16 %v503, %v502
      %v518 = vpack.c.b16 %v505, %v504
      %v519 = vpack.c.b16 %v507, %v506
      %v520 = vpack.c.b16 %v509, %v508
      %v521 = vpack.c.b16 %v511, %v510
      %v522 = vpack.c.b16 %v513, %v512
      %v523 = vpack.c.b16 %v515, %v514
      %532 = vmatprep.subr.bf16.mxu0 0
      %533 = vmatpush1.bf16.msra.mxu0 %v523
      %534 = vmatprep.subr.bf16.mxu0 0
      %535 = vmatpush1.bf16.msra.mxu0 %v522
      %536 = vmatprep.subr.bf16.mxu0 0
      %537 = vmatpush1.bf16.msra.mxu0 %v521
      %538 = vmatprep.subr.bf16.mxu0 0
      %539 = vmatpush1.bf16.msra.mxu0 %v520
      %540 = vmatprep.subr.bf16.mxu0 0
      %541 = vmatpush1.bf16.msra.mxu0 %v519
      %542 = vmatprep.subr.bf16.mxu0 0
      %543 = vmatpush1.bf16.msra.mxu0 %v518
      %544 = vmatprep.subr.bf16.mxu0 0
      %545 = vmatpush1.bf16.msra.mxu0 %v517
      %546 = vmatprep.subr.bf16.mxu0 0
      %547 = vmatpush1.bf16.msra.mxu0 %v516
      %548 = vmatprep.subr.bf16.mxu0 0
      %549 = vmatpush2.bf16.msra.mxu0 0
      %550 = vmatprep.subr.bf16.mxu0 0
      %551 = vmatpush2.bf16.msra.mxu0 0
      %552 = vmatprep.subr.bf16.mxu0 0
      %553 = vmatpush2.bf16.msra.mxu0 0
      %554 = vmatprep.subr.bf16.mxu0 0
      %555 = vmatpush2.bf16.msra.mxu0 0
      %556 = vmatprep.subr.bf16.mxu0 0
      %557 = vmatpush2.bf16.msra.mxu0 0
      %558 = vmatprep.subr.bf16.mxu0 0
      %559 = vmatpush2.bf16.msra.mxu0 0
      %560 = vmatprep.subr.bf16.mxu0 0
      %561 = vmatpush2.bf16.msra.mxu0 0
      %562 = vmatprep.subr.bf16.mxu0 0
      %563 = vmatpush2.bf16.msra.mxu0 0
      %564 = vmatprep.mubr.bf16.mxu0 0
      %565 = vmatmul.mubr.bf16.gmra.mxu0 %v460
      %v566 = vpop.f32.mrf.mxu0
      %v567 = vadd.f32 0.0, %v566
      %v568 = vpop.f32.mrf.mxu0
      %v569 = vpop.f32.mrf.mxu0
      %v570 = vadd.f32 0.0, %v569
      %v571 = vpop.f32.mrf.mxu0
      %572 = vmatprep.mubr.bf16.mxu0 0
      %573 = vmatmul.mubr.bf16.gmra.mxu0 %v461
      %v574 = vpop.f32.mrf.mxu0
      %v575 = vadd.f32 0.0, %v574
      %v576 = vpop.f32.mrf.mxu0
      %v577 = vpop.f32.mrf.mxu0
      %v578 = vadd.f32 0.0, %v577
      %v579 = vpop.f32.mrf.mxu0
      %580 = vmatprep.mubr.bf16.mxu0 0
      %581 = vmatmul.mubr.bf16.gmra.mxu0 %v462
      %v582 = vpop.f32.mrf.mxu0
      %v583 = vadd.f32 0.0, %v582
      %v584 = vpop.f32.mrf.mxu0
      %v585 = vpop.f32.mrf.mxu0
      %v586 = vadd.f32 0.0, %v585
      %v587 = vpop.f32.mrf.mxu0
      %588 = vmatprep.mubr.bf16.mxu0 0
      %589 = vmatmul.mubr.bf16.gmra.mxu0 %v463
      %v590 = vpop.f32.mrf.mxu0
      %v591 = vadd.f32 0.0, %v590
      %v592 = vpop.f32.mrf.mxu0
      %v593 = vpop.f32.mrf.mxu0
      %v594 = vadd.f32 0.0, %v593
      %v595 = vpop.f32.mrf.mxu0
      %596 = vmatprep.mubr.bf16.mxu0 0
      %597 = vmatmul.mubr.bf16.gmra.mxu0 %v464
      %v598 = vpop.f32.mrf.mxu0
      %v599 = vadd.f32 0.0, %v598
      %v600 = vpop.f32.mrf.mxu0
      %v601 = vpop.f32.mrf.mxu0
      %v602 = vadd.f32 0.0, %v601
      %v603 = vpop.f32.mrf.mxu0
      %604 = vmatprep.mubr.bf16.mxu0 0
      %605 = vmatmul.mubr.bf16.gmra.mxu0 %v465
      %v606 = vpop.f32.mrf.mxu0
      %v607 = vadd.f32 0.0, %v606
      %v608 = vpop.f32.mrf.mxu0
      %v609 = vpop.f32.mrf.mxu0
      %v610 = vadd.f32 0.0, %v609
      %v611 = vpop.f32.mrf.mxu0
      %612 = vmatprep.mubr.bf16.mxu0 0
      %613 = vmatmul.mubr.bf16.gmra.mxu0 %v466
      %v614 = vpop.f32.mrf.mxu0
      %v615 = vadd.f32 0.0, %v614
      %v616 = vpop.f32.mrf.mxu0
      %v617 = vpop.f32.mrf.mxu0
      %v618 = vadd.f32 0.0, %v617
      %v619 = vpop.f32.mrf.mxu0
      %620 = vmatprep.mubr.bf16.mxu0 0
      %621 = vmatmul.mubr.bf16.gmra.mxu0 %v467
      %v622 = vpop.f32.mrf.mxu0
      %v623 = vadd.f32 0.0, %v622
      %v624 = vpop.f32.mrf.mxu0
      %v625 = vpop.f32.mrf.mxu0
      %v626 = vadd.f32 0.0, %v625
      %v627 = vpop.f32.mrf.mxu0
      %628 = vdwg.mxu0
      %p629 = scmp.eq.s32.totalorder %s24, 0
      %p630 = scmp.eq.s32.totalorder %s25, 0
      %p631 = pnand %p629, %p630
      %p632 = pneg %p631
      // Predicated region
      $region57: #{bottleneck_forward.5} parent=55 // pred_check
        _
      $region58: #{bottleneck_forward.5} parent=55 // pred_check_branch
        %634 = sbr.rel (%p631) target = $region60
      $region59: #{bottleneck_forward.5} parent=55 // pred_region
        %635 = vst [vmem:[#allocation2] sm:$0x1] 0.0
        %636 = vst [vmem:[#allocation3] sm:$0x1] 0.0
      $region60: #{bottleneck_forward.5} parent=55 // pred_fallthru
        _
      // Predicated region
      $region61: #{bottleneck_forward.5} parent=55 // pred_check
        %p637 = pneg %p629
      $region62: #{bottleneck_forward.5} parent=55 // pred_check_branch
        %639 = sbr.rel (%p637) target = $region64
      $region63: #{bottleneck_forward.5} parent=55 // pred_region
        %v640 = vld [vmem:[#allocation2] sm:$0x1]
        %641 = vmatprep.subr.mxu0 0.0
        %642 = vmatpush1.msra.mxu0 %v626
        %643 = vmatprep.subr.mxu0 0.0
        %644 = vmatpush1.msra.mxu0 %v623
        %645 = vmatprep.subr.mxu0 0.0
        %646 = vmatpush1.msra.mxu0 %v618
        %647 = vmatprep.subr.mxu0 0.0
        %648 = vmatpush1.msra.mxu0 %v615
        %649 = vmatprep.subr.mxu0 0.0
        %650 = vmatpush1.msra.mxu0 %v610
        %651 = vmatprep.subr.mxu0 0.0
        %652 = vmatpush1.msra.mxu0 %v607
        %653 = vmatprep.subr.mxu0 0.0
        %654 = vmatpush1.msra.mxu0 %v602
        %655 = vmatprep.subr.mxu0 0.0
        %656 = vmatpush1.msra.mxu0 %v599
        %657 = vmatprep.subr.mxu0 0.0
        %658 = vmatpush1.msra.mxu0 %v594
        %659 = vmatprep.subr.mxu0 0.0
        %660 = vmatpush1.msra.mxu0 %v591
        %661 = vmatprep.subr.mxu0 0.0
        %662 = vmatpush1.msra.mxu0 %v586
        %663 = vmatprep.subr.mxu0 0.0
        %664 = vmatpush1.msra.mxu0 %v583
        %665 = vmatprep.subr.mxu0 0.0
        %666 = vmatpush1.msra.mxu0 %v578
        %667 = vmatprep.subr.mxu0 0.0
        %668 = vmatpush1.msra.mxu0 %v575
        %669 = vmatprep.subr.mxu0 0.0
        %670 = vmatpush1.msra.mxu0 %v570
        %671 = vmatprep.subr.mxu0 0.0
        %672 = vmatpush1.msra.mxu0 %v567
        %673 = vmatprep.subr.mxu0 0.0
        %674 = vmatpush2.msra.mxu0 0.0
        %675 = vmatprep.subr.mxu0 0.0
        %676 = vmatpush2.msra.mxu0 0.0
        %677 = vmatprep.subr.mxu0 0.0
        %678 = vmatpush2.msra.mxu0 0.0
        %679 = vmatprep.subr.mxu0 0.0
        %680 = vmatpush2.msra.mxu0 0.0
        %681 = vmatprep.subr.mxu0 0.0
        %682 = vmatpush2.msra.mxu0 0.0
        %683 = vmatprep.subr.mxu0 0.0
        %684 = vmatpush2.msra.mxu0 0.0
        %685 = vmatprep.subr.mxu0 0.0
        %686 = vmatpush2.msra.mxu0 0.0
        %687 = vmatprep.subr.mxu0 0.0
        %688 = vmatpush2.msra.mxu0 0.0
        %689 = vmatprep.subr.mxu0 0.0
        %690 = vmatpush2.msra.mxu0 0.0
        %691 = vmatprep.subr.mxu0 0.0
        %692 = vmatpush2.msra.mxu0 0.0
        %693 = vmatprep.subr.mxu0 0.0
        %694 = vmatpush2.msra.mxu0 0.0
        %695 = vmatprep.subr.mxu0 0.0
        %696 = vmatpush2.msra.mxu0 0.0
        %697 = vmatprep.subr.mxu0 0.0
        %698 = vmatpush2.msra.mxu0 0.0
        %699 = vmatprep.subr.mxu0 0.0
        %700 = vmatpush2.msra.mxu0 0.0
        %701 = vmatprep.subr.mxu0 0.0
        %702 = vmatpush2.msra.mxu0 0.0
        %703 = vmatprep.subr.mxu0 0.0
        %704 = vmatpush2.msra.mxu0 0.0
        %705 = vmatprep.mubr.f32.mxu0 0.0
        %706 = vmatmul.mubr.f32.gmra.mxu0 1.0
        %v707 = vpop.f32.mrf.mxu0
        %v708 = vadd.f32 0.0, %v707
        %v709 = vpop.f32.mrf.mxu0
        %710 = vdwg.mxu0
        %v711 = vadd.f32 %v640, %v708
        %712 = vst [vmem:[#allocation2] sm:$0x1] %v711
        %v713 = vld [vmem:[#allocation3] sm:$0x1]
        %v714 = vmul.f32 %v567, %v567
        %v715 = vmul.f32 %v570, %v570
        %v716 = vmul.f32 %v575, %v575
        %v717 = vmul.f32 %v578, %v578
        %v718 = vmul.f32 %v583, %v583
        %v719 = vmul.f32 %v586, %v586
        %v720 = vmul.f32 %v591, %v591
        %v721 = vmul.f32 %v594, %v594
        %v722 = vmul.f32 %v599, %v599
        %v723 = vmul.f32 %v602, %v602
        %v724 = vmul.f32 %v607, %v607
        %v725 = vmul.f32 %v610, %v610
        %v726 = vmul.f32 %v615, %v615
        %v727 = vmul.f32 %v618, %v618
        %v728 = vmul.f32 %v623, %v623
        %v729 = vmul.f32 %v626, %v626
        %730 = vmatprep.subr.mxu0 0.0
        %731 = vmatpush1.msra.mxu0 %v729
        %732 = vmatprep.subr.mxu0 0.0
        %733 = vmatpush1.msra.mxu0 %v728
        %734 = vmatprep.subr.mxu0 0.0
        %735 = vmatpush1.msra.mxu0 %v727
        %736 = vmatprep.subr.mxu0 0.0
        %737 = vmatpush1.msra.mxu0 %v726
        %738 = vmatprep.subr.mxu0 0.0
        %739 = vmatpush1.msra.mxu0 %v725
        %740 = vmatprep.subr.mxu0 0.0
        %741 = vmatpush1.msra.mxu0 %v724
        %742 = vmatprep.subr.mxu0 0.0
        %743 = vmatpush1.msra.mxu0 %v723
        %744 = vmatprep.subr.mxu0 0.0
        %745 = vmatpush1.msra.mxu0 %v722
        %746 = vmatprep.subr.mxu0 0.0
        %747 = vmatpush1.msra.mxu0 %v721
        %748 = vmatprep.subr.mxu0 0.0
        %749 = vmatpush1.msra.mxu0 %v720
        %750 = vmatprep.subr.mxu0 0.0
        %751 = vmatpush1.msra.mxu0 %v719
        %752 = vmatprep.subr.mxu0 0.0
        %753 = vmatpush1.msra.mxu0 %v718
        %754 = vmatprep.subr.mxu0 0.0
        %755 = vmatpush1.msra.mxu0 %v717
        %756 = vmatprep.subr.mxu0 0.0
        %757 = vmatpush1.msra.mxu0 %v716
        %758 = vmatprep.subr.mxu0 0.0
        %759 = vmatpush1.msra.mxu0 %v715
        %760 = vmatprep.subr.mxu0 0.0
        %761 = vmatpush1.msra.mxu0 %v714
        %762 = vmatprep.subr.mxu0 0.0
        %763 = vmatpush2.msra.mxu0 0.0
        %764 = vmatprep.subr.mxu0 0.0
        %765 = vmatpush2.msra.mxu0 0.0
        %766 = vmatprep.subr.mxu0 0.0
        %767 = vmatpush2.msra.mxu0 0.0
        %768 = vmatprep.subr.mxu0 0.0
        %769 = vmatpush2.msra.mxu0 0.0
        %770 = vmatprep.subr.mxu0 0.0
        %771 = vmatpush2.msra.mxu0 0.0
        %772 = vmatprep.subr.mxu0 0.0
        %773 = vmatpush2.msra.mxu0 0.0
        %774 = vmatprep.subr.mxu0 0.0
        %775 = vmatpush2.msra.mxu0 0.0
        %776 = vmatprep.subr.mxu0 0.0
        %777 = vmatpush2.msra.mxu0 0.0
        %778 = vmatprep.subr.mxu0 0.0
        %779 = vmatpush2.msra.mxu0 0.0
        %780 = vmatprep.subr.mxu0 0.0
        %781 = vmatpush2.msra.mxu0 0.0
        %782 = vmatprep.subr.mxu0 0.0
        %783 = vmatpush2.msra.mxu0 0.0
        %784 = vmatprep.subr.mxu0 0.0
        %785 = vmatpush2.msra.mxu0 0.0
        %786 = vmatprep.subr.mxu0 0.0
        %787 = vmatpush2.msra.mxu0 0.0
        %788 = vmatprep.subr.mxu0 0.0
        %789 = vmatpush2.msra.mxu0 0.0
        %790 = vmatprep.subr.mxu0 0.0
        %791 = vmatpush2.msra.mxu0 0.0
        %792 = vmatprep.subr.mxu0 0.0
        %793 = vmatpush2.msra.mxu0 0.0
        %794 = vmatprep.mubr.f32.mxu0 0.0
        %795 = vmatmul.mubr.f32.gmra.mxu0 1.0
        %v796 = vpop.f32.mrf.mxu0
        %v797 = vadd.f32 0.0, %v796
        %v798 = vpop.f32.mrf.mxu0
        %799 = vdwg.mxu0
        %v800 = vadd.f32 %v713, %v797
        %801 = vst [vmem:[#allocation3] sm:$0x1] %v800
        %802 = vst [vmem:[%s368] sm:$0xff] %v567
        %803 = vst [vmem:[%s368 + $0x8] sm:$0xff] %v570
        %804 = vst [vmem:[%s368 + $0x10] sm:$0xff] %v575
        %805 = vst [vmem:[%s368 + $0x18] sm:$0xff] %v578
        %806 = vst [vmem:[%s368 + $0x20] sm:$0xff] %v583
        %807 = vst [vmem:[%s368 + $0x28] sm:$0xff] %v586
        %808 = vst [vmem:[%s368 + $0x30] sm:$0xff] %v591
        %809 = vst [vmem:[%s368 + $0x38] sm:$0xff] %v594
        %810 = vst [vmem:[%s368 + $0x40] sm:$0xff] %v599
        %811 = vst [vmem:[%s368 + $0x48] sm:$0xff] %v602
        %812 = vst [vmem:[%s368 + $0x50] sm:$0xff] %v607
        %813 = vst [vmem:[%s368 + $0x58] sm:$0xff] %v610
        %814 = vst [vmem:[%s368 + $0x60] sm:$0xff] %v615
        %815 = vst [vmem:[%s368 + $0x68] sm:$0xff] %v618
        %816 = vst [vmem:[%s368 + $0x70] sm:$0xff] %v623
        %817 = vst [vmem:[%s368 + $0x78] sm:$0xff] %v626
      $region64: #{bottleneck_forward.5} parent=55 // pred_fallthru
        _
      %p818 = scmp.eq.s32.totalorder %s24, 1
      // Predicated region
      $region65: #{bottleneck_forward.5} parent=55 // pred_check
        %p819 = pneg %p818
      $region66: #{bottleneck_forward.5} parent=55 // pred_check_branch
        %821 = sbr.rel (%p819) target = $region68
      $region67: #{bottleneck_forward.5} parent=55 // pred_region
        %v822 = vld [vmem:[#allocation2] sm:$0x1]
        %v823 = vmul.f32 %v822, 0.001953125
        %v824 = vld [vmem:[#allocation3] sm:$0x1]
        %v825 = vmul.f32 %v824, 0.001953125
        %v826 = vmul.f32 %v823, %v823
        %v827 = vsub.f32 %v825, %v826
        %v828 = vadd.f32 %v827, 1e-05
        %v829 = vrsqrt.pop %v828
        %v830 = vld [vmem:[%s6] sm:$0x1]
        %v831 = vmul.f32 %v830, %v829
        %v832 = vld [vmem:[%s7] sm:$0x1]
        %v833 = vmul.f32 %v823, %v831
        %v834 = vsub.f32 %v832, %v833
        %v836 = vlaneseq
        %v837 = vshrl.u32 %v836, 7
        %v838 = vsub.s32 0, %v837
        %v839 = vrot.slane %v831, %v838
        %v841 = vmul.f32 %v567, %v839
        %v842 = vmul.f32 %v570, %v839
        %v843 = vmul.f32 %v575, %v839
        %v844 = vmul.f32 %v578, %v839
        %v845 = vmul.f32 %v583, %v839
        %v846 = vmul.f32 %v586, %v839
        %v847 = vmul.f32 %v591, %v839
        %v848 = vmul.f32 %v594, %v839
        %v849 = vmul.f32 %v599, %v839
        %v850 = vmul.f32 %v602, %v839
        %v851 = vmul.f32 %v607, %v839
        %v852 = vmul.f32 %v610, %v839
        %v853 = vmul.f32 %v615, %v839
        %v854 = vmul.f32 %v618, %v839
        %v855 = vmul.f32 %v623, %v839
        %v856 = vmul.f32 %v626, %v839
        %v858 = vlaneseq
        %v859 = vshrl.u32 %v858, 7
        %v860 = vsub.s32 0, %v859
        %v861 = vrot.slane %v834, %v860
        %v863 = vadd.f32 %v841, %v861
        %v864 = vadd.f32 %v842, %v861
        %v865 = vadd.f32 %v843, %v861
        %v866 = vadd.f32 %v844, %v861
        %v867 = vadd.f32 %v845, %v861
        %v868 = vadd.f32 %v846, %v861
        %v869 = vadd.f32 %v847, %v861
        %v870 = vadd.f32 %v848, %v861
        %v871 = vadd.f32 %v849, %v861
        %v872 = vadd.f32 %v850, %v861
        %v873 = vadd.f32 %v851, %v861
        %v874 = vadd.f32 %v852, %v861
        %v875 = vadd.f32 %v853, %v861
        %v876 = vadd.f32 %v854, %v861
        %v877 = vadd.f32 %v855, %v861
        %v878 = vadd.f32 %v856, %v861
        %v879 = vld [vmem:[%s362] sm:$0xff]
        %v880 = vld [vmem:[%s362 + $0x8] sm:$0xff]
        %v881 = vld [vmem:[%s362 + $0x10] sm:$0xff]
        %v882 = vld [vmem:[%s362 + $0x18] sm:$0xff]
        %v883 = vld [vmem:[%s362 + $0x20] sm:$0xff]
        %v884 = vld [vmem:[%s362 + $0x28] sm:$0xff]
        %v885 = vld [vmem:[%s362 + $0x30] sm:$0xff]
        %v886 = vld [vmem:[%s362 + $0x38] sm:$0xff]
        %v887 = vld [vmem:[%s362 + $0x40] sm:$0xff]
        %v888 = vld [vmem:[%s362 + $0x48] sm:$0xff]
        %v889 = vld [vmem:[%s362 + $0x50] sm:$0xff]
        %v890 = vld [vmem:[%s362 + $0x58] sm:$0xff]
        %v891 = vld [vmem:[%s362 + $0x60] sm:$0xff]
        %v892 = vld [vmem:[%s362 + $0x68] sm:$0xff]
        %v893 = vld [vmem:[%s362 + $0x70] sm:$0xff]
        %v894 = vld [vmem:[%s362 + $0x78] sm:$0xff]
        %v895 = vadd.f32 %v863, %v879
        %v896 = vadd.f32 %v864, %v880
        %v897 = vadd.f32 %v865, %v881
        %v898 = vadd.f32 %v866, %v882
        %v899 = vadd.f32 %v867, %v883
        %v900 = vadd.f32 %v868, %v884
        %v901 = vadd.f32 %v869, %v885
        %v902 = vadd.f32 %v870, %v886
        %v903 = vadd.f32 %v871, %v887
        %v904 = vadd.f32 %v872, %v888
        %v905 = vadd.f32 %v873, %v889
        %v906 = vadd.f32 %v874, %v890
        %v907 = vadd.f32 %v875, %v891
        %v908 = vadd.f32 %v876, %v892
        %v909 = vadd.f32 %v877, %v893
        %v910 = vadd.f32 %v878, %v894
        %v911 = vmax.f32 %v895, 0.0
        %v912 = vmax.f32 %v896, 0.0
        %v913 = vmax.f32 %v897, 0.0
        %v914 = vmax.f32 %v898, 0.0
        %v915 = vmax.f32 %v899, 0.0
        %v916 = vmax.f32 %v900, 0.0
        %v917 = vmax.f32 %v901, 0.0
        %v918 = vmax.f32 %v902, 0.0
        %v919 = vmax.f32 %v903, 0.0
        %v920 = vmax.f32 %v904, 0.0
        %v921 = vmax.f32 %v905, 0.0
        %v922 = vmax.f32 %v906, 0.0
        %v923 = vmax.f32 %v907, 0.0
        %v924 = vmax.f32 %v908, 0.0
        %v925 = vmax.f32 %v909, 0.0
        %v926 = vmax.f32 %v910, 0.0
        %927 = vst [vmem:[%s368] sm:$0xff] %v911
        %928 = vst [vmem:[%s368 + $0x8] sm:$0xff] %v912
        %929 = vst [vmem:[%s368 + $0x10] sm:$0xff] %v913
        %930 = vst [vmem:[%s368 + $0x18] sm:$0xff] %v914
        %931 = vst [vmem:[%s368 + $0x20] sm:$0xff] %v915
        %932 = vst [vmem:[%s368 + $0x28] sm:$0xff] %v916
        %933 = vst [vmem:[%s368 + $0x30] sm:$0xff] %v917
        %934 = vst [vmem:[%s368 + $0x38] sm:$0xff] %v918
        %935 = vst [vmem:[%s368 + $0x40] sm:$0xff] %v919
        %936 = vst [vmem:[%s368 + $0x48] sm:$0xff] %v920
        %937 = vst [vmem:[%s368 + $0x50] sm:$0xff] %v921
        %938 = vst [vmem:[%s368 + $0x58] sm:$0xff] %v922
        %939 = vst [vmem:[%s368 + $0x60] sm:$0xff] %v923
        %940 = vst [vmem:[%s368 + $0x68] sm:$0xff] %v924
        %941 = vst [vmem:[%s368 + $0x70] sm:$0xff] %v925
        %942 = vst [vmem:[%s368 + $0x78] sm:$0xff] %v926
      $region68: #{bottleneck_forward.5} parent=55 // pred_fallthru
        _
      %s943 = smul.u32 16, %s25
      %p944 = scmp.lt.s32.totalorder %s943, 63
      %s945 = scalar_select %p944, %s943, 63
      %s946 = smul.addr %s945, 8
      %s947 = scalar_lea.vmem %s9, %s946
      // Predicated region
      $region69: #{bottleneck_forward.5} parent=55 // pred_check
        %p948 = pneg %p249
      $region70: #{bottleneck_forward.5} parent=55 // pred_check_branch
        %950 = sbr.rel (%p948) target = $region72
      $region71: #{bottleneck_forward.5} parent=55 // pred_region
        %s951 = smul.u32 16, %s25
      $region72: #{bottleneck_forward.5} parent=55 // pred_fallthru
        _
    $region56: #{bottleneck_forward.5} parent=5 // pred_fallthru
      _
    %p952 = scmp.le.s32.totalorder 2, %s15
    // Predicated region
    $region73: #{bottleneck_forward.5} parent=5 // pred_check
      %p953 = pneg %p952
    $region74: #{bottleneck_forward.5} parent=5 // pred_check_branch
      %955 = sbr.rel (%p953) target = $region76
    $region75: #{bottleneck_forward.5} parent=5 // pred_region
      %s956 = ssub.s32 %s15, 2
      // Predicated region
      $region77: #{bottleneck_forward.5} parent=75 // pred_check
        %p957 = pneg %p255
      $region78: #{bottleneck_forward.5} parent=75 // pred_check_branch
        %959 = sbr.rel (%p957) target = $region80
      $region79: #{bottleneck_forward.5} parent=75 // pred_region
        %s960 = smul.u32 16, %s27
        %p961 = scmp.lt.s32.totalorder %s960, 63
        %s962 = scalar_select %p961, %s960, 63
        %s963 = smul.addr %s962, 8
        %s964 = scalar_lea.vmem %s9, %s963
      $region80: #{bottleneck_forward.5} parent=75 // pred_fallthru
        _
    $region76: #{bottleneck_forward.5} parent=5 // pred_fallthru
      _
  $region6: #{bottleneck_forward.5} parent=0 // loop_footer
    %s19 = sadd.s32 1, %s15
  $region7: #{bottleneck_forward.5} parent=0 // loop_footer_branch
    %14 = sbr.rel target = $region3
  $region8: #{bottleneck_forward.5} parent=0 // loop_exit
    _

// kernel: bottleneck_forward.4
$region0: #{bottleneck_forward.4}
  #allocation0 [shape = 'u32[]', space=smem, size = 0x4, offset = 0x4, fixed_abs, tag = 'smem constant byte address 0x4 - core index']
  #allocation1 [shape = 'u32[144,128]{1,0:T(1,128)}', space=vmem, size = 0x12000, scoped, tag = 'internal scratch']
  #allocation2 [shape = 'f32[18,18,128]{2,1,0:T(8,128)}', space=vmem, size = 0x36000, scoped, tag = 'scratch operand']
  %s0 = inlined_call_operand.vmem [shape: f32[1,128], index: 0, kind: input, shape index: {}]
  %s1 = inlined_call_operand.vmem [shape: f32[1,128], index: 1, kind: input, shape index: {}]
  %s2 = inlined_call_operand.vmem [shape: f32[1,128], index: 2, kind: input, shape index: {}]
  %s3 = inlined_call_operand.vmem [shape: f32[1,128], index: 3, kind: input, shape index: {}]
  %s4 = inlined_call_operand.vmem [shape: f32[2,16,16,128], index: 4, kind: input, shape index: {}]
  %s5 = inlined_call_operand.vmem [shape: bf16[9,128,128], index: 5, kind: input, shape index: {}]
  %s6 = inlined_call_operand.vmem [shape: f32[2,16,16,128], index: 6, kind: output, shape index: {0}]
  %s7 = inlined_call_operand.vmem [shape: f32[1,128], index: 7, kind: output, shape index: {1}]
  %s8 = inlined_call_operand.vmem [shape: f32[1,128], index: 8, kind: output, shape index: {2}]
  %9 = xla_tuple %s6, %s7, %s8
  %s10 = sld [smem:[#allocation0]]
  $region84: #{bottleneck_forward.4} parent=0
    _
  %s12 = ssub.s32 1, %s10
  %s13 = scalar_select 0, %s12, %s10
  loop: start=0, step=1, limit=4
  $region2: #{bottleneck_forward.4} parent=0 // loop_pre_header
    _
  $region3: #{bottleneck_forward.4} parent=0 // loop_header
    %s15 = sphi 0, %s19
    %p16 = scmp.ge.s32.totalorder %s15, 4
    %s23 = sphi 0, %s23
    %s25 = sphi 0, %s23
    %s26 = sphi 0, %s25
    %s40 = sphi 0, %s26
    %s44 = sphi 0, %s44
    %s46 = sphi 0, %s44
    %s47 = sphi 0, %s46
    %s61 = sphi 0, %s47
    %s65 = sphi 0, %s65
    %s67 = sphi 0, %s65
    %s68 = sphi 0, %s67
    %s82 = sphi 0, %s68
    %s86 = sphi 0, %s86
    %s88 = sphi 0, %s86
    %s89 = sphi 0, %s88
    %s103 = sphi 0, %s89
    %s109 = sphi 0, %s111
    %s112 = sphi 0, %s109
    %s113 = sphi 0, %s112
    %s129 = sphi 0, %s113
    %s133 = sphi 0, %s133
    %s135 = sphi 0, %s133
    %s136 = sphi 0, %s135
    %s150 = sphi 0, %s136
    %s156 = sphi 0, %s158
    %s159 = sphi 0, %s156
    %s160 = sphi 0, %s159
    %s176 = sphi 0, %s160
    %s180 = sphi 0, %s180
    %s182 = sphi 0, %s180
    %s183 = sphi 0, %s182
    %s197 = sphi 0, %s183
    %s201 = sphi 0, %s201
    %s203 = sphi 0, %s201
    %s204 = sphi 0, %s203
    %s218 = sphi 0, %s204
  $region4: #{bottleneck_forward.4} parent=0 // loop_header_branch
    %18 = sbr.rel (%p16) target = $region8
  $region5: #{bottleneck_forward.4} parent=0 // loop_body
    %s20 = ssub.s32 %s15, 1
    %s21 = ssub.s32 %s15, 2
    %s22 = sadd.s32 %s15, 1
    %s24 = sadd.s32 %s23, 1
    %p27 = scmp.eq.s32.totalorder %s15, 1
    %p28 = scmp.ne.s32.totalorder %s23, %s25
    %p29 = scmp.eq.s32.totalorder %s15, 0
    %p30 = por %p28, %p29
    %p31 = scmp.ne.s32.totalorder %s23, %s25
    %p32 = scmp.eq.s32.totalorder %s20, 1
    %p33 = por %p31, %p32
    %p34 = scmp.ne.s32.totalorder %s25, %s26
    %p35 = scmp.eq.s32.totalorder %s20, 0
    %p36 = por %p34, %p35
    %p37 = scmp.ne.s32.totalorder %s25, %s26
    %p38 = scmp.eq.s32.totalorder %s21, 1
    %p39 = por %p37, %p38
    %p41 = scmp.ne.s32.totalorder %s26, %s40
    %p42 = scmp.eq.s32.totalorder %s21, 0
    %p43 = por %p41, %p42
    %s45 = sadd.s32 %s44, 1
    %p48 = scmp.eq.s32.totalorder %s15, 1
    %p49 = scmp.ne.s32.totalorder %s44, %s46
    %p50 = scmp.eq.s32.totalorder %s15, 0
    %p51 = por %p49, %p50
    %p52 = scmp.ne.s32.totalorder %s44, %s46
    %p53 = scmp.eq.s32.totalorder %s20, 1
    %p54 = por %p52, %p53
    %p55 = scmp.ne.s32.totalorder %s46, %s47
    %p56 = scmp.eq.s32.totalorder %s20, 0
    %p57 = por %p55, %p56
    %p58 = scmp.ne.s32.totalorder %s46, %s47
    %p59 = scmp.eq.s32.totalorder %s21, 1
    %p60 = por %p58, %p59
    %p62 = scmp.ne.s32.totalorder %s47, %s61
    %p63 = scmp.eq.s32.totalorder %s21, 0
    %p64 = por %p62, %p63
    %s66 = sadd.s32 %s65, 1
    %p69 = scmp.eq.s32.totalorder %s15, 1
    %p70 = scmp.ne.s32.totalorder %s65, %s67
    %p71 = scmp.eq.s32.totalorder %s15, 0
    %p72 = por %p70, %p71
    %p73 = scmp.ne.s32.totalorder %s65, %s67
    %p74 = scmp.eq.s32.totalorder %s20, 1
    %p75 = por %p73, %p74
    %p76 = scmp.ne.s32.totalorder %s67, %s68
    %p77 = scmp.eq.s32.totalorder %s20, 0
    %p78 = por %p76, %p77
    %p79 = scmp.ne.s32.totalorder %s67, %s68
    %p80 = scmp.eq.s32.totalorder %s21, 1
    %p81 = por %p79, %p80
    %p83 = scmp.ne.s32.totalorder %s68, %s82
    %p84 = scmp.eq.s32.totalorder %s21, 0
    %p85 = por %p83, %p84
    %s87 = sadd.s32 %s86, 1
    %p90 = scmp.eq.s32.totalorder %s15, 1
    %p91 = scmp.ne.s32.totalorder %s86, %s88
    %p92 = scmp.eq.s32.totalorder %s15, 0
    %p93 = por %p91, %p92
    %p94 = scmp.ne.s32.totalorder %s86, %s88
    %p95 = scmp.eq.s32.totalorder %s20, 1
    %p96 = por %p94, %p95
    %p97 = scmp.ne.s32.totalorder %s88, %s89
    %p98 = scmp.eq.s32.totalorder %s20, 0
    %p99 = por %p97, %p98
    %p100 = scmp.ne.s32.totalorder %s88, %s89
    %p101 = scmp.eq.s32.totalorder %s21, 1
    %p102 = por %p100, %p101
    %p104 = scmp.ne.s32.totalorder %s89, %s103
    %p105 = scmp.eq.s32.totalorder %s21, 0
    %p106 = por %p104, %p105
    %s107 = ssub.s32 %s15, %s22
    %p108 = scmp.eq.s32.totalorder %s107, 0
    %s110 = sadd.s32 %s109, 1
    %s111 = scalar_select %p108, %s109, %s110
    %p114 = pneg %p108
    %p115 = scmp.eq.s32.totalorder %s15, 1
    %p116 = por %p114, %p115
    %p117 = scmp.ne.s32.totalorder %s109, %s112
    %p118 = scmp.eq.s32.totalorder %s15, 0
    %p119 = por %p117, %p118
    %p120 = scmp.ne.s32.totalorder %s109, %s112
    %p121 = scmp.eq.s32.totalorder %s20, 1
    %p122 = por %p120, %p121
    %p123 = scmp.ne.s32.totalorder %s112, %s113
    %p124 = scmp.eq.s32.totalorder %s20, 0
    %p125 = por %p123, %p124
    %p126 = scmp.ne.s32.totalorder %s112, %s113
    %p127 = scmp.eq.s32.totalorder %s21, 1
    %p128 = por %p126, %p127
    %p130 = scmp.ne.s32.totalorder %s113, %s129
    %p131 = scmp.eq.s32.totalorder %s21, 0
    %p132 = por %p130, %p131
    %s134 = sadd.s32 %s133, 1
    %p137 = scmp.eq.s32.totalorder %s15, 1
    %p138 = scmp.ne.s32.totalorder %s133, %s135
    %p139 = scmp.eq.s32.totalorder %s15, 0
    %p140 = por %p138, %p139
    %p141 = scmp.ne.s32.totalorder %s133, %s135
    %p142 = scmp.eq.s32.totalorder %s20, 1
    %p143 = por %p141, %p142
    %p144 = scmp.ne.s32.totalorder %s135, %s136
    %p145 = scmp.eq.s32.totalorder %s20, 0
    %p146 = por %p144, %p145
    %p147 = scmp.ne.s32.totalorder %s135, %s136
    %p148 = scmp.eq.s32.totalorder %s21, 1
    %p149 = por %p147, %p148
    %p151 = scmp.ne.s32.totalorder %s136, %s150
    %p152 = scmp.eq.s32.totalorder %s21, 0
    %p153 = por %p151, %p152
    %s154 = ssub.s32 %s15, %s22
    %p155 = scmp.eq.s32.totalorder %s154, 0
    %s157 = sadd.s32 %s156, 1
    %s158 = scalar_select %p155, %s156, %s157
    %p161 = pneg %p155
    %p162 = scmp.eq.s32.totalorder %s15, 1
    %p163 = por %p161, %p162
    %p164 = scmp.ne.s32.totalorder %s156, %s159
    %p165 = scmp.eq.s32.totalorder %s15, 0
    %p166 = por %p164, %p165
    %p167 = scmp.ne.s32.totalorder %s156, %s159
    %p168 = scmp.eq.s32.totalorder %s20, 1
    %p169 = por %p167, %p168
    %p170 = scmp.ne.s32.totalorder %s159, %s160
    %p171 = scmp.eq.s32.totalorder %s20, 0
    %p172 = por %p170, %p171
    %p173 = scmp.ne.s32.totalorder %s159, %s160
    %p174 = scmp.eq.s32.totalorder %s21, 1
    %p175 = por %p173, %p174
    %p177 = scmp.ne.s32.totalorder %s160, %s176
    %p178 = scmp.eq.s32.totalorder %s21, 0
    %p179 = por %p177, %p178
    %s181 = sadd.s32 %s180, 1
    %p184 = scmp.eq.s32.totalorder %s15, 1
    %p185 = scmp.ne.s32.totalorder %s180, %s182
    %p186 = scmp.eq.s32.totalorder %s15, 0
    %p187 = por %p185, %p186
    %p188 = scmp.ne.s32.totalorder %s180, %s182
    %p189 = scmp.eq.s32.totalorder %s20, 1
    %p190 = por %p188, %p189
    %p191 = scmp.ne.s32.totalorder %s182, %s183
    %p192 = scmp.eq.s32.totalorder %s20, 0
    %p193 = por %p191, %p192
    %p194 = scmp.ne.s32.totalorder %s182, %s183
    %p195 = scmp.eq.s32.totalorder %s21, 1
    %p196 = por %p194, %p195
    %p198 = scmp.ne.s32.totalorder %s183, %s197
    %p199 = scmp.eq.s32.totalorder %s21, 0
    %p200 = por %p198, %p199
    %s202 = sadd.s32 %s201, 1
    %p205 = scmp.eq.s32.totalorder %s15, 1
    %p206 = scmp.ne.s32.totalorder %s201, %s203
    %p207 = scmp.eq.s32.totalorder %s15, 0
    %p208 = por %p206, %p207
    %p209 = scmp.ne.s32.totalorder %s201, %s203
    %p210 = scmp.eq.s32.totalorder %s20, 1
    %p211 = por %p209, %p210
    %p212 = scmp.ne.s32.totalorder %s203, %s204
    %p213 = scmp.eq.s32.totalorder %s20, 0
    %p214 = por %p212, %p213
    %p215 = scmp.ne.s32.totalorder %s203, %s204
    %p216 = scmp.eq.s32.totalorder %s21, 1
    %p217 = por %p215, %p216
    %p219 = scmp.ne.s32.totalorder %s204, %s218
    %p220 = scmp.eq.s32.totalorder %s21, 0
    %p221 = por %p219, %p220
    %p222 = scmp.le.s32.totalorder 1, %s15
    %p223 = scmp.lt.s32.totalorder %s15, 3
    %p224 = pnand %p222, %p223
    %p225 = pneg %p224
    // Predicated region
    $region9: #{bottleneck_forward.4} parent=5 // pred_check
      _
    $region10: #{bottleneck_forward.4} parent=5 // pred_check_branch
      %227 = sbr.rel (%p224) target = $region12
    $region11: #{bottleneck_forward.4} parent=5 // pred_region
      %s228 = ssub.s32 %s15, 1
      // Predicated region
      $region13: #{bottleneck_forward.4} parent=11 // pred_check
        %p229 = pneg %p36
      $region14: #{bottleneck_forward.4} parent=11 // pred_check_branch
        %231 = sbr.rel (%p229) target = $region16
      $region15: #{bottleneck_forward.4} parent=11 // pred_region
        _
      $region16: #{bottleneck_forward.4} parent=11 // pred_fallthru
        _
      // Predicated region
      $region17: #{bottleneck_forward.4} parent=11 // pred_check
        %p232 = pneg %p57
      $region18: #{bottleneck_forward.4} parent=11 // pred_check_branch
        %234 = sbr.rel (%p232) target = $region20
      $region19: #{bottleneck_forward.4} parent=11 // pred_region
        _
      $region20: #{bottleneck_forward.4} parent=11 // pred_fallthru
        _
      // Predicated region
      $region21: #{bottleneck_forward.4} parent=11 // pred_check
        %p235 = pneg %p78
      $region22: #{bottleneck_forward.4} parent=11 // pred_check_branch
        %237 = sbr.rel (%p235) target = $region24
      $region23: #{bottleneck_forward.4} parent=11 // pred_region
        _
      $region24: #{bottleneck_forward.4} parent=11 // pred_fallthru
        _
      // Predicated region
      $region25: #{bottleneck_forward.4} parent=11 // pred_check
        %p238 = pneg %p99
      $region26: #{bottleneck_forward.4} parent=11 // pred_check_branch
        %240 = sbr.rel (%p238) target = $region28
      $region27: #{bottleneck_forward.4} parent=11 // pred_region
        _
      $region28: #{bottleneck_forward.4} parent=11 // pred_fallthru
        _
      // Predicated region
      $region29: #{bottleneck_forward.4} parent=11 // pred_check
        %p241 = pneg %p146
      $region30: #{bottleneck_forward.4} parent=11 // pred_check_branch
        %243 = sbr.rel (%p241) target = $region32
      $region31: #{bottleneck_forward.4} parent=11 // pred_region
        _
      $region32: #{bottleneck_forward.4} parent=11 // pred_fallthru
        _
    $region12: #{bottleneck_forward.4} parent=5 // pred_fallthru
      _
    %p244 = scmp.lt.s32.totalorder %s15, 2
    // Predicated region
    $region33: #{bottleneck_forward.4} parent=5 // pred_check
      %p245 = pneg %p244
    $region34: #{bottleneck_forward.4} parent=5 // pred_check_branch
      %247 = sbr.rel (%p245) target = $region36
    $region35: #{bottleneck_forward.4} parent=5 // pred_region
      // Predicated region
      $region37: #{bottleneck_forward.4} parent=35 // pred_check
        %p248 = pneg %p119
      $region38: #{bottleneck_forward.4} parent=35 // pred_check_branch
        %250 = sbr.rel (%p248) target = $region40
      $region39: #{bottleneck_forward.4} parent=35 // pred_region
        %p251 = scmp.lt.s32.totalorder %s15, 1
        %s252 = scalar_select %p251, %s15, 1
        %s253 = smul.addr %s252, 32
        %s254 = smul.addr %s253, 8
        %s255 = scalar_lea.vmem %s4, %s254
      $region40: #{bottleneck_forward.4} parent=35 // pred_fallthru
        _
    $region36: #{bottleneck_forward.4} parent=5 // pred_fallthru
      _
    %p256 = scmp.le.s32.totalorder 1, %s15
    %p257 = scmp.lt.s32.totalorder %s15, 3
    %p258 = pnand %p256, %p257
    %p259 = pneg %p258
    // Predicated region
    $region41: #{bottleneck_forward.4} parent=5 // pred_check
      _
    $region42: #{bottleneck_forward.4} parent=5 // pred_check_branch
      %261 = sbr.rel (%p258) target = $region44
    $region43: #{bottleneck_forward.4} parent=5 // pred_region
      %s262 = ssub.s32 %s15, 1
      %p263 = pneg %p36
      %p264 = pneg %p33
      %p265 = pneg %p57
      %p266 = pneg %p54
      %p267 = pneg %p78
      %p268 = pneg %p75
      %p269 = pneg %p99
      %p270 = pneg %p96
      %p271 = scmp.lt.s32.totalorder %s20, 1
      %s272 = scalar_select %p271, %s20, 1
      %s273 = smul.addr %s272, 32
      %s274 = smul.addr %s273, 8
      %s275 = scalar_lea.vmem %s4, %s274
      %p276 = pneg %p125
      %p277 = pneg %p122
      %p278 = pneg %p146
      %p279 = pneg %p143
      %p280 = pneg %p172
      %p281 = pneg %p169
      %p282 = scmp.lt.s32.totalorder %s20, 1
      %s283 = scalar_select %p282, %s20, 1
      %s284 = smul.addr %s283, 32
      %s285 = smul.addr %s284, 8
      %s286 = scalar_lea.vmem %s6, %s285
      %p287 = pneg %p193
      %p288 = pneg %p190
      %p289 = pneg %p214
      %p290 = pneg %p211
      %p291 = scmp.lt.s32.totalorder %s20, 1
      %s292 = scalar_select %p291, %s20, 1
      %s293 = smul.addr %s292, 32
      %s294 = smul.addr %s293, 8
      %s295 = scalar_lea.vmem %s4, %s294
      %p296 = scmp.lt.s32.totalorder %s20, 1
      %s297 = scalar_select %p296, %s20, 1
      %s298 = smul.addr %s297, 32
      %s299 = smul.addr %s298, 8
      %s300 = scalar_lea.vmem %s6, %s299
      %v302 = vld [vmem:[%s0] sm:$0x1]
      %v303 = vmul.f32 %v302, 0.001953125
      %v304 = vld [vmem:[%s1] sm:$0x1]
      %v305 = vmul.f32 %v304, 0.001953125
      %v306 = vmul.f32 %v303, %v303
      %v307 = vsub.f32 %v305, %v306
      %v308 = vadd.f32 %v307, 1e-05
      %v309 = vrsqrt.pop %v308
      %v310 = vld [vmem:[%s2] sm:$0x1]
      %v311 = vmul.f32 %v310, %v309
      %v312 = vld [vmem:[%s3] sm:$0x1]
      %v313 = vmul.f32 %v303, %v310
      %v314 = vmul.f32 %v313, %v309
      %v315 = vsub.f32 %v312, %v314
      %v316 = vld [vmem:[%s295] sm:$0xff]
      %v317 = vld [vmem:[%s295 + $0x8] sm:$0xff]
      %v318 = vld [vmem:[%s295 + $0x10] sm:$0xff]
      %v319 = vld [vmem:[%s295 + $0x18] sm:$0xff]
      %v320 = vld [vmem:[%s295 + $0x20] sm:$0xff]
      %v321 = vld [vmem:[%s295 + $0x28] sm:$0xff]
      %v322 = vld [vmem:[%s295 + $0x30] sm:$0xff]
      %v323 = vld [vmem:[%s295 + $0x38] sm:$0xff]
      %v324 = vld [vmem:[%s295 + $0x40] sm:$0xff]
      %v325 = vld [vmem:[%s295 + $0x48] sm:$0xff]
      %v326 = vld [vmem:[%s295 + $0x50] sm:$0xff]
      %v327 = vld [vmem:[%s295 + $0x58] sm:$0xff]
      %v328 = vld [vmem:[%s295 + $0x60] sm:$0xff]
      %v329 = vld [vmem:[%s295 + $0x68] sm:$0xff]
      %v330 = vld [vmem:[%s295 + $0x70] sm:$0xff]
      %v331 = vld [vmem:[%s295 + $0x78] sm:$0xff]
      %v332 = vld [vmem:[%s295 + $0x80] sm:$0xff]
      %v333 = vld [vmem:[%s295 + $0x88] sm:$0xff]
      %v334 = vld [vmem:[%s295 + $0x90] sm:$0xff]
      %v335 = vld [vmem:[%s295 + $0x98] sm:$0xff]
      %v336 = vld [vmem:[%s295 + $0xa0] sm:$0xff]
      %v337 = vld [vmem:[%s295 + $0xa8] sm:$0xff]
      %v338 = vld [vmem:[%s295 + $0xb0] sm:$0xff]
      %v339 = vld [vmem:[%s295 + $0xb8] sm:$0xff]
      %v340 = vld [vmem:[%s295 + $0xc0] sm:$0xff]
      %v341 = vld [vmem:[%s295 + $0xc8] sm:$0xff]
      %v342 = vld [vmem:[%s295 + $0xd0] sm:$0xff]
      %v343 = vld [vmem:[%s295 + $0xd8] sm:$0xff]
      %v344 = vld [vmem:[%s295 + $0xe0] sm:$0xff]
      %v345 = vld [vmem:[%s295 + $0xe8] sm:$0xff]
      %v346 = vld [vmem:[%s295 + $0xf0] sm:$0xff]
      %v347 = vld [vmem:[%s295 + $0xf8] sm:$0xff]
      %v349 = vlaneseq
      %v350 = vshrl.u32 %v349, 7
      %v351 = vsub.s32 0, %v350
      %v352 = vrot.slane %v311, %v351
      %v354 = vmul.f32 %v316, %v352
      %v355 = vmul.f32 %v317, %v352
      %v356 = vmul.f32 %v318, %v352
      %v357 = vmul.f32 %v319, %v352
      %v358 = vmul.f32 %v320, %v352
      %v359 = vmul.f32 %v321, %v352
      %v360 = vmul.f32 %v322, %v352
      %v361 = vmul.f32 %v323, %v352
      %v362 = vmul.f32 %v324, %v352
      %v363 = vmul.f32 %v325, %v352
      %v364 = vmul.f32 %v326, %v352
      %v365 = vmul.f32 %v327, %v352
      %v366 = vmul.f32 %v328, %v352
      %v367 = vmul.f32 %v329, %v352
      %v368 = vmul.f32 %v330, %v352
      %v369 = vmul.f32 %v331, %v352
      %v370 = vmul.f32 %v332, %v352
      %v371 = vmul.f32 %v333, %v352
      %v372 = vmul.f32 %v334, %v352
      %v373 = vmul.f32 %v335, %v352
      %v374 = vmul.f32 %v336, %v352
      %v375 = vmul.f32 %v337, %v352
      %v376 = vmul.f32 %v338, %v352
      %v377 = vmul.f32 %v339, %v352
      %v378 = vmul.f32 %v340, %v352
      %v379 = vmul.f32 %v341, %v352
      %v380 = vmul.f32 %v342, %v352
      %v381 = vmul.f32 %v343, %v352
      %v382 = vmul.f32 %v344, %v352
      %v383 = vmul.f32 %v345, %v352
      %v384 = vmul.f32 %v346, %v352
      %v385 = vmul.f32 %v347, %v352
      %v387 = vlaneseq
      %v388 = vshrl.u32 %v387, 7
      %v389 = vsub.s32 0, %v388
      %v390 = vrot.slane %v315, %v389
      %v392 = vadd.f32 %v354, %v390
      %v393 = vadd.f32 %v355, %v390
      %v394 = vadd.f32 %v356, %v390
      %v395 = vadd.f32 %v357, %v390
      %v396 = vadd.f32 %v358, %v390
      %v397 = vadd.f32 %v359, %v390
      %v398 = vadd.f32 %v360, %v390
      %v399 = vadd.f32 %v361, %v390
      %v400 = vadd.f32 %v362, %v390
      %v401 = vadd.f32 %v363, %v390
      %v402 = vadd.f32 %v364, %v390
      %v403 = vadd.f32 %v365, %v390
      %v404 = vadd.f32 %v366, %v390
      %v405 = vadd.f32 %v367, %v390
      %v406 = vadd.f32 %v368, %v390
      %v407 = vadd.f32 %v369, %v390
      %v408 = vadd.f32 %v370, %v390
      %v409 = vadd.f32 %v371, %v390
      %v410 = vadd.f32 %v372, %v390
      %v411 = vadd.f32 %v373, %v390
      %v412 = vadd.f32 %v374, %v390
      %v413 = vadd.f32 %v375, %v390
      %v414 = vadd.f32 %v376, %v390
      %v415 = vadd.f32 %v377, %v390
      %v416 = vadd.f32 %v378, %v390
      %v417 = vadd.f32 %v379, %v390
      %v418 = vadd.f32 %v380, %v390
      %v419 = vadd.f32 %v381, %v390
      %v420 = vadd.f32 %v382, %v390
      %v421 = vadd.f32 %v383, %v390
      %v422 = vadd.f32 %v384, %v390
      %v423 = vadd.f32 %v385, %v390
      %v424 = vmax.f32 %v392, 0.0
      %v425 = vmax.f32 %v393, 0.0
      %v426 = vmax.f32 %v394, 0.0
      %v427 = vmax.f32 %v395, 0.0
      %v428 = vmax.f32 %v396, 0.0
      %v429 = vmax.f32 %v397, 0.0
      %v430 = vmax.f32 %v398, 0.0
      %v431 = vmax.f32 %v399, 0.0
      %v432 = vmax.f32 %v400, 0.0
      %v433 = vmax.f32 %v401, 0.0
      %v434 = vmax.f32 %v402, 0.0
      %v435 = vmax.f32 %v403, 0.0
      %v436 = vmax.f32 %v404, 0.0
      %v437 = vmax.f32 %v405, 0.0
      %v438 = vmax.f32 %v406, 0.0
      %v439 = vmax.f32 %v407, 0.0
      %v440 = vmax.f32 %v408, 0.0
      %v441 = vmax.f32 %v409, 0.0
      %v442 = vmax.f32 %v410, 0.0
      %v443 = vmax.f32 %v411, 0.0
      %v444 = vmax.f32 %v412, 0.0
      %v445 = vmax.f32 %v413, 0.0
      %v446 = vmax.f32 %v414, 0.0
      %v447 = vmax.f32 %v415, 0.0
      %v448 = vmax.f32 %v416, 0.0
      %v449 = vmax.f32 %v417, 0.0
      %v450 = vmax.f32 %v418, 0.0
      %v451 = vmax.f32 %v419, 0.0
      %v452 = vmax.f32 %v420, 0.0
      %v453 = vmax.f32 %v421, 0.0
      %v454 = vmax.f32 %v422, 0.0
      %v455 = vmax.f32 %v423, 0.0
      %456 = vst [vmem:[#allocation2] sm:$0xff] 0.0
      %457 = vst [vmem:[#allocation2 + $0x8] sm:$0xff] 0.0
      %458 = vst [vmem:[#allocation2 + $0x10] sm:$0x3] 0.0
      %459 = vst [vmem:[#allocation2 + $0x18] sm:$0xff] 0.0
      %460 = vst [vmem:[#allocation2 + $0x20] sm:$0xff] 0.0
      %461 = vst [vmem:[#allocation2 + $0x28] sm:$0x3] 0.0
      %462 = vst [vmem:[#allocation2 + $0x30] sm:$0xff] 0.0
      %463 = vst [vmem:[#allocation2 + $0x38] sm:$0xff] 0.0
      %464 = vst [vmem:[#allocation2 + $0x40] sm:$0x3] 0.0
      %465 = vst [vmem:[#allocation2 + $0x48] sm:$0xff] 0.0
      %466 = vst [vmem:[#allocation2 + $0x50] sm:$0xff] 0.0
      %467 = vst [vmem:[#allocation2 + $0x58] sm:$0x3] 0.0
      %468 = vst [vmem:[#allocation2 + $0x60] sm:$0xff] 0.0
      %469 = vst [vmem:[#allocation2 + $0x68] sm:$0xff] 0.0
      %470 = vst [vmem:[#allocation2 + $0x70] sm:$0x3] 0.0
      %471 = vst [vmem:[#allocation2 + $0x78] sm:$0xff] 0.0
      %472 = vst [vmem:[#allocation2 + $0x80] sm:$0xff] 0.0
      %473 = vst [vmem:[#allocation2 + $0x88] sm:$0x3] 0.0
      %474 = vst [vmem:[#allocation2 + $0x90] sm:$0xff] 0.0
      %475 = vst [vmem:[#allocation2 + $0x98] sm:$0xff] 0.0
      %476 = vst [vmem:[#allocation2 + $0xa0] sm:$0x3] 0.0
      %477 = vst [vmem:[#allocation2 + $0xa8] sm:$0xff] 0.0
      %478 = vst [vmem:[#allocation2 + $0xb0] sm:$0xff] 0.0
      %479 = vst [vmem:[#allocation2 + $0xb8] sm:$0x3] 0.0
      %480 = vst [vmem:[#allocation2 + $0xc0] sm:$0xff] 0.0
      %481 = vst [vmem:[#allocation2 + $0xc8] sm:$0xff] 0.0
      %482 = vst [vmem:[#allocation2 + $0xd0] sm:$0x3] 0.0
      %483 = vst [vmem:[#allocation2 + $0xd8] sm:$0xff] 0.0
      %484 = vst [vmem:[#allocation2 + $0xe0] sm:$0xff] 0.0
      %485 = vst [vmem:[#allocation2 + $0xe8] sm:$0x3] 0.0
      %486 = vst [vmem:[#allocation2 + $0xf0] sm:$0xff] 0.0
      %487 = vst [vmem:[#allocation2 + $0xf8] sm:$0xff] 0.0
      %488 = vst [vmem:[#allocation2 + $0x100] sm:$0x3] 0.0
      %489 = vst [vmem:[#allocation2 + $0x108] sm:$0xff] 0.0
      %490 = vst [vmem:[#allocation2 + $0x110] sm:$0xff] 0.0
      %491 = vst [vmem:[#allocation2 + $0x118] sm:$0x3] 0.0
      %492 = vst [vmem:[#allocation2 + $0x120] sm:$0xff] 0.0
      %493 = vst [vmem:[#allocation2 + $0x128] sm:$0xff] 0.0
      %494 = vst [vmem:[#allocation2 + $0x130] sm:$0x3] 0.0
      %495 = vst [vmem:[#allocation2 + $0x138] sm:$0xff] 0.0
      %496 = vst [vmem:[#allocation2 + $0x140] sm:$0xff] 0.0
      %497 = vst [vmem:[#allocation2 + $0x148] sm:$0x3] 0.0
      %498 = vst [vmem:[#allocation2 + $0x150] sm:$0xff] 0.0
      %499 = vst [vmem:[#allocation2 + $0x158] sm:$0xff] 0.0
      %500 = vst [vmem:[#allocation2 + $0x160] sm:$0x3] 0.0
      %501 = vst [vmem:[#allocation2 + $0x168] sm:$0xff] 0.0
      %502 = vst [vmem:[#allocation2 + $0x170] sm:$0xff] 0.0
      %503 = vst [vmem:[#allocation2 + $0x178] sm:$0x3] 0.0
      %504 = vst [vmem:[#allocation2 + $0x180] sm:$0xff] 0.0
      %505 = vst [vmem:[#allocation2 + $0x188] sm:$0xff] 0.0
      %506 = vst [vmem:[#allocation2 + $0x190] sm:$0x3] 0.0
      %507 = vst [vmem:[#allocation2 + $0x198] sm:$0xff] 0.0
      %508 = vst [vmem:[#allocation2 + $0x1a0] sm:$0xff] 0.0
      %509 = vst [vmem:[#allocation2 + $0x1a8] sm:$0x3] 0.0
      %s510 = scalar_lea.vmem [#allocation2], 24
      %511 = vst [vmem:[%s510 + $0x1] sm:$0xff] %v424
      %512 = vst [vmem:[%s510 + $0x9] sm:$0xff] %v425
      %513 = vst [vmem:[%s510 + $0x19] sm:$0xff] %v426
      %514 = vst [vmem:[%s510 + $0x21] sm:$0xff] %v427
      %515 = vst [vmem:[%s510 + $0x31] sm:$0xff] %v428
      %516 = vst [vmem:[%s510 + $0x39] sm:$0xff] %v429
      %517 = vst [vmem:[%s510 + $0x49] sm:$0xff] %v430
      %518 = vst [vmem:[%s510 + $0x51] sm:$0xff] %v431
      %519 = vst [vmem:[%s510 + $0x61] sm:$0xff] %v432
      %520 = vst [vmem:[%s510 + $0x69] sm:$0xff] %v433
      %521 = vst [vmem:[%s510 + $0x79] sm:$0xff] %v434
      %522 = vst [vmem:[%s510 + $0x81] sm:$0xff] %v435
      %523 = vst [vmem:[%s510 + $0x91] sm:$0xff] %v436
      %524 = vst [vmem:[%s510 + $0x99] sm:$0xff] %v437
      %525 = vst [vmem:[%s510 + $0xa9] sm:$0xff] %v438
      %526 = vst [vmem:[%s510 + $0xb1] sm:$0xff] %v439
      %527 = vst [vmem:[%s510 + $0xc1] sm:$0xff] %v440
      %528 = vst [vmem:[%s510 + $0xc9] sm:$0xff] %v441
      %529 = vst [vmem:[%s510 + $0xd9] sm:$0xff] %v442
      %530 = vst [vmem:[%s510 + $0xe1] sm:$0xff] %v443
      %531 = vst [vmem:[%s510 + $0xf1] sm:$0xff] %v444
      %532 = vst [vmem:[%s510 + $0xf9] sm:$0xff] %v445
      %533 = vst [vmem:[%s510 + $0x109] sm:$0xff] %v446
      %534 = vst [vmem:[%s510 + $0x111] sm:$0xff] %v447
      %535 = vst [vmem:[%s510 + $0x121] sm:$0xff] %v448
      %536 = vst [vmem:[%s510 + $0x129] sm:$0xff] %v449
      %537 = vst [vmem:[%s510 + $0x139] sm:$0xff] %v450
      %538 = vst [vmem:[%s510 + $0x141] sm:$0xff] %v451
      %539 = vst [vmem:[%s510 + $0x151] sm:$0xff] %v452
      %540 = vst [vmem:[%s510 + $0x159] sm:$0xff] %v453
      %541 = vst [vmem:[%s510 + $0x169] sm:$0xff] %v454
      %542 = vst [vmem:[%s510 + $0x171] sm:$0xff] %v455
      loop: start=0, step=1, limit=16
      $region45: #{bottleneck_forward.4} parent=43 // loop_pre_header
        _
      $region46: #{bottleneck_forward.4} parent=43 // loop_header
        %s544 = sphi 0, %s548
        %p545 = scmp.ge.s32.totalorder %s544, 16
        %v549 = vphi 0.0, %v1611
        %v550 = vphi 0.0, %v1621
      $region47: #{bottleneck_forward.4} parent=43 // loop_header_branch
        %547 = sbr.rel (%p545) target = $region51
      $region48: #{bottleneck_forward.4} parent=43 // loop_body
        %s551 = smul.u32 %s544, 24
        %s552 = scalar_lea.vmem [#allocation2], %s551
        %v553 = vld [vmem:[%s552] sm:$0xff]
        %v554 = vld [vmem:[%s552 + $0x8] sm:$0xff]
        %v555 = vld [vmem:[%s552 + $0x10] sm:$0x3]
        %v556 = vpack.c.bf16 %v554, %v553
        %v557 = vld [vmem:[%s5] sm:$0xf]
        %v558 = vld [vmem:[%s5 + $0x4] sm:$0xf]
        %v559 = vld [vmem:[%s5 + $0x8] sm:$0xf]
        %v560 = vld [vmem:[%s5 + $0xc] sm:$0xf]
        %v561 = vld [vmem:[%s5 + $0x10] sm:$0xf]
        %v562 = vld [vmem:[%s5 + $0x14] sm:$0xf]
        %v563 = vld [vmem:[%s5 + $0x18] sm:$0xf]
        %v564 = vld [vmem:[%s5 + $0x1c] sm:$0xf]
        %v565 = vld [vmem:[%s5 + $0x20] sm:$0xf]
        %v566 = vld [vmem:[%s5 + $0x24] sm:$0xf]
        %v567 = vld [vmem:[%s5 + $0x28] sm:$0xf]
        %v568 = vld [vmem:[%s5 + $0x2c] sm:$0xf]
        %v569 = vld [vmem:[%s5 + $0x30] sm:$0xf]
        %v570 = vld [vmem:[%s5 + $0x34] sm:$0xf]
        %v571 = vld [vmem:[%s5 + $0x38] sm:$0xf]
        %v572 = vld [vmem:[%s5 + $0x3c] sm:$0xf]
        %v573 = vpack.c.bf16 %v555, %v555
        %s574 = scalar_lea.vmem %s5, 64
        %v575 = vld [vmem:[%s574] sm:$0xf]
        %v576 = vld [vmem:[%s574 + $0x4] sm:$0xf]
        %v577 = vld [vmem:[%s574 + $0x8] sm:$0xf]
        %v578 = vld [vmem:[%s574 + $0xc] sm:$0xf]
        %v579 = vld [vmem:[%s574 + $0x10] sm:$0xf]
        %v580 = vld [vmem:[%s574 + $0x14] sm:$0xf]
        %v581 = vld [vmem:[%s574 + $0x18] sm:$0xf]
        %v582 = vld [vmem:[%s574 + $0x1c] sm:$0xf]
        %v583 = vld [vmem:[%s574 + $0x20] sm:$0xf]
        %v584 = vld [vmem:[%s574 + $0x24] sm:$0xf]
        %v585 = vld [vmem:[%s574 + $0x28] sm:$0xf]
        %v586 = vld [vmem:[%s574 + $0x2c] sm:$0xf]
        %v587 = vld [vmem:[%s574 + $0x30] sm:$0xf]
        %v588 = vld [vmem:[%s574 + $0x34] sm:$0xf]
        %v589 = vld [vmem:[%s574 + $0x38] sm:$0xf]
        %v590 = vld [vmem:[%s574 + $0x3c] sm:$0xf]
        %vm591 = vsmask.f32 7424
        %v593 = vshrl.u32 %v556, 16
        %v595 = vshll.u32 %v556, 16
        %v597 = vrot.slane %v595, 1
        %v598 = vor.u32 %v593, %v597
        %v600 = vshll.u32 %v573, 16
        %v602 = vrot.slane %v600, 1
        %v603 = vsel %vm591, %v598, %v602
        %v621 = vunpack.c.l.b16 %v575
        %v622 = vunpack.c.l.b16 %v576
        %v623 = vunpack.c.l.b16 %v577
        %v624 = vunpack.c.l.b16 %v578
        %v625 = vunpack.c.l.b16 %v579
        %v626 = vunpack.c.l.b16 %v580
        %v627 = vunpack.c.l.b16 %v581
        %v628 = vunpack.c.l.b16 %v582
        %v629 = vunpack.c.l.b16 %v583
        %v630 = vunpack.c.l.b16 %v584
        %v631 = vunpack.c.l.b16 %v585
        %v632 = vunpack.c.l.b16 %v586
        %v633 = vunpack.c.l.b16 %v587
        %v634 = vunpack.c.l.b16 %v588
        %v635 = vunpack.c.l.b16 %v589
        %v636 = vunpack.c.l.b16 %v590
        %v637 = vpack.c.b16 %v622, %v621
        %v638 = vpack.c.b16 %v624, %v623
        %v639 = vpack.c.b16 %v626, %v625
        %v640 = vpack.c.b16 %v628, %v627
        %v641 = vpack.c.b16 %v630, %v629
        %v642 = vpack.c.b16 %v632, %v631
        %v643 = vpack.c.b16 %v634, %v633
        %v644 = vpack.c.b16 %v636, %v635
        %653 = vmatprep.subr.bf16.mxu0 0
        %654 = vmatpush1.bf16.msra.mxu0 %v644
        %655 = vmatprep.subr.bf16.mxu0 0
        %656 = vmatpush1.bf16.msra.mxu0 %v643
        %657 = vmatprep.subr.bf16.mxu0 0
        %658 = vmatpush1.bf16.msra.mxu0 %v642
        %659 = vmatprep.subr.bf16.mxu0 0
        %660 = vmatpush1.bf16.msra.mxu0 %v641
        %661 = vmatprep.subr.bf16.mxu0 0
        %662 = vmatpush1.bf16.msra.mxu0 %v640
        %663 = vmatprep.subr.bf16.mxu0 0
        %664 = vmatpush1.bf16.msra.mxu0 %v639
        %665 = vmatprep.subr.bf16.mxu0 0
        %666 = vmatpush1.bf16.msra.mxu0 %v638
        %667 = vmatprep.subr.bf16.mxu0 0
        %668 = vmatpush1.bf16.msra.mxu0 %v637
        %669 = vmatprep.subr.bf16.mxu0 0
        %670 = vmatpush2.bf16.msra.mxu0 0
        %671 = vmatprep.subr.bf16.mxu0 0
        %672 = vmatpush2.bf16.msra.mxu0 0
        %673 = vmatprep.subr.bf16.mxu0 0
        %674 = vmatpush2.bf16.msra.mxu0 0
        %675 = vmatprep.subr.bf16.mxu0 0
        %676 = vmatpush2.bf16.msra.mxu0 0
        %677 = vmatprep.subr.bf16.mxu0 0
        %678 = vmatpush2.bf16.msra.mxu0 0
        %679 = vmatprep.subr.bf16.mxu0 0
        %680 = vmatpush2.bf16.msra.mxu0 0
        %681 = vmatprep.subr.bf16.mxu0 0
        %682 = vmatpush2.bf16.msra.mxu0 0
        %683 = vmatprep.subr.bf16.mxu0 0
        %684 = vmatpush2.bf16.msra.mxu0 0
        %685 = vmatprep.mubr.bf16.mxu0 0
        %686 = vmatmul.mubr.bf16.gmra.mxu0 %v603
        %v687 = vpop.f32.mrf.mxu0
        %v688 = vadd.f32 0.0, %v687
        %v689 = vpop.f32.mrf.mxu0
        %v690 = vpop.f32.mrf.mxu0
        %v691 = vadd.f32 0.0, %v690
        %v692 = vpop.f32.mrf.mxu0
        %693 = vdwg.mxu0
        %v710 = vunpack.c.l.b16 %v557
        %v711 = vunpack.c.l.b16 %v558
        %v712 = vunpack.c.l.b16 %v559
        %v713 = vunpack.c.l.b16 %v560
        %v714 = vunpack.c.l.b16 %v561
        %v715 = vunpack.c.l.b16 %v562
        %v716 = vunpack.c.l.b16 %v563
        %v717 = vunpack.c.l.b16 %v564
        %v718 = vunpack.c.l.b16 %v565
        %v719 = vunpack.c.l.b16 %v566
        %v720 = vunpack.c.l.b16 %v567
        %v721 = vunpack.c.l.b16 %v568
        %v722 = vunpack.c.l.b16 %v569
        %v723 = vunpack.c.l.b16 %v570
        %v724 = vunpack.c.l.b16 %v571
        %v725 = vunpack.c.l.b16 %v572
        %v726 = vpack.c.b16 %v711, %v710
        %v727 = vpack.c.b16 %v713, %v712
        %v728 = vpack.c.b16 %v715, %v714
        %v729 = vpack.c.b16 %v717, %v716
        %v730 = vpack.c.b16 %v719, %v718
        %v731 = vpack.c.b16 %v721, %v720
        %v732 = vpack.c.b16 %v723, %v722
        %v733 = vpack.c.b16 %v725, %v724
        %742 = vmatprep.subr.bf16.mxu0 0
        %743 = vmatpush1.bf16.msra.mxu0 %v733
        %744 = vmatprep.subr.bf16.mxu0 0
        %745 = vmatpush1.bf16.msra.mxu0 %v732
        %746 = vmatprep.subr.bf16.mxu0 0
        %747 = vmatpush1.bf16.msra.mxu0 %v731
        %748 = vmatprep.subr.bf16.mxu0 0
        %749 = vmatpush1.bf16.msra.mxu0 %v730
        %750 = vmatprep.subr.bf16.mxu0 0
        %751 = vmatpush1.bf16.msra.mxu0 %v729
        %752 = vmatprep.subr.bf16.mxu0 0
        %753 = vmatpush1.bf16.msra.mxu0 %v728
        %754 = vmatprep.subr.bf16.mxu0 0
        %755 = vmatpush1.bf16.msra.mxu0 %v727
        %756 = vmatprep.subr.bf16.mxu0 0
        %757 = vmatpush1.bf16.msra.mxu0 %v726
        %758 = vmatprep.subr.bf16.mxu0 0
        %759 = vmatpush2.bf16.msra.mxu0 0
        %760 = vmatprep.subr.bf16.mxu0 0
        %761 = vmatpush2.bf16.msra.mxu0 0
        %762 = vmatprep.subr.bf16.mxu0 0
        %763 = vmatpush2.bf16.msra.mxu0 0
        %764 = vmatprep.subr.bf16.mxu0 0
        %765 = vmatpush2.bf16.msra.mxu0 0
        %766 = vmatprep.subr.bf16.mxu0 0
        %767 = vmatpush2.bf16.msra.mxu0 0
        %768 = vmatprep.subr.bf16.mxu0 0
        %769 = vmatpush2.bf16.msra.mxu0 0
        %770 = vmatprep.subr.bf16.mxu0 0
        %771 = vmatpush2.bf16.msra.mxu0 0
        %772 = vmatprep.subr.bf16.mxu0 0
        %773 = vmatpush2.bf16.msra.mxu0 0
        %774 = vmatprep.mubr.bf16.mxu0 0
        %775 = vmatmul.mubr.bf16.gmra.mxu0 %v556
        %v776 = vpop.f32.mrf.mxu0
        %v777 = vadd.f32 %v688, %v776
        %v778 = vpop.f32.mrf.mxu0
        %v779 = vpop.f32.mrf.mxu0
        %v780 = vadd.f32 %v691, %v779
        %v781 = vpop.f32.mrf.mxu0
        %782 = vdwg.mxu0
        %s783 = scalar_lea.vmem %s5, 128
        %v784 = vld [vmem:[%s783] sm:$0xf]
        %v785 = vld [vmem:[%s783 + $0x4] sm:$0xf]
        %v786 = vld [vmem:[%s783 + $0x8] sm:$0xf]
        %v787 = vld [vmem:[%s783 + $0xc] sm:$0xf]
        %v788 = vld [vmem:[%s783 + $0x10] sm:$0xf]
        %v789 = vld [vmem:[%s783 + $0x14] sm:$0xf]
        %v790 = vld [vmem:[%s783 + $0x18] sm:$0xf]
        %v791 = vld [vmem:[%s783 + $0x1c] sm:$0xf]
        %v792 = vld [vmem:[%s783 + $0x20] sm:$0xf]
        %v793 = vld [vmem:[%s783 + $0x24] sm:$0xf]
        %v794 = vld [vmem:[%s783 + $0x28] sm:$0xf]
        %v795 = vld [vmem:[%s783 + $0x2c] sm:$0xf]
        %v796 = vld [vmem:[%s783 + $0x30] sm:$0xf]
        %v797 = vld [vmem:[%s783 + $0x34] sm:$0xf]
        %v798 = vld [vmem:[%s783 + $0x38] sm:$0xf]
        %v799 = vld [vmem:[%s783 + $0x3c] sm:$0xf]
        %vm802 = vcmask 1046528
        %v803 = vrot.slane %v556, 1
        %v804 = vrot.slane %v573, 1
        %v805 = vsel %vm802, %v803, %v804
        %v823 = vunpack.c.l.b16 %v784
        %v824 = vunpack.c.l.b16 %v785
        %v825 = vunpack.c.l.b16 %v786
        %v826 = vunpack.c.l.b16 %v787
        %v827 = vunpack.c.l.b16 %v788
        %v828 = vunpack.c.l.b16 %v789
        %v829 = vunpack.c.l.b16 %v790
        %v830 = vunpack.c.l.b16 %v791
        %v831 = vunpack.c.l.b16 %v792
        %v832 = vunpack.c.l.b16 %v793
        %v833 = vunpack.c.l.b16 %v794
        %v834 = vunpack.c.l.b16 %v795
        %v835 = vunpack.c.l.b16 %v796
        %v836 = vunpack.c.l.b16 %v797
        %v837 = vunpack.c.l.b16 %v798
        %v838 = vunpack.c.l.b16 %v799
        %v839 = vpack.c.b16 %v824, %v823
        %v840 = vpack.c.b16 %v826, %v825
        %v841 = vpack.c.b16 %v828, %v827
        %v842 = vpack.c.b16 %v830, %v829
        %v843 = vpack.c.b16 %v832, %v831
        %v844 = vpack.c.b16 %v834, %v833
        %v845 = vpack.c.b16 %v836, %v835
        %v846 = vpack.c.b16 %v838, %v837
        %855 = vmatprep.subr.bf16.mxu0 0
        %856 = vmatpush1.bf16.msra.mxu0 %v846
        %857 = vmatprep.subr.bf16.mxu0 0
        %858 = vmatpush1.bf16.msra.mxu0 %v845
        %859 = vmatprep.subr.bf16.mxu0 0
        %860 = vmatpush1.bf16.msra.mxu0 %v844
        %861 = vmatprep.subr.bf16.mxu0 0
        %862 = vmatpush1.bf16.msra.mxu0 %v843
        %863 = vmatprep.subr.bf16.mxu0 0
        %864 = vmatpush1.bf16.msra.mxu0 %v842
        %865 = vmatprep.subr.bf16.mxu0 0
        %866 = vmatpush1.bf16.msra.mxu0 %v841
        %867 = vmatprep.subr.bf16.mxu0 0
        %868 = vmatpush1.bf16.msra.mxu0 %v840
        %869 = vmatprep.subr.bf16.mxu0 0
        %870 = vmatpush1.bf16.msra.mxu0 %v839
        %871 = vmatprep.subr.bf16.mxu0 0
        %872 = vmatpush2.bf16.msra.mxu0 0
        %873 = vmatprep.subr.bf16.mxu0 0
        %874 = vmatpush2.bf16.msra.mxu0 0
        %875 = vmatprep.subr.bf16.mxu0 0
        %876 = vmatpush2.bf16.msra.mxu0 0
        %877 = vmatprep.subr.bf16.mxu0 0
        %878 = vmatpush2.bf16.msra.mxu0 0
        %879 = vmatprep.subr.bf16.mxu0 0
        %880 = vmatpush2.bf16.msra.mxu0 0
        %881 = vmatprep.subr.bf16.mxu0 0
        %882 = vmatpush2.bf16.msra.mxu0 0
        %883 = vmatprep.subr.bf16.mxu0 0
        %884 = vmatpush2.bf16.msra.mxu0 0
        %885 = vmatprep.subr.bf16.mxu0 0
        %886 = vmatpush2.bf16.msra.mxu0 0
        %887 = vmatprep.mubr.bf16.mxu0 0
        %888 = vmatmul.mubr.bf16.gmra.mxu0 %v805
        %v889 = vpop.f32.mrf.mxu0
        %v890 = vadd.f32 0.0, %v889
        %v891 = vpop.f32.mrf.mxu0
        %v892 = vpop.f32.mrf.mxu0
        %v893 = vadd.f32 0.0, %v892
        %v894 = vpop.f32.mrf.mxu0
        %895 = vdwg.mxu0
        %v896 = vadd.f32 %v777, %v890
        %v897 = vadd.f32 %v780, %v893
        %s898 = sadd.s32 %s544, 1
        %s899 = smul.u32 %s898, 24
        %s900 = scalar_lea.vmem [#allocation2], %s899
        %v901 = vld [vmem:[%s900] sm:$0xff]
        %v902 = vld [vmem:[%s900 + $0x8] sm:$0xff]
        %v903 = vld [vmem:[%s900 + $0x10] sm:$0x3]
        %v904 = vpack.c.bf16 %v902, %v901
        %s905 = scalar_lea.vmem %s5, 192
        %v906 = vld [vmem:[%s905] sm:$0xf]
        %v907 = vld [vmem:[%s905 + $0x4] sm:$0xf]
        %v908 = vld [vmem:[%s905 + $0x8] sm:$0xf]
        %v909 = vld [vmem:[%s905 + $0xc] sm:$0xf]
        %v910 = vld [vmem:[%s905 + $0x10] sm:$0xf]
        %v911 = vld [vmem:[%s905 + $0x14] sm:$0xf]
        %v912 = vld [vmem:[%s905 + $0x18] sm:$0xf]
        %v913 = vld [vmem:[%s905 + $0x1c] sm:$0xf]
        %v914 = vld [vmem:[%s905 + $0x20] sm:$0xf]
        %v915 = vld [vmem:[%s905 + $0x24] sm:$0xf]
        %v916 = vld [vmem:[%s905 + $0x28] sm:$0xf]
        %v917 = vld [vmem:[%s905 + $0x2c] sm:$0xf]
        %v918 = vld [vmem:[%s905 + $0x30] sm:$0xf]
        %v919 = vld [vmem:[%s905 + $0x34] sm:$0xf]
        %v920 = vld [vmem:[%s905 + $0x38] sm:$0xf]
        %v921 = vld [vmem:[%s905 + $0x3c] sm:$0xf]
        %v938 = vunpack.c.l.b16 %v906
        %v939 = vunpack.c.l.b16 %v907
        %v940 = vunpack.c.l.b16 %v908
        %v941 = vunpack.c.l.b16 %v909
        %v942 = vunpack.c.l.b16 %v910
        %v943 = vunpack.c.l.b16 %v911
        %v944 = vunpack.c.l.b16 %v912
        %v945 = vunpack.c.l.b16 %v913
        %v946 = vunpack.c.l.b16 %v914
        %v947 = vunpack.c.l.b16 %v915
        %v948 = vunpack.c.l.b16 %v916
        %v949 = vunpack.c.l.b16 %v917
        %v950 = vunpack.c.l.b16 %v918
        %v951 = vunpack.c.l.b16 %v919
        %v952 = vunpack.c.l.b16 %v920
        %v953 = vunpack.c.l.b16 %v921
        %v954 = vpack.c.b16 %v939, %v938
        %v955 = vpack.c.b16 %v941, %v940
        %v956 = vpack.c.b16 %v943, %v942
        %v957 = vpack.c.b16 %v945, %v944
        %v958 = vpack.c.b16 %v947, %v946
        %v959 = vpack.c.b16 %v949, %v948
        %v960 = vpack.c.b16 %v951, %v950
        %v961 = vpack.c.b16 %v953, %v952
        %970 = vmatprep.subr.bf16.mxu0 0
        %971 = vmatpush1.bf16.msra.mxu0 %v961
        %972 = vmatprep.subr.bf16.mxu0 0
        %973 = vmatpush1.bf16.msra.mxu0 %v960
        %974 = vmatprep.subr.bf16.mxu0 0
        %975 = vmatpush1.bf16.msra.mxu0 %v959
        %976 = vmatprep.subr.bf16.mxu0 0
        %977 = vmatpush1.bf16.msra.mxu0 %v958
        %978 = vmatprep.subr.bf16.mxu0 0
        %979 = vmatpush1.bf16.msra.mxu0 %v957
        %980 = vmatprep.subr.bf16.mxu0 0
        %981 = vmatpush1.bf16.msra.mxu0 %v956
        %982 = vmatprep.subr.bf16.mxu0 0
        %983 = vmatpush1.bf16.msra.mxu0 %v955
        %984 = vmatprep.subr.bf16.mxu0 0
        %985 = vmatpush1.bf16.msra.mxu0 %v954
        %986 = vmatprep.subr.bf16.mxu0 0
        %987 = vmatpush2.bf16.msra.mxu0 0
        %988 = vmatprep.subr.bf16.mxu0 0
        %989 = vmatpush2.bf16.msra.mxu0 0
        %990 = vmatprep.subr.bf16.mxu0 0
        %991 = vmatpush2.bf16.msra.mxu0 0
        %992 = vmatprep.subr.bf16.mxu0 0
        %993 = vmatpush2.bf16.msra.mxu0 0
        %994 = vmatprep.subr.bf16.mxu0 0
        %995 = vmatpush2.bf16.msra.mxu0 0
        %996 = vmatprep.subr.bf16.mxu0 0
        %997 = vmatpush2.bf16.msra.mxu0 0
        %998 = vmatprep.subr.bf16.mxu0 0
        %999 = vmatpush2.bf16.msra.mxu0 0
        %1000 = vmatprep.subr.bf16.mxu0 0
        %1001 = vmatpush2.bf16.msra.mxu0 0
        %1002 = vmatprep.mubr.bf16.mxu0 0
        %1003 = vmatmul.mubr.bf16.gmra.mxu0 %v904
        %v1004 = vpop.f32.mrf.mxu0
        %v1005 = vadd.f32 0.0, %v1004
        %v1006 = vpop.f32.mrf.mxu0
        %v1007 = vpop.f32.mrf.mxu0
        %v1008 = vadd.f32 0.0, %v1007
        %v1009 = vpop.f32.mrf.mxu0
        %1010 = vdwg.mxu0
        %v1011 = vadd.f32 %v896, %v1005
        %v1012 = vadd.f32 %v897, %v1008
        %v1013 = vpack.c.bf16 %v903, %v903
        %s1014 = scalar_lea.vmem %s5, 256
        %v1015 = vld [vmem:[%s1014] sm:$0xf]
        %v1016 = vld [vmem:[%s1014 + $0x4] sm:$0xf]
        %v1017 = vld [vmem:[%s1014 + $0x8] sm:$0xf]
        %v1018 = vld [vmem:[%s1014 + $0xc] sm:$0xf]
        %v1019 = vld [vmem:[%s1014 + $0x10] sm:$0xf]
        %v1020 = vld [vmem:[%s1014 + $0x14] sm:$0xf]
        %v1021 = vld [vmem:[%s1014 + $0x18] sm:$0xf]
        %v1022 = vld [vmem:[%s1014 + $0x1c] sm:$0xf]
        %v1023 = vld [vmem:[%s1014 + $0x20] sm:$0xf]
        %v1024 = vld [vmem:[%s1014 + $0x24] sm:$0xf]
        %v1025 = vld [vmem:[%s1014 + $0x28] sm:$0xf]
        %v1026 = vld [vmem:[%s1014 + $0x2c] sm:$0xf]
        %v1027 = vld [vmem:[%s1014 + $0x30] sm:$0xf]
        %v1028 = vld [vmem:[%s1014 + $0x34] sm:$0xf]
        %v1029 = vld [vmem:[%s1014 + $0x38] sm:$0xf]
        %v1030 = vld [vmem:[%s1014 + $0x3c] sm:$0xf]
        %v1032 = vshrl.u32 %v904, 16
        %v1034 = vshll.u32 %v904, 16
        %v1036 = vrot.slane %v1034, 1
        %v1037 = vor.u32 %v1032, %v1036
        %v1039 = vshll.u32 %v1013, 16
        %v1041 = vrot.slane %v1039, 1
        %v1042 = vsel %vm591, %v1037, %v1041
        %v1060 = vunpack.c.l.b16 %v1015
        %v1061 = vunpack.c.l.b16 %v1016
        %v1062 = vunpack.c.l.b16 %v1017
        %v1063 = vunpack.c.l.b16 %v1018
        %v1064 = vunpack.c.l.b16 %v1019
        %v1065 = vunpack.c.l.b16 %v1020
        %v1066 = vunpack.c.l.b16 %v1021
        %v1067 = vunpack.c.l.b16 %v1022
        %v1068 = vunpack.c.l.b16 %v1023
        %v1069 = vunpack.c.l.b16 %v1024
        %v1070 = vunpack.c.l.b16 %v1025
        %v1071 = vunpack.c.l.b16 %v1026
        %v1072 = vunpack.c.l.b16 %v1027
        %v1073 = vunpack.c.l.b16 %v1028
        %v1074 = vunpack.c.l.b16 %v1029
        %v1075 = vunpack.c.l.b16 %v1030
        %v1076 = vpack.c.b16 %v1061, %v1060
        %v1077 = vpack.c.b16 %v1063, %v1062
        %v1078 = vpack.c.b16 %v1065, %v1064
        %v1079 = vpack.c.b16 %v1067, %v1066
        %v1080 = vpack.c.b16 %v1069, %v1068
        %v1081 = vpack.c.b16 %v1071, %v1070
        %v1082 = vpack.c.b16 %v1073, %v1072
        %v1083 = vpack.c.b16 %v1075, %v1074
        %1092 = vmatprep.subr.bf16.mxu0 0
        %1093 = vmatpush1.bf16.msra.mxu0 %v1083
        %1094 = vmatprep.subr.bf16.mxu0 0
        %1095 = vmatpush1.bf16.msra.mxu0 %v1082
        %1096 = vmatprep.subr.bf16.mxu0 0
        %1097 = vmatpush1.bf16.msra.mxu0 %v1081
        %1098 = vmatprep.subr.bf16.mxu0 0
        %1099 = vmatpush1.bf16.msra.mxu0 %v1080
        %1100 = vmatprep.subr.bf16.mxu0 0
        %1101 = vmatpush1.bf16.msra.mxu0 %v1079
        %1102 = vmatprep.subr.bf16.mxu0 0
        %1103 = vmatpush1.bf16.msra.mxu0 %v1078
        %1104 = vmatprep.subr.bf16.mxu0 0
        %1105 = vmatpush1.bf16.msra.mxu0 %v1077
        %1106 = vmatprep.subr.bf16.mxu0 0
        %1107 = vmatpush1.bf16.msra.mxu0 %v1076
        %1108 = vmatprep.subr.bf16.mxu0 0
        %1109 = vmatpush2.bf16.msra.mxu0 0
        %1110 = vmatprep.subr.bf16.mxu0 0
        %1111 = vmatpush2.bf16.msra.mxu0 0
        %1112 = vmatprep.subr.bf16.mxu0 0
        %1113 = vmatpush2.bf16.msra.mxu0 0
        %1114 = vmatprep.subr.bf16.mxu0 0
        %1115 = vmatpush2.bf16.msra.mxu0 0
        %1116 = vmatprep.subr.bf16.mxu0 0
        %1117 = vmatpush2.bf16.msra.mxu0 0
        %1118 = vmatprep.subr.bf16.mxu0 0
        %1119 = vmatpush2.bf16.msra.mxu0 0
        %1120 = vmatprep.subr.bf16.mxu0 0
        %1121 = vmatpush2.bf16.msra.mxu0 0
        %1122 = vmatprep.subr.bf16.mxu0 0
        %1123 = vmatpush2.bf16.msra.mxu0 0
        %1124 = vmatprep.mubr.bf16.mxu0 0
        %1125 = vmatmul.mubr.bf16.gmra.mxu0 %v1042
        %v1126 = vpop.f32.mrf.mxu0
        %v1127 = vadd.f32 0.0, %v1126
        %v1128 = vpop.f32.mrf.mxu0
        %v1129 = vpop.f32.mrf.mxu0
        %v1130 = vadd.f32 0.0, %v1129
        %v1131 = vpop.f32.mrf.mxu0
        %1132 = vdwg.mxu0
        %v1133 = vadd.f32 %v1011, %v1127
        %v1134 = vadd.f32 %v1012, %v1130
        %s1135 = scalar_lea.vmem %s5, 320
        %v1136 = vld [vmem:[%s1135] sm:$0xf]
        %v1137 = vld [vmem:[%s1135 + $0x4] sm:$0xf]
        %v1138 = vld [vmem:[%s1135 + $0x8] sm:$0xf]
        %v1139 = vld [vmem:[%s1135 + $0xc] sm:$0xf]
        %v1140 = vld [vmem:[%s1135 + $0x10] sm:$0xf]
        %v1141 = vld [vmem:[%s1135 + $0x14] sm:$0xf]
        %v1142 = vld [vmem:[%s1135 + $0x18] sm:$0xf]
        %v1143 = vld [vmem:[%s1135 + $0x1c] sm:$0xf]
        %v1144 = vld [vmem:[%s1135 + $0x20] sm:$0xf]
        %v1145 = vld [vmem:[%s1135 + $0x24] sm:$0xf]
        %v1146 = vld [vmem:[%s1135 + $0x28] sm:$0xf]
        %v1147 = vld [vmem:[%s1135 + $0x2c] sm:$0xf]
        %v1148 = vld [vmem:[%s1135 + $0x30] sm:$0xf]
        %v1149 = vld [vmem:[%s1135 + $0x34] sm:$0xf]
        %v1150 = vld [vmem:[%s1135 + $0x38] sm:$0xf]
        %v1151 = vld [vmem:[%s1135 + $0x3c] sm:$0xf]
        %v1154 = vrot.slane %v904, 1
        %v1155 = vrot.slane %v1013, 1
        %v1156 = vsel %vm802, %v1154, %v1155
        %v1174 = vunpack.c.l.b16 %v1136
        %v1175 = vunpack.c.l.b16 %v1137
        %v1176 = vunpack.c.l.b16 %v1138
        %v1177 = vunpack.c.l.b16 %v1139
        %v1178 = vunpack.c.l.b16 %v1140
        %v1179 = vunpack.c.l.b16 %v1141
        %v1180 = vunpack.c.l.b16 %v1142
        %v1181 = vunpack.c.l.b16 %v1143
        %v1182 = vunpack.c.l.b16 %v1144
        %v1183 = vunpack.c.l.b16 %v1145
        %v1184 = vunpack.c.l.b16 %v1146
        %v1185 = vunpack.c.l.b16 %v1147
        %v1186 = vunpack.c.l.b16 %v1148
        %v1187 = vunpack.c.l.b16 %v1149
        %v1188 = vunpack.c.l.b16 %v1150
        %v1189 = vunpack.c.l.b16 %v1151
        %v1190 = vpack.c.b16 %v1175, %v1174
        %v1191 = vpack.c.b16 %v1177, %v1176
        %v1192 = vpack.c.b16 %v1179, %v1178
        %v1193 = vpack.c.b16 %v1181, %v1180
        %v1194 = vpack.c.b16 %v1183, %v1182
        %v1195 = vpack.c.b16 %v1185, %v1184
        %v1196 = vpack.c.b16 %v1187, %v1186
        %v1197 = vpack.c.b16 %v1189, %v1188
        %1206 = vmatprep.subr.bf16.mxu0 0
        %1207 = vmatpush1.bf16.msra.mxu0 %v1197
        %1208 = vmatprep.subr.bf16.mxu0 0
        %1209 = vmatpush1.bf16.msra.mxu0 %v1196
        %1210 = vmatprep.subr.bf16.mxu0 0
        %1211 = vmatpush1.bf16.msra.mxu0 %v1195
        %1212 = vmatprep.subr.bf16.mxu0 0
        %1213 = vmatpush1.bf16.msra.mxu0 %v1194
        %1214 = vmatprep.subr.bf16.mxu0 0
        %1215 = vmatpush1.bf16.msra.mxu0 %v1193
        %1216 = vmatprep.subr.bf16.mxu0 0
        %1217 = vmatpush1.bf16.msra.mxu0 %v1192
        %1218 = vmatprep.subr.bf16.mxu0 0
        %1219 = vmatpush1.bf16.msra.mxu0 %v1191
        %1220 = vmatprep.subr.bf16.mxu0 0
        %1221 = vmatpush1.bf16.msra.mxu0 %v1190
        %1222 = vmatprep.subr.bf16.mxu0 0
        %1223 = vmatpush2.bf16.msra.mxu0 0
        %1224 = vmatprep.subr.bf16.mxu0 0
        %1225 = vmatpush2.bf16.msra.mxu0 0
        %1226 = vmatprep.subr.bf16.mxu0 0
        %1227 = vmatpush2.bf16.msra.mxu0 0
        %1228 = vmatprep.subr.bf16.mxu0 0
        %1229 = vmatpush2.bf16.msra.mxu0 0
        %1230 = vmatprep.subr.bf16.mxu0 0
        %1231 = vmatpush2.bf16.msra.mxu0 0
        %1232 = vmatprep.subr.bf16.mxu0 0
        %1233 = vmatpush2.bf16.msra.mxu0 0
        %1234 = vmatprep.subr.bf16.mxu0 0
        %1235 = vmatpush2.bf16.msra.mxu0 0
        %1236 = vmatprep.subr.bf16.mxu0 0
        %1237 = vmatpush2.bf16.msra.mxu0 0
        %1238 = vmatprep.mubr.bf16.mxu0 0
        %1239 = vmatmul.mubr.bf16.gmra.mxu0 %v1156
        %v1240 = vpop.f32.mrf.mxu0
        %v1241 = vadd.f32 0.0, %v1240
        %v1242 = vpop.f32.mrf.mxu0
        %v1243 = vpop.f32.mrf.mxu0
        %v1244 = vadd.f32 0.0, %v1243
        %v1245 = vpop.f32.mrf.mxu0
        %1246 = vdwg.mxu0
        %v1247 = vadd.f32 %v1133, %v1241
        %v1248 = vadd.f32 %v1134, %v1244
        %s1249 = sadd.s32 %s544, 2
        %s1250 = smul.u32 %s1249, 24
        %s1251 = scalar_lea.vmem [#allocation2], %s1250
        %v1252 = vld [vmem:[%s1251] sm:$0xff]
        %v1253 = vld [vmem:[%s1251 + $0x8] sm:$0xff]
        %v1254 = vld [vmem:[%s1251 + $0x10] sm:$0x3]
        %v1255 = vpack.c.bf16 %v1253, %v1252
        %s1256 = scalar_lea.vmem %s5, 384
        %v1257 = vld [vmem:[%s1256] sm:$0xf]
        %v1258 = vld [vmem:[%s1256 + $0x4] sm:$0xf]
        %v1259 = vld [vmem:[%s1256 + $0x8] sm:$0xf]
        %v1260 = vld [vmem:[%s1256 + $0xc] sm:$0xf]
        %v1261 = vld [vmem:[%s1256 + $0x10] sm:$0xf]
        %v1262 = vld [vmem:[%s1256 + $0x14] sm:$0xf]
        %v1263 = vld [vmem:[%s1256 + $0x18] sm:$0xf]
        %v1264 = vld [vmem:[%s1256 + $0x1c] sm:$0xf]
        %v1265 = vld [vmem:[%s1256 + $0x20] sm:$0xf]
        %v1266 = vld [vmem:[%s1256 + $0x24] sm:$0xf]
        %v1267 = vld [vmem:[%s1256 + $0x28] sm:$0xf]
        %v1268 = vld [vmem:[%s1256 + $0x2c] sm:$0xf]
        %v1269 = vld [vmem:[%s1256 + $0x30] sm:$0xf]
        %v1270 = vld [vmem:[%s1256 + $0x34] sm:$0xf]
        %v1271 = vld [vmem:[%s1256 + $0x38] sm:$0xf]
        %v1272 = vld [vmem:[%s1256 + $0x3c] sm:$0xf]
        %v1289 = vunpack.c.l.b16 %v1257
        %v1290 = vunpack.c.l.b16 %v1258
        %v1291 = vunpack.c.l.b16 %v1259
        %v1292 = vunpack.c.l.b16 %v1260
        %v1293 = vunpack.c.l.b16 %v1261
        %v1294 = vunpack.c.l.b16 %v1262
        %v1295 = vunpack.c.l.b16 %v1263
        %v1296 = vunpack.c.l.b16 %v1264
        %v1297 = vunpack.c.l.b16 %v1265
        %v1298 = vunpack.c.l.b16 %v1266
        %v1299 = vunpack.c.l.b16 %v1267
        %v1300 = vunpack.c.l.b16 %v1268
        %v1301 = vunpack.c.l.b16 %v1269
        %v1302 = vunpack.c.l.b16 %v1270
        %v1303 = vunpack.c.l.b16 %v1271
        %v1304 = vunpack.c.l.b16 %v1272
        %v1305 = vpack.c.b16 %v1290, %v1289
        %v1306 = vpack.c.b16 %v1292, %v1291
        %v1307 = vpack.c.b16 %v1294, %v1293
        %v1308 = vpack.c.b16 %v1296, %v1295
        %v1309 = vpack.c.b16 %v1298, %v1297
        %v1310 = vpack.c.b16 %v1300, %v1299
        %v1311 = vpack.c.b16 %v1302, %v1301
        %v1312 = vpack.c.b16 %v1304, %v1303
        %1321 = vmatprep.subr.bf16.mxu0 0
        %1322 = vmatpush1.bf16.msra.mxu0 %v1312
        %1323 = vmatprep.subr.bf16.mxu0 0
        %1324 = vmatpush1.bf16.msra.mxu0 %v1311
        %1325 = vmatprep.subr.bf16.mxu0 0
        %1326 = vmatpush1.bf16.msra.mxu0 %v1310
        %1327 = vmatprep.subr.bf16.mxu0 0
        %1328 = vmatpush1.bf16.msra.mxu0 %v1309
        %1329 = vmatprep.subr.bf16.mxu0 0
        %1330 = vmatpush1.bf16.msra.mxu0 %v1308
        %1331 = vmatprep.subr.bf16.mxu0 0
        %1332 = vmatpush1.bf16.msra.mxu0 %v1307
        %1333 = vmatprep.subr.bf16.mxu0 0
        %1334 = vmatpush1.bf16.msra.mxu0 %v1306
        %1335 = vmatprep.subr.bf16.mxu0 0
        %1336 = vmatpush1.bf16.msra.mxu0 %v1305
        %1337 = vmatprep.subr.bf16.mxu0 0
        %1338 = vmatpush2.bf16.msra.mxu0 0
        %1339 = vmatprep.subr.bf16.mxu0 0
        %1340 = vmatpush2.bf16.msra.mxu0 0
        %1341 = vmatprep.subr.bf16.mxu0 0
        %1342 = vmatpush2.bf16.msra.mxu0 0
        %1343 = vmatprep.subr.bf16.mxu0 0
        %1344 = vmatpush2.bf16.msra.mxu0 0
        %1345 = vmatprep.subr.bf16.mxu0 0
        %1346 = vmatpush2.bf16.msra.mxu0 0
        %1347 = vmatprep.subr.bf16.mxu0 0
        %1348 = vmatpush2.bf16.msra.mxu0 0
        %1349 = vmatprep.subr.bf16.mxu0 0
        %1350 = vmatpush2.bf16.msra.mxu0 0
        %1351 = vmatprep.subr.bf16.mxu0 0
        %1352 = vmatpush2.bf16.msra.mxu0 0
        %1353 = vmatprep.mubr.bf16.mxu0 0
        %1354 = vmatmul.mubr.bf16.gmra.mxu0 %v1255
        %v1355 = vpop.f32.mrf.mxu0
        %v1356 = vadd.f32 0.0, %v1355
        %v1357 = vpop.f32.mrf.mxu0
        %v1358 = vpop.f32.mrf.mxu0
        %v1359 = vadd.f32 0.0, %v1358
        %v1360 = vpop.f32.mrf.mxu0
        %1361 = vdwg.mxu0
        %v1362 = vadd.f32 %v1247, %v1356
        %v1363 = vadd.f32 %v1248, %v1359
        %v1364 = vpack.c.bf16 %v1254, %v1254
        %s1365 = scalar_lea.vmem %s5, 448
        %v1366 = vld [vmem:[%s1365] sm:$0xf]
        %v1367 = vld [vmem:[%s1365 + $0x4] sm:$0xf]
        %v1368 = vld [vmem:[%s1365 + $0x8] sm:$0xf]
        %v1369 = vld [vmem:[%s1365 + $0xc] sm:$0xf]
        %v1370 = vld [vmem:[%s1365 + $0x10] sm:$0xf]
        %v1371 = vld [vmem:[%s1365 + $0x14] sm:$0xf]
        %v1372 = vld [vmem:[%s1365 + $0x18] sm:$0xf]
        %v1373 = vld [vmem:[%s1365 + $0x1c] sm:$0xf]
        %v1374 = vld [vmem:[%s1365 + $0x20] sm:$0xf]
        %v1375 = vld [vmem:[%s1365 + $0x24] sm:$0xf]
        %v1376 = vld [vmem:[%s1365 + $0x28] sm:$0xf]
        %v1377 = vld [vmem:[%s1365 + $0x2c] sm:$0xf]
        %v1378 = vld [vmem:[%s1365 + $0x30] sm:$0xf]
        %v1379 = vld [vmem:[%s1365 + $0x34] sm:$0xf]
        %v1380 = vld [vmem:[%s1365 + $0x38] sm:$0xf]
        %v1381 = vld [vmem:[%s1365 + $0x3c] sm:$0xf]
        %v1383 = vshrl.u32 %v1255, 16
        %v1385 = vshll.u32 %v1255, 16
        %v1387 = vrot.slane %v1385, 1
        %v1388 = vor.u32 %v1383, %v1387
        %v1390 = vshll.u32 %v1364, 16
        %v1392 = vrot.slane %v1390, 1
        %v1393 = vsel %vm591, %v1388, %v1392
        %v1411 = vunpack.c.l.b16 %v1366
        %v1412 = vunpack.c.l.b16 %v1367
        %v1413 = vunpack.c.l.b16 %v1368
        %v1414 = vunpack.c.l.b16 %v1369
        %v1415 = vunpack.c.l.b16 %v1370
        %v1416 = vunpack.c.l.b16 %v1371
        %v1417 = vunpack.c.l.b16 %v1372
        %v1418 = vunpack.c.l.b16 %v1373
        %v1419 = vunpack.c.l.b16 %v1374
        %v1420 = vunpack.c.l.b16 %v1375
        %v1421 = vunpack.c.l.b16 %v1376
        %v1422 = vunpack.c.l.b16 %v1377
        %v1423 = vunpack.c.l.b16 %v1378
        %v1424 = vunpack.c.l.b16 %v1379
        %v1425 = vunpack.c.l.b16 %v1380
        %v1426 = vunpack.c.l.b16 %v1381
        %v1427 = vpack.c.b16 %v1412, %v1411
        %v1428 = vpack.c.b16 %v1414, %v1413
        %v1429 = vpack.c.b16 %v1416, %v1415
        %v1430 = vpack.c.b16 %v1418, %v1417
        %v1431 = vpack.c.b16 %v1420, %v1419
        %v1432 = vpack.c.b16 %v1422, %v1421
        %v1433 = vpack.c.b16 %v1424, %v1423
        %v1434 = vpack.c.b16 %v1426, %v1425
        %1443 = vmatprep.subr.bf16.mxu0 0
        %1444 = vmatpush1.bf16.msra.mxu0 %v1434
        %1445 = vmatprep.subr.bf16.mxu0 0
        %1446 = vmatpush1.bf16.msra.mxu0 %v1433
        %1447 = vmatprep.subr.bf16.mxu0 0
        %1448 = vmatpush1.bf16.msra.mxu0 %v1432
        %1449 = vmatprep.subr.bf16.mxu0 0
        %1450 = vmatpush1.bf16.msra.mxu0 %v1431
        %1451 = vmatprep.subr.bf16.mxu0 0
        %1452 = vmatpush1.bf16.msra.mxu0 %v1430
        %1453 = vmatprep.subr.bf16.mxu0 0
        %1454 = vmatpush1.bf16.msra.mxu0 %v1429
        %1455 = vmatprep.subr.bf16.mxu0 0
        %1456 = vmatpush1.bf16.msra.mxu0 %v1428
        %1457 = vmatprep.subr.bf16.mxu0 0
        %1458 = vmatpush1.bf16.msra.mxu0 %v1427
        %1459 = vmatprep.subr.bf16.mxu0 0
        %1460 = vmatpush2.bf16.msra.mxu0 0
        %1461 = vmatprep.subr.bf16.mxu0 0
        %1462 = vmatpush2.bf16.msra.mxu0 0
        %1463 = vmatprep.subr.bf16.mxu0 0
        %1464 = vmatpush2.bf16.msra.mxu0 0
        %1465 = vmatprep.subr.bf16.mxu0 0
        %1466 = vmatpush2.bf16.msra.mxu0 0
        %1467 = vmatprep.subr.bf16.mxu0 0
        %1468 = vmatpush2.bf16.msra.mxu0 0
        %1469 = vmatprep.subr.bf16.mxu0 0
        %1470 = vmatpush2.bf16.msra.mxu0 0
        %1471 = vmatprep.subr.bf16.mxu0 0
        %1472 = vmatpush2.bf16.msra.mxu0 0
        %1473 = vmatprep.subr.bf16.mxu0 0
        %1474 = vmatpush2.bf16.msra.mxu0 0
        %1475 = vmatprep.mubr.bf16.mxu0 0
        %1476 = vmatmul.mubr.bf16.gmra.mxu0 %v1393
        %v1477 = vpop.f32.mrf.mxu0
        %v1478 = vadd.f32 0.0, %v1477
        %v1479 = vpop.f32.mrf.mxu0
        %v1480 = vpop.f32.mrf.mxu0
        %v1481 = vadd.f32 0.0, %v1480
        %v1482 = vpop.f32.mrf.mxu0
        %1483 = vdwg.mxu0
        %v1484 = vadd.f32 %v1362, %v1478
        %v1485 = vadd.f32 %v1363, %v1481
        %s1486 = scalar_lea.vmem %s5, 512
        %v1487 = vld [vmem:[%s1486] sm:$0xf]
        %v1488 = vld [vmem:[%s1486 + $0x4] sm:$0xf]
        %v1489 = vld [vmem:[%s1486 + $0x8] sm:$0xf]
        %v1490 = vld [vmem:[%s1486 + $0xc] sm:$0xf]
        %v1491 = vld [vmem:[%s1486 + $0x10] sm:$0xf]
        %v1492 = vld [vmem:[%s1486 + $0x14] sm:$0xf]
        %v1493 = vld [vmem:[%s1486 + $0x18] sm:$0xf]
        %v1494 = vld [vmem:[%s1486 + $0x1c] sm:$0xf]
        %v1495 = vld [vmem:[%s1486 + $0x20] sm:$0xf]
        %v1496 = vld [vmem:[%s1486 + $0x24] sm:$0xf]
        %v1497 = vld [vmem:[%s1486 + $0x28] sm:$0xf]
        %v1498 = vld [vmem:[%s1486 + $0x2c] sm:$0xf]
        %v1499 = vld [vmem:[%s1486 + $0x30] sm:$0xf]
        %v1500 = vld [vmem:[%s1486 + $0x34] sm:$0xf]
        %v1501 = vld [vmem:[%s1486 + $0x38] sm:$0xf]
        %v1502 = vld [vmem:[%s1486 + $0x3c] sm:$0xf]
        %v1505 = vrot.slane %v1255, 1
        %v1506 = vrot.slane %v1364, 1
        %v1507 = vsel %vm802, %v1505, %v1506
        %v1525 = vunpack.c.l.b16 %v1487
        %v1526 = vunpack.c.l.b16 %v1488
        %v1527 = vunpack.c.l.b16 %v1489
        %v1528 = vunpack.c.l.b16 %v1490
        %v1529 = vunpack.c.l.b16 %v1491
        %v1530 = vunpack.c.l.b16 %v1492
        %v1531 = vunpack.c.l.b16 %v1493
        %v1532 = vunpack.c.l.b16 %v1494
        %v1533 = vunpack.c.l.b16 %v1495
        %v1534 = vunpack.c.l.b16 %v1496
        %v1535 = vunpack.c.l.b16 %v1497
        %v1536 = vunpack.c.l.b16 %v1498
        %v1537 = vunpack.c.l.b16 %v1499
        %v1538 = vunpack.c.l.b16 %v1500
        %v1539 = vunpack.c.l.b16 %v1501
        %v1540 = vunpack.c.l.b16 %v1502
        %v1541 = vpack.c.b16 %v1526, %v1525
        %v1542 = vpack.c.b16 %v1528, %v1527
        %v1543 = vpack.c.b16 %v1530, %v1529
        %v1544 = vpack.c.b16 %v1532, %v1531
        %v1545 = vpack.c.b16 %v1534, %v1533
        %v1546 = vpack.c.b16 %v1536, %v1535
        %v1547 = vpack.c.b16 %v1538, %v1537
        %v1548 = vpack.c.b16 %v1540, %v1539
        %1557 = vmatprep.subr.bf16.mxu0 0
        %1558 = vmatpush1.bf16.msra.mxu0 %v1548
        %1559 = vmatprep.subr.bf16.mxu0 0
        %1560 = vmatpush1.bf16.msra.mxu0 %v1547
        %1561 = vmatprep.subr.bf16.mxu0 0
        %1562 = vmatpush1.bf16.msra.mxu0 %v1546
        %1563 = vmatprep.subr.bf16.mxu0 0
        %1564 = vmatpush1.bf16.msra.mxu0 %v1545
        %1565 = vmatprep.subr.bf16.mxu0 0
        %1566 = vmatpush1.bf16.msra.mxu0 %v1544
        %1567 = vmatprep.subr.bf16.mxu0 0
        %1568 = vmatpush1.bf16.msra.mxu0 %v1543
        %1569 = vmatprep.subr.bf16.mxu0 0
        %1570 = vmatpush1.bf16.msra.mxu0 %v1542
        %1571 = vmatprep.subr.bf16.mxu0 0
        %1572 = vmatpush1.bf16.msra.mxu0 %v1541
        %1573 = vmatprep.subr.bf16.mxu0 0
        %1574 = vmatpush2.bf16.msra.mxu0 0
        %1575 = vmatprep.subr.bf16.mxu0 0
        %1576 = vmatpush2.bf16.msra.mxu0 0
        %1577 = vmatprep.subr.bf16.mxu0 0
        %1578 = vmatpush2.bf16.msra.mxu0 0
        %1579 = vmatprep.subr.bf16.mxu0 0
        %1580 = vmatpush2.bf16.msra.mxu0 0
        %1581 = vmatprep.subr.bf16.mxu0 0
        %1582 = vmatpush2.bf16.msra.mxu0 0
        %1583 = vmatprep.subr.bf16.mxu0 0
        %1584 = vmatpush2.bf16.msra.mxu0 0
        %1585 = vmatprep.subr.bf16.mxu0 0
        %1586 = vmatpush2.bf16.msra.mxu0 0
        %1587 = vmatprep.subr.bf16.mxu0 0
        %1588 = vmatpush2.bf16.msra.mxu0 0
        %1589 = vmatprep.mubr.bf16.mxu0 0
        %1590 = vmatmul.mubr.bf16.gmra.mxu0 %v1507
        %v1591 = vpop.f32.mrf.mxu0
        %v1592 = vadd.f32 0.0, %v1591
        %v1593 = vpop.f32.mrf.mxu0
        %v1594 = vpop.f32.mrf.mxu0
        %v1595 = vadd.f32 0.0, %v1594
        %v1596 = vpop.f32.mrf.mxu0
        %1597 = vdwg.mxu0
        %v1598 = vadd.f32 %v1484, %v1592
        %v1599 = vadd.f32 %v1485, %v1595
        %s1600 = smul.u32 %s544, 16
        %s1601 = scalar_lea.vmem %s300, %s1600
        %1602 = vst [vmem:[%s1601] sm:$0xff] %v1598
        %1603 = vst [vmem:[%s1601 + $0x8] sm:$0xff] %v1599
        %v1604 = vadd.f32 %v1598, %v1599
        %v1605 = vrot.slane %v1604, 4
        %v1606 = vadd.f32 %v1604, %v1605
        %v1607 = vrot.slane %v1606, 2
        %v1608 = vadd.f32 %v1606, %v1607
        %v1609 = vrot.slane %v1608, 1
        %v1610 = vadd.f32 %v1608, %v1609
        %v1611 = vadd.f32 %v549, %v1610
        %v1612 = vmul.f32 %v1598, %v1598
        %v1613 = vmul.f32 %v1599, %v1599
        %v1614 = vadd.f32 %v1612, %v1613
        %v1615 = vrot.slane %v1614, 4
        %v1616 = vadd.f32 %v1614, %v1615
        %v1617 = vrot.slane %v1616, 2
        %v1618 = vadd.f32 %v1616, %v1617
        %v1619 = vrot.slane %v1618, 1
        %v1620 = vadd.f32 %v1618, %v1619
        %v1621 = vadd.f32 %v550, %v1620
      $region49: #{bottleneck_forward.4} parent=43 // loop_footer
        %s548 = sadd.s32 1, %s544
      $region50: #{bottleneck_forward.4} parent=43 // loop_footer_branch
        %543 = sbr.rel target = $region46
      $region51: #{bottleneck_forward.4} parent=43 // loop_exit
        _
      %p1622 = scmp.eq.s32.totalorder %s20, 0
      // Predicated region
      $region52: #{bottleneck_forward.4} parent=43 // pred_check
        %p1623 = pneg %p1622
      $region53: #{bottleneck_forward.4} parent=43 // pred_check_branch
        %1625 = sbr.rel (%p1623) target = $region55
      $region54: #{bottleneck_forward.4} parent=43 // pred_region
        %1626 = vst [vmem:[%s7] sm:$0x1] 0.0
        %1627 = vst [vmem:[%s8] sm:$0x1] 0.0
      $region55: #{bottleneck_forward.4} parent=43 // pred_fallthru
        _
      %v1628 = vld [vmem:[%s7] sm:$0x1]
      %v1629 = vadd.f32 %v1628, %v549
      %1630 = vst [vmem:[%s7] sm:$0x1] %v1629
      %v1631 = vld [vmem:[%s8] sm:$0x1]
      %v1632 = vadd.f32 %v1631, %v550
      %1633 = vst [vmem:[%s8] sm:$0x1] %v1632
      %p1634 = scmp.lt.s32.totalorder %s20, 1
      %s1635 = scalar_select %p1634, %s20, 1
      %s1636 = smul.addr %s1635, 32
      %s1637 = smul.addr %s1636, 8
      %s1638 = scalar_lea.vmem %s6, %s1637
      // Predicated region
      $region56: #{bottleneck_forward.4} parent=43 // pred_check
        %p1639 = pneg %p169
      $region57: #{bottleneck_forward.4} parent=43 // pred_check_branch
        %1641 = sbr.rel (%p1639) target = $region59
      $region58: #{bottleneck_forward.4} parent=43 // pred_region
        _
      $region59: #{bottleneck_forward.4} parent=43 // pred_fallthru
        _
      // Predicated region
      $region60: #{bottleneck_forward.4} parent=43 // pred_check
        %p1642 = pneg %p190
      $region61: #{bottleneck_forward.4} parent=43 // pred_check_branch
        %1644 = sbr.rel (%p1642) target = $region63
      $region62: #{bottleneck_forward.4} parent=43 // pred_region
        _
      $region63: #{bottleneck_forward.4} parent=43 // pred_fallthru
        _
      // Predicated region
      $region64: #{bottleneck_forward.4} parent=43 // pred_check
        %p1645 = pneg %p211
      $region65: #{bottleneck_forward.4} parent=43 // pred_check_branch
        %1647 = sbr.rel (%p1645) target = $region67
      $region66: #{bottleneck_forward.4} parent=43 // pred_region
        _
      $region67: #{bottleneck_forward.4} parent=43 // pred_fallthru
        _
      // Predicated region
      $region68: #{bottleneck_forward.4} parent=43 // pred_check
        %p1648 = pneg %p190
      $region69: #{bottleneck_forward.4} parent=43 // pred_check_branch
        %1650 = sbr.rel (%p1648) target = $region71
      $region70: #{bottleneck_forward.4} parent=43 // pred_region
        _
      $region71: #{bottleneck_forward.4} parent=43 // pred_fallthru
        _
      // Predicated region
      $region72: #{bottleneck_forward.4} parent=43 // pred_check
        %p1651 = pneg %p211
      $region73: #{bottleneck_forward.4} parent=43 // pred_check_branch
        %1653 = sbr.rel (%p1651) target = $region75
      $region74: #{bottleneck_forward.4} parent=43 // pred_region
        _
      $region75: #{bottleneck_forward.4} parent=43 // pred_fallthru
        _
    $region44: #{bottleneck_forward.4} parent=5 // pred_fallthru
      _
    %p1654 = scmp.le.s32.totalorder 2, %s15
    // Predicated region
    $region76: #{bottleneck_forward.4} parent=5 // pred_check
      %p1655 = pneg %p1654
    $region77: #{bottleneck_forward.4} parent=5 // pred_check_branch
      %1657 = sbr.rel (%p1655) target = $region79
    $region78: #{bottleneck_forward.4} parent=5 // pred_region
      %s1658 = ssub.s32 %s15, 2
      // Predicated region
      $region80: #{bottleneck_forward.4} parent=78 // pred_check
        %p1659 = pneg %p175
      $region81: #{bottleneck_forward.4} parent=78 // pred_check_branch
        %1661 = sbr.rel (%p1659) target = $region83
      $region82: #{bottleneck_forward.4} parent=78 // pred_region
        %p1662 = scmp.lt.s32.totalorder %s21, 1
        %s1663 = scalar_select %p1662, %s21, 1
        %s1664 = smul.addr %s1663, 32
        %s1665 = smul.addr %s1664, 8
        %s1666 = scalar_lea.vmem %s6, %s1665
      $region83: #{bottleneck_forward.4} parent=78 // pred_fallthru
        _
    $region79: #{bottleneck_forward.4} parent=5 // pred_fallthru
      _
  $region6: #{bottleneck_forward.4} parent=0 // loop_footer
    %s19 = sadd.s32 1, %s15
  $region7: #{bottleneck_forward.4} parent=0 // loop_footer_branch
    %14 = sbr.rel target = $region3
  $region8: #{bottleneck_forward.4} parent=0 // loop_exit
    _

</llo_original>
